<compile_context>
chip_gen: v7x
topology: tpu7x:2x2x1
jax: 0.10.0
libtpu: 0.0.40
codegen_flags: <defaults>
</compile_context>

<pallas_src>
import functools
import math

import numpy as np

import jax
import jax.numpy as jnp
from jax.experimental import pallas as pl
from jax.experimental.pallas import tpu as pltpu


def decoder_block_kernel(
    x_ref, kv_ref, enc_ref, evl_ref,
    wq1_ref, wk1_ref, wv1_ref, wo1_ref, g1_ref, b1_ref,
    wq2_ref, wk2_ref, wv2_ref, wo2_ref, g2_ref, b2_ref,
    w1_ref, fb1_ref, w2_ref, fb2_ref, g3_ref, b3_ref,
    out_ref,
    *, num_heads, batch_tile, seq_q, seq_kv, seq_enc, causal):
  f32 = jnp.float32
  TB, Sq, Skv, Senc = batch_tile, seq_q, seq_kv, seq_enc
  H = x_ref.shape[-1]
  nh = num_heads
  hd = H // nh
  scale = hd ** -0.5
  mxu_t = x_ref.dtype          # bf16 when requested (v6e/v7x), else f32

  x2 = x_ref[...]              # (TB*Sq,  H) flattened rows -> big MXU M dim
  kv2 = kv_ref[...]            # (TB*Skv, H)
  enc2 = enc_ref[...]          # (TB*Senc, H)
  x2f = x2.astype(f32)

  # Additive masks (0 keep / -1e6 drop), built once per grid step and shared
  # across heads (broadcast-add instead of per-head selects).
  if causal:
    row = jax.lax.broadcasted_iota(jnp.int32, (TB, Sq, Skv), 1)
    col = jax.lax.broadcasted_iota(jnp.int32, (TB, Sq, Skv), 2)
    dec_bias = jnp.where(col <= row + (Skv - Sq), 0.0, -1e6).astype(f32)
  else:
    dec_bias = None
  ecol = jax.lax.broadcasted_iota(jnp.int32, (TB, Sq, Senc), 2)
  enc_bias = jnp.where(ecol < evl_ref[...], 0.0, -1e6).astype(f32)

  def layer_norm(z, g_ref, b_ref):
    mu = jnp.mean(z, axis=-1, keepdims=True)
    var = jnp.mean((z - mu) * (z - mu), axis=-1, keepdims=True)
    return ((z - mu) * jax.lax.rsqrt(var + 1e-5) * g_ref[...].astype(f32)
            + b_ref[...].astype(f32))

  def mha(q_in2, kv_in2, s_k, wq_r, wk_r, wv_r, wo_r, bias):
    # Full-width projections on the flattened slab (MXU-friendly M dim),
    # 1/sqrt(hd) folded into Q once.
    q2 = jnp.dot(q_in2.astype(mxu_t), wq_r[...],
                 preferred_element_type=f32) * scale
    k2 = jnp.dot(kv_in2.astype(mxu_t), wk_r[...], preferred_element_type=f32)
    v2 = jnp.dot(kv_in2.astype(mxu_t), wv_r[...], preferred_element_type=f32)
    q3 = q2.reshape(TB, Sq, H)       # leading-dim split only, lane dim kept
    k3 = k2.reshape(TB, s_k, H)
    v3 = v2.reshape(TB, s_k, H)
    wo = wo_r[...]
    out2 = jnp.zeros((TB * Sq, H), f32)
    for h in range(nh):              # static; W_o fused per head -> no concat
      sl = slice(h * hd, (h + 1) * hd)
      # Batched contraction over the batch tile; no explicit k.T (XLU-free).
      s = jnp.einsum("bqd,bkd->bqk",
                     q3[:, :, sl].astype(mxu_t),
                     k3[:, :, sl].astype(mxu_t),
                     preferred_element_type=f32)
      if bias is not None:
        s = s + bias
      m = jnp.max(s, axis=-1, keepdims=True)
      p = jnp.exp(s - m)
      p = p * pl.reciprocal(jnp.sum(p, axis=-1, keepdims=True), approx=True)
      ctx = jnp.einsum("bqk,bkd->bqd",
                       p.astype(mxu_t),
                       v3[:, :, sl].astype(mxu_t),
                       preferred_element_type=f32)
      out2 = out2 + jnp.dot(ctx.reshape(TB * Sq, hd).astype(mxu_t),
                            wo[sl, :], preferred_element_type=f32)
    return out2

  # 1) masked self-attention over key_values + AddNorm1
  x2_attn = mha(x2, kv2, Skv, wq1_ref, wk1_ref, wv1_ref, wo1_ref, dec_bias)
  y = layer_norm(x2_attn + x2f, g1_ref, b1_ref)

  # 2) cross-attention over encoder outputs + AddNorm2
  y2 = mha(y, enc2, Senc, wq2_ref, wk2_ref, wv2_ref, wo2_ref, enc_bias)
  z = layer_norm(y2 + y, g2_ref, b2_ref)

  # 3) position-wise FFN + AddNorm3
  h1 = jnp.dot(z.astype(mxu_t), w1_ref[...], preferred_element_type=f32)
  h1 = jnp.maximum(h1 + fb1_ref[...].astype(f32), 0.0)
  ff = jnp.dot(h1.astype(mxu_t), w2_ref[...], preferred_element_type=f32)
  ff = ff + fb2_ref[...].astype(f32)
  out = layer_norm(ff + z, g3_ref, b3_ref)

  out_ref[...] = out.astype(out_ref.dtype)


def transformer_decoder_block(X, state, params, num_heads, i, training=True,
                              batch_tile=None, mxu_dtype=None):
  """Forward of d2l TransformerDecoderBlock. Returns (output, new_state)."""
  enc_outputs, enc_valid_lens = state[0], state[1]
  cache = state[2][i]
  key_values = X if cache is None else jnp.concatenate([cache, X], axis=1)
  new_blocks = list(state[2])
  new_blocks[i] = key_values
  new_state = [enc_outputs, enc_valid_lens, new_blocks]

  B, Sq, H = X.shape
  Skv = key_values.shape[1]
  Senc = enc_outputs.shape[1]
  Fh = params["w1"].shape[1]

  if batch_tile is None:
    # At real sizes pick TB so TB*Sq lands around 128-512 rows while leaving
    # >= 2 grid steps per TensorCore (v7x megacore); B is tiny in the demo.
    batch_tile = B
  assert B % batch_tile == 0
  TB = batch_tile
  grid = (B // TB,)

  mxu_t = jnp.dtype(mxu_dtype) if mxu_dtype is not None else X.dtype

  def op(a):        # matmul operands (activations + weights) -> MXU dtype
    return a.astype(mxu_t)

  if enc_valid_lens is None:
    enc_valid_lens = jnp.full((B,), Senc, dtype=jnp.int32)

  # Wrapper-side flattening: 2-D slabs in/out, no 3-D blocks in the kernel.
  x2 = op(X).reshape(B * Sq, H)
  kv2 = op(key_values).reshape(B * Skv, H)
  enc2 = op(enc_outputs).reshape(B * Senc, H)
  evl = enc_valid_lens.astype(jnp.int32).reshape(B, 1, 1)

  kernel = functools.partial(
      decoder_block_kernel, num_heads=num_heads, batch_tile=TB,
      seq_q=Sq, seq_kv=Skv, seq_enc=Senc, causal=training)

  def rows(n_rows):
    return pl.BlockSpec((n_rows, H), lambda b: (b, 0))

  def const(shape):
    # Weight/LN blocks never change across the grid (index_map == 0s).
    # TODO(synk): at real sizes keep these single-buffered / resident instead
    # of default double-buffering to save VMEM (matters on v7x's 64 MiB).
    return pl.BlockSpec(shape, lambda b, _s=len(shape): (0,) * _s)

  in_specs = [
      rows(TB * Sq),                                   # X (flattened rows)
      rows(TB * Skv),                                  # key_values
      rows(TB * Senc),                                 # enc_outputs
      pl.BlockSpec((TB, 1, 1), lambda b: (b, 0, 0)),   # enc_valid_lens
      const((H, H)), const((H, H)), const((H, H)), const((H, H)),   # attn1
      const((1, H)), const((1, H)),                                 # addnorm1
      const((H, H)), const((H, H)), const((H, H)), const((H, H)),   # attn2
      const((1, H)), const((1, H)),                                 # addnorm2
      const((H, Fh)), const((1, Fh)), const((Fh, H)), const((1, H)),  # ffn
      const((1, H)), const((1, H)),                                 # addnorm3
  ]
  out_specs = rows(TB * Sq)

  out2 = pl.pallas_call(
      kernel,
      out_shape=jax.ShapeDtypeStruct((B * Sq, H), X.dtype),
      grid=grid,
      in_specs=in_specs,
      out_specs=out_specs,
      compiler_params=pltpu.CompilerParams(
          dimension_semantics=("parallel",),
          vmem_limit_bytes=32 * 1024 * 1024),
  )(x2, kv2, enc2, evl,
    op(params["wq1"]), op(params["wk1"]), op(params["wv1"]), op(params["wo1"]),
    params["ln1_g"], params["ln1_b"],
    op(params["wq2"]), op(params["wk2"]), op(params["wv2"]), op(params["wo2"]),
    params["ln2_g"], params["ln2_b"],
    op(params["w1"]), params["b1"], op(params["w2"]), params["b2"],
    params["ln3_g"], params["ln3_b"])

  return out2.reshape(B, Sq, H), new_state


def ref_decoder_block(X, state, params, num_heads, i, training):
  """Pure-JAX reference reproducing the PyTorch module exactly (f32)."""
  enc_outputs, enc_valid_lens = state[0], state[1]
  cache = state[2][i]
  key_values = X if cache is None else jnp.concatenate([cache, X], axis=1)
  B, S, H = X.shape
  nh, hd = num_heads, H // num_heads

  def mha(q_in, kv_in, valid_lens, wq, wk, wv, wo):
    Sq, Sk = q_in.shape[1], kv_in.shape[1]
    q = (q_in @ wq).reshape(B, Sq, nh, hd).transpose(0, 2, 1, 3)
    k = (kv_in @ wk).reshape(B, Sk, nh, hd).transpose(0, 2, 1, 3)
    v = (kv_in @ wv).reshape(B, Sk, nh, hd).transpose(0, 2, 1, 3)
    scores = jnp.einsum("bhqd,bhkd->bhqk", q, k) / math.sqrt(hd)
    if valid_lens is not None:
      col = jnp.arange(Sk)
      if valid_lens.ndim == 1:
        keep = col[None, None, None, :] < valid_lens[:, None, None, None]
      else:  # (B, Sq) per-query valid lens (training-mode dec mask)
        keep = col[None, None, None, :] < valid_lens[:, None, :, None]
      scores = jnp.where(keep, scores, -1e6)
    attn = jax.nn.softmax(scores, axis=-1)
    out = jnp.einsum("bhqk,bhkd->bhqd", attn, v)
    return out.transpose(0, 2, 1, 3).reshape(B, Sq, H) @ wo

  def ln(z, g, b):
    mu = z.mean(-1, keepdims=True)
    var = ((z - mu) ** 2).mean(-1, keepdims=True)
    return (z - mu) / jnp.sqrt(var + 1e-5) * g + b

  dec_vlens = (jnp.tile(jnp.arange(1, S + 1)[None, :], (B, 1))
               if training else None)
  X2 = mha(X, key_values, dec_vlens,
           params["wq1"], params["wk1"], params["wv1"], params["wo1"])
  Y = ln(X + X2, params["ln1_g"], params["ln1_b"])
  Y2 = mha(Y, enc_outputs, enc_valid_lens,
           params["wq2"], params["wk2"], params["wv2"], params["wo2"])
  Z = ln(Y + Y2, params["ln2_g"], params["ln2_b"])
  ffn = jnp.maximum(Z @ params["w1"] + params["b1"], 0.0) @ params["w2"] + params["b2"]
  return ln(Z + ffn, params["ln3_g"], params["ln3_b"])


if __name__ == "__main__":
  B, S, H = 2, 8, 32          # decoder batch / steps / num_hiddens
  S_ENC = 16                  # encoder sequence length
  FFN_H = 64
  NUM_HEADS = 4

  ks = jax.random.split(jax.random.PRNGKey(0), 18)

  def w(k, shape, s=0.1):
    return (s * jax.random.normal(k, shape)).astype(jnp.float32)

  params = {
      "wq1": w(ks[0], (H, H)), "wk1": w(ks[1], (H, H)),
      "wv1": w(ks[2], (H, H)), "wo1": w(ks[3], (H, H)),
      "ln1_g": 1.0 + w(ks[4], (1, H)), "ln1_b": w(ks[5], (1, H)),
      "wq2": w(ks[6], (H, H)), "wk2": w(ks[7], (H, H)),
      "wv2": w(ks[8], (H, H)), "wo2": w(ks[9], (H, H)),
      "ln2_g": 1.0 + w(ks[10], (1, H)), "ln2_b": w(ks[11], (1, H)),
      "w1": w(ks[12], (H, FFN_H)), "b1": w(ks[13], (1, FFN_H)),
      "w2": w(ks[14], (FFN_H, H)), "b2": w(ks[15], (1, H)),
      "ln3_g": jnp.ones((1, H), jnp.float32),
      "ln3_b": jnp.zeros((1, H), jnp.float32),
  }

  X = jax.random.normal(ks[16], (B, S, H), dtype=jnp.float32)
  enc_outputs = jax.random.normal(ks[17], (B, S_ENC, H), dtype=jnp.float32)
  enc_valid_lens = jnp.array([10, 16], dtype=jnp.int32)

  # --- training-mode step: empty KV cache, causal dec mask applied ---
  state = [enc_outputs, enc_valid_lens, [None]]
  out_train, new_state = transformer_decoder_block(
      X, state, params, NUM_HEADS, i=0, training=True)
  jax.block_until_ready(out_train)
  ref_train = ref_decoder_block(X, state, params, NUM_HEADS, 0, training=True)
  np.testing.assert_allclose(np.asarray(out_train), np.asarray(ref_train),
                             rtol=2e-2, atol=2e-2)
  assert out_train.shape == (B, S, H)
  assert new_state[2][0].shape == (B, S, H)   # KV cache updated

  # --- eval-mode step (no dec mask); cache empty -> key_values == X ---
  state_eval = [enc_outputs, enc_valid_lens, [None]]
  out_eval, _ = transformer_decoder_block(
      X, state_eval, params, NUM_HEADS, i=0, training=False)
  ref_eval = ref_decoder_block(X, state_eval, params, NUM_HEADS, 0,
                               training=False)
  np.testing.assert_allclose(np.asarray(out_eval), np.asarray(ref_eval),
                             rtol=2e-2, atol=2e-2)

  # --- bf16 MXU-operand variant (v6e / v7x feedback): bf16 matmul inputs,
  #     f32 accumulation + softmax / LayerNorm math ---
  out_bf16, _ = transformer_decoder_block(
      X, state, params, NUM_HEADS, i=0, training=True,
      mxu_dtype=jnp.bfloat16)
  jax.block_until_ready(out_bf16)
  assert float(jnp.max(jnp.abs(out_bf16 - ref_train))) < 0.25

  print("KERNEL_OK")
</pallas_src>

<mosaic_0001>
module attributes {stable_mosaic.version = 11 : i64} {
  func.func @decoder_block_kernel(%arg0: i32, %arg1: memref<16x32xf32, #tpu.memory_space<vmem>>, %arg2: memref<16x32xf32, #tpu.memory_space<vmem>>, %arg3: memref<32x32xf32, #tpu.memory_space<vmem>>, %arg4: memref<2x1x1xi32, #tpu.memory_space<vmem>>, %arg5: memref<32x32xf32, #tpu.memory_space<vmem>>, %arg6: memref<32x32xf32, #tpu.memory_space<vmem>>, %arg7: memref<32x32xf32, #tpu.memory_space<vmem>>, %arg8: memref<32x32xf32, #tpu.memory_space<vmem>>, %arg9: memref<1x32xf32, #tpu.memory_space<vmem>>, %arg10: memref<1x32xf32, #tpu.memory_space<vmem>>, %arg11: memref<32x32xf32, #tpu.memory_space<vmem>>, %arg12: memref<32x32xf32, #tpu.memory_space<vmem>>, %arg13: memref<32x32xf32, #tpu.memory_space<vmem>>, %arg14: memref<32x32xf32, #tpu.memory_space<vmem>>, %arg15: memref<1x32xf32, #tpu.memory_space<vmem>>, %arg16: memref<1x32xf32, #tpu.memory_space<vmem>>, %arg17: memref<32x64xf32, #tpu.memory_space<vmem>>, %arg18: memref<1x64xf32, #tpu.memory_space<vmem>>, %arg19: memref<64x32xf32, #tpu.memory_space<vmem>>, %arg20: memref<1x32xf32, #tpu.memory_space<vmem>>, %arg21: memref<1x32xf32, #tpu.memory_space<vmem>>, %arg22: memref<1x32xf32, #tpu.memory_space<vmem>>, %arg23: memref<16x32xf32, #tpu.memory_space<vmem>>) attributes {dimension_semantics = [#tpu.dimension_semantics<parallel>], iteration_bounds = array<i64: 1>, scalar_prefetch = 0 : i64, scratch_operands = 0 : i64, tpu.core_type = #tpu.core_type<tc>, window_params = [{transform_indices = @transform_0, window_bounds = array<i64: 16, 32>}, {transform_indices = @transform_1, window_bounds = array<i64: 16, 32>}, {transform_indices = @transform_2, window_bounds = array<i64: 32, 32>}, {transform_indices = @transform_3, window_bounds = array<i64: 2, 1, 1>}, {pipeline_mode = #tpu.pipeline_mode<synchronous>, transform_indices = @transform_4, window_bounds = array<i64: 32, 32>}, {pipeline_mode = #tpu.pipeline_mode<synchronous>, transform_indices = @transform_5, window_bounds = array<i64: 32, 32>}, {pipeline_mode = #tpu.pipeline_mode<synchronous>, transform_indices = @transform_6, window_bounds = array<i64: 32, 32>}, {pipeline_mode = #tpu.pipeline_mode<synchronous>, transform_indices = @transform_7, window_bounds = array<i64: 32, 32>}, {pipeline_mode = #tpu.pipeline_mode<synchronous>, transform_indices = @transform_8, window_bounds = array<i64: 1, 32>}, {pipeline_mode = #tpu.pipeline_mode<synchronous>, transform_indices = @transform_9, window_bounds = array<i64: 1, 32>}, {pipeline_mode = #tpu.pipeline_mode<synchronous>, transform_indices = @transform_10, window_bounds = array<i64: 32, 32>}, {pipeline_mode = #tpu.pipeline_mode<synchronous>, transform_indices = @transform_11, window_bounds = array<i64: 32, 32>}, {pipeline_mode = #tpu.pipeline_mode<synchronous>, transform_indices = @transform_12, window_bounds = array<i64: 32, 32>}, {pipeline_mode = #tpu.pipeline_mode<synchronous>, transform_indices = @transform_13, window_bounds = array<i64: 32, 32>}, {pipeline_mode = #tpu.pipeline_mode<synchronous>, transform_indices = @transform_14, window_bounds = array<i64: 1, 32>}, {pipeline_mode = #tpu.pipeline_mode<synchronous>, transform_indices = @transform_15, window_bounds = array<i64: 1, 32>}, {pipeline_mode = #tpu.pipeline_mode<synchronous>, transform_indices = @transform_16, window_bounds = array<i64: 32, 64>}, {pipeline_mode = #tpu.pipeline_mode<synchronous>, transform_indices = @transform_17, window_bounds = array<i64: 1, 64>}, {pipeline_mode = #tpu.pipeline_mode<synchronous>, transform_indices = @transform_18, window_bounds = array<i64: 64, 32>}, {pipeline_mode = #tpu.pipeline_mode<synchronous>, transform_indices = @transform_19, window_bounds = array<i64: 1, 32>}, {pipeline_mode = #tpu.pipeline_mode<synchronous>, transform_indices = @transform_20, window_bounds = array<i64: 1, 32>}, {pipeline_mode = #tpu.pipeline_mode<synchronous>, transform_indices = @transform_21, window_bounds = array<i64: 1, 32>}, {transform_indices = @transform_22, window_bounds = array<i64: 16, 32>}]} {
    %c0 = arith.constant 0 : index
    %c0_0 = arith.constant 0 : index
    %0 = vector.load %arg1[%c0, %c0_0] : memref<16x32xf32, #tpu.memory_space<vmem>>, vector<16x32xf32>
    %c0_1 = arith.constant 0 : index
    %c0_2 = arith.constant 0 : index
    %1 = vector.load %arg2[%c0_1, %c0_2] : memref<16x32xf32, #tpu.memory_space<vmem>>, vector<16x32xf32>
    %c0_3 = arith.constant 0 : index
    %c0_4 = arith.constant 0 : index
    %2 = vector.load %arg3[%c0_3, %c0_4] : memref<32x32xf32, #tpu.memory_space<vmem>>, vector<32x32xf32>
    %3 = tpu.iota {dimensions = array<i32: 1>} : vector<2x8x8xi32>
    %4 = tpu.iota {dimensions = array<i32: 2>} : vector<2x8x8xi32>
    %c0_i32 = arith.constant 0 : i32
    %5 = vector.broadcast %c0_i32 : i32 to vector<2x8x8xi32>
    %6 = arith.addi %3, %5 : vector<2x8x8xi32>
    %7 = arith.cmpi sle, %4, %6 : vector<2x8x8xi32>
    %cst = arith.constant 0.000000e+00 : f32
    %cst_5 = arith.constant -1.000000e+06 : f32
    %8 = vector.broadcast %cst : f32 to vector<2x8x8xf32>
    %9 = vector.broadcast %cst_5 : f32 to vector<2x8x8xf32>
    %10 = arith.select %7, %8, %9 : vector<2x8x8xi1>, vector<2x8x8xf32>
    %11 = tpu.iota {dimensions = array<i32: 2>} : vector<2x8x16xi32>
    %c0_6 = arith.constant 0 : index
    %c0_7 = arith.constant 0 : index
    %c0_8 = arith.constant 0 : index
    %12 = vector.load %arg4[%c0_6, %c0_7, %c0_8] : memref<2x1x1xi32, #tpu.memory_space<vmem>>, vector<2x1x1xi32>
    %13 = vector.broadcast %12 : vector<2x1x1xi32> to vector<2x8x16xi32>
    %14 = arith.cmpi slt, %11, %13 : vector<2x8x16xi32>
    %cst_9 = arith.constant 0.000000e+00 : f32
    %cst_10 = arith.constant -1.000000e+06 : f32
    %15 = vector.broadcast %cst_9 : f32 to vector<2x8x16xf32>
    %16 = vector.broadcast %cst_10 : f32 to vector<2x8x16xf32>
    %17 = arith.select %14, %15, %16 : vector<2x8x16xi1>, vector<2x8x16xf32>
    %c0_11 = arith.constant 0 : index
    %c0_12 = arith.constant 0 : index
    %18 = vector.load %arg5[%c0_11, %c0_12] : memref<32x32xf32, #tpu.memory_space<vmem>>, vector<32x32xf32>
    %cst_13 = arith.constant dense<0.000000e+00> : vector<16x32xf32>
    %19 = tpu.matmul %0, %18, %cst_13 {dimension_numbers = #tpu.dot_dimension_numbers<[1], [0], [0], [1], [0, 0, 1, 1], [], []>} : vector<16x32xf32>, vector<32x32xf32>, vector<16x32xf32> -> vector<16x32xf32>
    %cst_14 = arith.constant 0.353553385 : f32
    %20 = vector.broadcast %cst_14 : f32 to vector<16x32xf32>
    %21 = arith.mulf %19, %20 : vector<16x32xf32>
    %c0_15 = arith.constant 0 : index
    %c0_16 = arith.constant 0 : index
    %22 = vector.load %arg6[%c0_15, %c0_16] : memref<32x32xf32, #tpu.memory_space<vmem>>, vector<32x32xf32>
    %cst_17 = arith.constant dense<0.000000e+00> : vector<16x32xf32>
    %23 = tpu.matmul %1, %22, %cst_17 {dimension_numbers = #tpu.dot_dimension_numbers<[1], [0], [0], [1], [0, 0, 1, 1], [], []>} : vector<16x32xf32>, vector<32x32xf32>, vector<16x32xf32> -> vector<16x32xf32>
    %c0_18 = arith.constant 0 : index
    %c0_19 = arith.constant 0 : index
    %24 = vector.load %arg7[%c0_18, %c0_19] : memref<32x32xf32, #tpu.memory_space<vmem>>, vector<32x32xf32>
    %cst_20 = arith.constant dense<0.000000e+00> : vector<16x32xf32>
    %25 = tpu.matmul %1, %24, %cst_20 {dimension_numbers = #tpu.dot_dimension_numbers<[1], [0], [0], [1], [0, 0, 1, 1], [], []>} : vector<16x32xf32>, vector<32x32xf32>, vector<16x32xf32> -> vector<16x32xf32>
    %26 = vector.shape_cast %21 : vector<16x32xf32> to vector<2x8x32xf32>
    %27 = vector.shape_cast %23 : vector<16x32xf32> to vector<2x8x32xf32>
    %28 = vector.shape_cast %25 : vector<16x32xf32> to vector<2x8x32xf32>
    %c0_21 = arith.constant 0 : index
    %c0_22 = arith.constant 0 : index
    %29 = vector.load %arg8[%c0_21, %c0_22] : memref<32x32xf32, #tpu.memory_space<vmem>>, vector<32x32xf32>
    %cst_23 = arith.constant 0.000000e+00 : f32
    %30 = vector.broadcast %cst_23 : f32 to vector<16x32xf32>
    %31 = vector.extract_strided_slice %26 {offsets = [0, 0, 0], sizes = [2, 8, 8], strides = [1, 1, 1]} : vector<2x8x32xf32> to vector<2x8x8xf32>
    %32 = vector.extract_strided_slice %27 {offsets = [0, 0, 0], sizes = [2, 8, 8], strides = [1, 1, 1]} : vector<2x8x32xf32> to vector<2x8x8xf32>
    "tpu.trace_start"() <{level = 10 : i32, message = "bqd,bkd->bqk"}> : () -> ()
    %cst_24 = arith.constant dense<0.000000e+00> : vector<2x8x8xf32>
    %33 = tpu.matmul %31, %32, %cst_24 {dimension_numbers = #tpu.dot_dimension_numbers<[2], [2], [1], [1], [0, 0, 0, 1, 1, 1], [0], [0]>} : vector<2x8x8xf32>, vector<2x8x8xf32>, vector<2x8x8xf32> -> vector<2x8x8xf32>
    "tpu.trace_stop"() : () -> ()
    %34 = arith.addf %33, %10 : vector<2x8x8xf32>
    %cst_25 = arith.constant dense<0xFF800000> : vector<2x8xf32>
    %35 = vector.multi_reduction <maximumf>, %34, %cst_25 [2] : vector<2x8x8xf32> to vector<2x8xf32>
    %36 = vector.shape_cast %35 : vector<2x8xf32> to vector<2x8x1xf32>
    %37 = vector.broadcast %36 : vector<2x8x1xf32> to vector<2x8x8xf32>
    %38 = arith.subf %34, %37 : vector<2x8x8xf32>
    %39 = math.exp %38 : vector<2x8x8xf32>
    %cst_26 = arith.constant dense<0.000000e+00> : vector<2x8xf32>
    %40 = vector.multi_reduction <add>, %39, %cst_26 [2] : vector<2x8x8xf32> to vector<2x8xf32>
    %41 = vector.shape_cast %40 : vector<2x8xf32> to vector<2x8x1xf32>
    %42 = tpu.reciprocal %41 {approx = true} : vector<2x8x1xf32> -> vector<2x8x1xf32>
    %43 = vector.broadcast %42 : vector<2x8x1xf32> to vector<2x8x8xf32>
    %44 = arith.mulf %39, %43 : vector<2x8x8xf32>
    %45 = vector.extract_strided_slice %28 {offsets = [0, 0, 0], sizes = [2, 8, 8], strides = [1, 1, 1]} : vector<2x8x32xf32> to vector<2x8x8xf32>
    "tpu.trace_start"() <{level = 10 : i32, message = "bqk,bkd->bqd"}> : () -> ()
    %cst_27 = arith.constant dense<0.000000e+00> : vector<2x8x8xf32>
    %46 = tpu.matmul %44, %45, %cst_27 {dimension_numbers = #tpu.dot_dimension_numbers<[2], [1], [1], [2], [0, 0, 0, 1, 1, 2], [0], [0]>} : vector<2x8x8xf32>, vector<2x8x8xf32>, vector<2x8x8xf32> -> vector<2x8x8xf32>
    "tpu.trace_stop"() : () -> ()
    %47 = vector.shape_cast %46 : vector<2x8x8xf32> to vector<16x8xf32>
    %48 = vector.extract_strided_slice %29 {offsets = [0, 0], sizes = [8, 32], strides = [1, 1]} : vector<32x32xf32> to vector<8x32xf32>
    %cst_28 = arith.constant dense<0.000000e+00> : vector<16x32xf32>
    %49 = tpu.matmul %47, %48, %cst_28 {dimension_numbers = #tpu.dot_dimension_numbers<[1], [0], [0], [1], [0, 0, 1, 1], [], []>} : vector<16x8xf32>, vector<8x32xf32>, vector<16x32xf32> -> vector<16x32xf32>
    %50 = arith.addf %30, %49 : vector<16x32xf32>
    %51 = vector.extract_strided_slice %26 {offsets = [0, 0, 8], sizes = [2, 8, 8], strides = [1, 1, 1]} : vector<2x8x32xf32> to vector<2x8x8xf32>
    %52 = vector.extract_strided_slice %27 {offsets = [0, 0, 8], sizes = [2, 8, 8], strides = [1, 1, 1]} : vector<2x8x32xf32> to vector<2x8x8xf32>
    "tpu.trace_start"() <{level = 10 : i32, message = "bqd,bkd->bqk"}> : () -> ()
    %cst_29 = arith.constant dense<0.000000e+00> : vector<2x8x8xf32>
    %53 = tpu.matmul %51, %52, %cst_29 {dimension_numbers = #tpu.dot_dimension_numbers<[2], [2], [1], [1], [0, 0, 0, 1, 1, 1], [0], [0]>} : vector<2x8x8xf32>, vector<2x8x8xf32>, vector<2x8x8xf32> -> vector<2x8x8xf32>
    "tpu.trace_stop"() : () -> ()
    %54 = arith.addf %53, %10 : vector<2x8x8xf32>
    %cst_30 = arith.constant dense<0xFF800000> : vector<2x8xf32>
    %55 = vector.multi_reduction <maximumf>, %54, %cst_30 [2] : vector<2x8x8xf32> to vector<2x8xf32>
    %56 = vector.shape_cast %55 : vector<2x8xf32> to vector<2x8x1xf32>
    %57 = vector.broadcast %56 : vector<2x8x1xf32> to vector<2x8x8xf32>
    %58 = arith.subf %54, %57 : vector<2x8x8xf32>
    %59 = math.exp %58 : vector<2x8x8xf32>
    %cst_31 = arith.constant dense<0.000000e+00> : vector<2x8xf32>
    %60 = vector.multi_reduction <add>, %59, %cst_31 [2] : vector<2x8x8xf32> to vector<2x8xf32>
    %61 = vector.shape_cast %60 : vector<2x8xf32> to vector<2x8x1xf32>
    %62 = tpu.reciprocal %61 {approx = true} : vector<2x8x1xf32> -> vector<2x8x1xf32>
    %63 = vector.broadcast %62 : vector<2x8x1xf32> to vector<2x8x8xf32>
    %64 = arith.mulf %59, %63 : vector<2x8x8xf32>
    %65 = vector.extract_strided_slice %28 {offsets = [0, 0, 8], sizes = [2, 8, 8], strides = [1, 1, 1]} : vector<2x8x32xf32> to vector<2x8x8xf32>
    "tpu.trace_start"() <{level = 10 : i32, message = "bqk,bkd->bqd"}> : () -> ()
    %cst_32 = arith.constant dense<0.000000e+00> : vector<2x8x8xf32>
    %66 = tpu.matmul %64, %65, %cst_32 {dimension_numbers = #tpu.dot_dimension_numbers<[2], [1], [1], [2], [0, 0, 0, 1, 1, 2], [0], [0]>} : vector<2x8x8xf32>, vector<2x8x8xf32>, vector<2x8x8xf32> -> vector<2x8x8xf32>
    "tpu.trace_stop"() : () -> ()
    %67 = vector.shape_cast %66 : vector<2x8x8xf32> to vector<16x8xf32>
    %68 = vector.extract_strided_slice %29 {offsets = [8, 0], sizes = [8, 32], strides = [1, 1]} : vector<32x32xf32> to vector<8x32xf32>
    %cst_33 = arith.constant dense<0.000000e+00> : vector<16x32xf32>
    %69 = tpu.matmul %67, %68, %cst_33 {dimension_numbers = #tpu.dot_dimension_numbers<[1], [0], [0], [1], [0, 0, 1, 1], [], []>} : vector<16x8xf32>, vector<8x32xf32>, vector<16x32xf32> -> vector<16x32xf32>
    %70 = arith.addf %50, %69 : vector<16x32xf32>
    %71 = vector.extract_strided_slice %26 {offsets = [0, 0, 16], sizes = [2, 8, 8], strides = [1, 1, 1]} : vector<2x8x32xf32> to vector<2x8x8xf32>
    %72 = vector.extract_strided_slice %27 {offsets = [0, 0, 16], sizes = [2, 8, 8], strides = [1, 1, 1]} : vector<2x8x32xf32> to vector<2x8x8xf32>
    "tpu.trace_start"() <{level = 10 : i32, message = "bqd,bkd->bqk"}> : () -> ()
    %cst_34 = arith.constant dense<0.000000e+00> : vector<2x8x8xf32>
    %73 = tpu.matmul %71, %72, %cst_34 {dimension_numbers = #tpu.dot_dimension_numbers<[2], [2], [1], [1], [0, 0, 0, 1, 1, 1], [0], [0]>} : vector<2x8x8xf32>, vector<2x8x8xf32>, vector<2x8x8xf32> -> vector<2x8x8xf32>
    "tpu.trace_stop"() : () -> ()
    %74 = arith.addf %73, %10 : vector<2x8x8xf32>
    %cst_35 = arith.constant dense<0xFF800000> : vector<2x8xf32>
    %75 = vector.multi_reduction <maximumf>, %74, %cst_35 [2] : vector<2x8x8xf32> to vector<2x8xf32>
    %76 = vector.shape_cast %75 : vector<2x8xf32> to vector<2x8x1xf32>
    %77 = vector.broadcast %76 : vector<2x8x1xf32> to vector<2x8x8xf32>
    %78 = arith.subf %74, %77 : vector<2x8x8xf32>
    %79 = math.exp %78 : vector<2x8x8xf32>
    %cst_36 = arith.constant dense<0.000000e+00> : vector<2x8xf32>
    %80 = vector.multi_reduction <add>, %79, %cst_36 [2] : vector<2x8x8xf32> to vector<2x8xf32>
    %81 = vector.shape_cast %80 : vector<2x8xf32> to vector<2x8x1xf32>
    %82 = tpu.reciprocal %81 {approx = true} : vector<2x8x1xf32> -> vector<2x8x1xf32>
    %83 = vector.broadcast %82 : vector<2x8x1xf32> to vector<2x8x8xf32>
    %84 = arith.mulf %79, %83 : vector<2x8x8xf32>
    %85 = vector.extract_strided_slice %28 {offsets = [0, 0, 16], sizes = [2, 8, 8], strides = [1, 1, 1]} : vector<2x8x32xf32> to vector<2x8x8xf32>
    "tpu.trace_start"() <{level = 10 : i32, message = "bqk,bkd->bqd"}> : () -> ()
    %cst_37 = arith.constant dense<0.000000e+00> : vector<2x8x8xf32>
    %86 = tpu.matmul %84, %85, %cst_37 {dimension_numbers = #tpu.dot_dimension_numbers<[2], [1], [1], [2], [0, 0, 0, 1, 1, 2], [0], [0]>} : vector<2x8x8xf32>, vector<2x8x8xf32>, vector<2x8x8xf32> -> vector<2x8x8xf32>
    "tpu.trace_stop"() : () -> ()
    %87 = vector.shape_cast %86 : vector<2x8x8xf32> to vector<16x8xf32>
    %88 = vector.extract_strided_slice %29 {offsets = [16, 0], sizes = [8, 32], strides = [1, 1]} : vector<32x32xf32> to vector<8x32xf32>
    %cst_38 = arith.constant dense<0.000000e+00> : vector<16x32xf32>
    %89 = tpu.matmul %87, %88, %cst_38 {dimension_numbers = #tpu.dot_dimension_numbers<[1], [0], [0], [1], [0, 0, 1, 1], [], []>} : vector<16x8xf32>, vector<8x32xf32>, vector<16x32xf32> -> vector<16x32xf32>
    %90 = arith.addf %70, %89 : vector<16x32xf32>
    %91 = vector.extract_strided_slice %26 {offsets = [0, 0, 24], sizes = [2, 8, 8], strides = [1, 1, 1]} : vector<2x8x32xf32> to vector<2x8x8xf32>
    %92 = vector.extract_strided_slice %27 {offsets = [0, 0, 24], sizes = [2, 8, 8], strides = [1, 1, 1]} : vector<2x8x32xf32> to vector<2x8x8xf32>
    "tpu.trace_start"() <{level = 10 : i32, message = "bqd,bkd->bqk"}> : () -> ()
    %cst_39 = arith.constant dense<0.000000e+00> : vector<2x8x8xf32>
    %93 = tpu.matmul %91, %92, %cst_39 {dimension_numbers = #tpu.dot_dimension_numbers<[2], [2], [1], [1], [0, 0, 0, 1, 1, 1], [0], [0]>} : vector<2x8x8xf32>, vector<2x8x8xf32>, vector<2x8x8xf32> -> vector<2x8x8xf32>
    "tpu.trace_stop"() : () -> ()
    %94 = arith.addf %93, %10 : vector<2x8x8xf32>
    %cst_40 = arith.constant dense<0xFF800000> : vector<2x8xf32>
    %95 = vector.multi_reduction <maximumf>, %94, %cst_40 [2] : vector<2x8x8xf32> to vector<2x8xf32>
    %96 = vector.shape_cast %95 : vector<2x8xf32> to vector<2x8x1xf32>
    %97 = vector.broadcast %96 : vector<2x8x1xf32> to vector<2x8x8xf32>
    %98 = arith.subf %94, %97 : vector<2x8x8xf32>
    %99 = math.exp %98 : vector<2x8x8xf32>
    %cst_41 = arith.constant dense<0.000000e+00> : vector<2x8xf32>
    %100 = vector.multi_reduction <add>, %99, %cst_41 [2] : vector<2x8x8xf32> to vector<2x8xf32>
    %101 = vector.shape_cast %100 : vector<2x8xf32> to vector<2x8x1xf32>
    %102 = tpu.reciprocal %101 {approx = true} : vector<2x8x1xf32> -> vector<2x8x1xf32>
    %103 = vector.broadcast %102 : vector<2x8x1xf32> to vector<2x8x8xf32>
    %104 = arith.mulf %99, %103 : vector<2x8x8xf32>
    %105 = vector.extract_strided_slice %28 {offsets = [0, 0, 24], sizes = [2, 8, 8], strides = [1, 1, 1]} : vector<2x8x32xf32> to vector<2x8x8xf32>
    "tpu.trace_start"() <{level = 10 : i32, message = "bqk,bkd->bqd"}> : () -> ()
    %cst_42 = arith.constant dense<0.000000e+00> : vector<2x8x8xf32>
    %106 = tpu.matmul %104, %105, %cst_42 {dimension_numbers = #tpu.dot_dimension_numbers<[2], [1], [1], [2], [0, 0, 0, 1, 1, 2], [0], [0]>} : vector<2x8x8xf32>, vector<2x8x8xf32>, vector<2x8x8xf32> -> vector<2x8x8xf32>
    "tpu.trace_stop"() : () -> ()
    %107 = vector.shape_cast %106 : vector<2x8x8xf32> to vector<16x8xf32>
    %108 = vector.extract_strided_slice %29 {offsets = [24, 0], sizes = [8, 32], strides = [1, 1]} : vector<32x32xf32> to vector<8x32xf32>
    %cst_43 = arith.constant dense<0.000000e+00> : vector<16x32xf32>
    %109 = tpu.matmul %107, %108, %cst_43 {dimension_numbers = #tpu.dot_dimension_numbers<[1], [0], [0], [1], [0, 0, 1, 1], [], []>} : vector<16x8xf32>, vector<8x32xf32>, vector<16x32xf32> -> vector<16x32xf32>
    %110 = arith.addf %90, %109 : vector<16x32xf32>
    %111 = arith.addf %110, %0 : vector<16x32xf32>
    %cst_44 = arith.constant dense<0.000000e+00> : vector<16xf32>
    %112 = vector.multi_reduction <add>, %111, %cst_44 [1] : vector<16x32xf32> to vector<16xf32>
    %113 = vector.shape_cast %112 : vector<16xf32> to vector<16x1xf32>
    %cst_45 = arith.constant 3.200000e+01 : f32
    %114 = vector.broadcast %cst_45 : f32 to vector<16x1xf32>
    %115 = arith.divf %113, %114 : vector<16x1xf32>
    %116 = vector.broadcast %115 : vector<16x1xf32> to vector<16x32xf32>
    %117 = arith.subf %111, %116 : vector<16x32xf32>
    %118 = vector.broadcast %115 : vector<16x1xf32> to vector<16x32xf32>
    %119 = arith.subf %111, %118 : vector<16x32xf32>
    %120 = arith.mulf %117, %119 : vector<16x32xf32>
    %cst_46 = arith.constant dense<0.000000e+00> : vector<16xf32>
    %121 = vector.multi_reduction <add>, %120, %cst_46 [1] : vector<16x32xf32> to vector<16xf32>
    %122 = vector.shape_cast %121 : vector<16xf32> to vector<16x1xf32>
    %cst_47 = arith.constant 3.200000e+01 : f32
    %123 = vector.broadcast %cst_47 : f32 to vector<16x1xf32>
    %124 = arith.divf %122, %123 : vector<16x1xf32>
    %125 = vector.broadcast %115 : vector<16x1xf32> to vector<16x32xf32>
    %126 = arith.subf %111, %125 : vector<16x32xf32>
    %cst_48 = arith.constant 9.99999974E-6 : f32
    %127 = vector.broadcast %cst_48 : f32 to vector<16x1xf32>
    %128 = arith.addf %124, %127 : vector<16x1xf32>
    %129 = math.rsqrt %128 : vector<16x1xf32>
    %130 = vector.broadcast %129 : vector<16x1xf32> to vector<16x32xf32>
    %131 = arith.mulf %126, %130 : vector<16x32xf32>
    %c0_49 = arith.constant 0 : index
    %c0_50 = arith.constant 0 : index
    %132 = vector.load %arg9[%c0_49, %c0_50] : memref<1x32xf32, #tpu.memory_space<vmem>>, vector<1x32xf32>
    %133 = vector.broadcast %132 : vector<1x32xf32> to vector<16x32xf32>
    %134 = arith.mulf %131, %133 : vector<16x32xf32>
    %c0_51 = arith.constant 0 : index
    %c0_52 = arith.constant 0 : index
    %135 = vector.load %arg10[%c0_51, %c0_52] : memref<1x32xf32, #tpu.memory_space<vmem>>, vector<1x32xf32>
    %136 = vector.broadcast %135 : vector<1x32xf32> to vector<16x32xf32>
    %137 = arith.addf %134, %136 : vector<16x32xf32>
    %c0_53 = arith.constant 0 : index
    %c0_54 = arith.constant 0 : index
    %138 = vector.load %arg11[%c0_53, %c0_54] : memref<32x32xf32, #tpu.memory_space<vmem>>, vector<32x32xf32>
    %cst_55 = arith.constant dense<0.000000e+00> : vector<16x32xf32>
    %139 = tpu.matmul %137, %138, %cst_55 {dimension_numbers = #tpu.dot_dimension_numbers<[1], [0], [0], [1], [0, 0, 1, 1], [], []>} : vector<16x32xf32>, vector<32x32xf32>, vector<16x32xf32> -> vector<16x32xf32>
    %cst_56 = arith.constant 0.353553385 : f32
    %140 = vector.broadcast %cst_56 : f32 to vector<16x32xf32>
    %141 = arith.mulf %139, %140 : vector<16x32xf32>
    %c0_57 = arith.constant 0 : index
    %c0_58 = arith.constant 0 : index
    %142 = vector.load %arg12[%c0_57, %c0_58] : memref<32x32xf32, #tpu.memory_space<vmem>>, vector<32x32xf32>
    %cst_59 = arith.constant dense<0.000000e+00> : vector<32x32xf32>
    %143 = tpu.matmul %2, %142, %cst_59 {dimension_numbers = #tpu.dot_dimension_numbers<[1], [0], [0], [1], [0, 0, 1, 1], [], []>} : vector<32x32xf32>, vector<32x32xf32>, vector<32x32xf32> -> vector<32x32xf32>
    %c0_60 = arith.constant 0 : index
    %c0_61 = arith.constant 0 : index
    %144 = vector.load %arg13[%c0_60, %c0_61] : memref<32x32xf32, #tpu.memory_space<vmem>>, vector<32x32xf32>
    %cst_62 = arith.constant dense<0.000000e+00> : vector<32x32xf32>
    %145 = tpu.matmul %2, %144, %cst_62 {dimension_numbers = #tpu.dot_dimension_numbers<[1], [0], [0], [1], [0, 0, 1, 1], [], []>} : vector<32x32xf32>, vector<32x32xf32>, vector<32x32xf32> -> vector<32x32xf32>
    %146 = vector.shape_cast %141 : vector<16x32xf32> to vector<2x8x32xf32>
    %147 = vector.shape_cast %143 : vector<32x32xf32> to vector<2x16x32xf32>
    %148 = vector.shape_cast %145 : vector<32x32xf32> to vector<2x16x32xf32>
    %c0_63 = arith.constant 0 : index
    %c0_64 = arith.constant 0 : index
    %149 = vector.load %arg14[%c0_63, %c0_64] : memref<32x32xf32, #tpu.memory_space<vmem>>, vector<32x32xf32>
    %cst_65 = arith.constant 0.000000e+00 : f32
    %150 = vector.broadcast %cst_65 : f32 to vector<16x32xf32>
    %151 = vector.extract_strided_slice %146 {offsets = [0, 0, 0], sizes = [2, 8, 8], strides = [1, 1, 1]} : vector<2x8x32xf32> to vector<2x8x8xf32>
    %152 = vector.extract_strided_slice %147 {offsets = [0, 0, 0], sizes = [2, 16, 8], strides = [1, 1, 1]} : vector<2x16x32xf32> to vector<2x16x8xf32>
    "tpu.trace_start"() <{level = 10 : i32, message = "bqd,bkd->bqk"}> : () -> ()
    %cst_66 = arith.constant dense<0.000000e+00> : vector<2x8x16xf32>
    %153 = tpu.matmul %151, %152, %cst_66 {dimension_numbers = #tpu.dot_dimension_numbers<[2], [2], [1], [1], [0, 0, 0, 1, 1, 1], [0], [0]>} : vector<2x8x8xf32>, vector<2x16x8xf32>, vector<2x8x16xf32> -> vector<2x8x16xf32>
    "tpu.trace_stop"() : () -> ()
    %154 = arith.addf %153, %17 : vector<2x8x16xf32>
    %cst_67 = arith.constant dense<0xFF800000> : vector<2x8xf32>
    %155 = vector.multi_reduction <maximumf>, %154, %cst_67 [2] : vector<2x8x16xf32> to vector<2x8xf32>
    %156 = vector.shape_cast %155 : vector<2x8xf32> to vector<2x8x1xf32>
    %157 = vector.broadcast %156 : vector<2x8x1xf32> to vector<2x8x16xf32>
    %158 = arith.subf %154, %157 : vector<2x8x16xf32>
    %159 = math.exp %158 : vector<2x8x16xf32>
    %cst_68 = arith.constant dense<0.000000e+00> : vector<2x8xf32>
    %160 = vector.multi_reduction <add>, %159, %cst_68 [2] : vector<2x8x16xf32> to vector<2x8xf32>
    %161 = vector.shape_cast %160 : vector<2x8xf32> to vector<2x8x1xf32>
    %162 = tpu.reciprocal %161 {approx = true} : vector<2x8x1xf32> -> vector<2x8x1xf32>
    %163 = vector.broadcast %162 : vector<2x8x1xf32> to vector<2x8x16xf32>
    %164 = arith.mulf %159, %163 : vector<2x8x16xf32>
    %165 = vector.extract_strided_slice %148 {offsets = [0, 0, 0], sizes = [2, 16, 8], strides = [1, 1, 1]} : vector<2x16x32xf32> to vector<2x16x8xf32>
    "tpu.trace_start"() <{level = 10 : i32, message = "bqk,bkd->bqd"}> : () -> ()
    %cst_69 = arith.constant dense<0.000000e+00> : vector<2x8x8xf32>
    %166 = tpu.matmul %164, %165, %cst_69 {dimension_numbers = #tpu.dot_dimension_numbers<[2], [1], [1], [2], [0, 0, 0, 1, 1, 2], [0], [0]>} : vector<2x8x16xf32>, vector<2x16x8xf32>, vector<2x8x8xf32> -> vector<2x8x8xf32>
    "tpu.trace_stop"() : () -> ()
    %167 = vector.shape_cast %166 : vector<2x8x8xf32> to vector<16x8xf32>
    %168 = vector.extract_strided_slice %149 {offsets = [0, 0], sizes = [8, 32], strides = [1, 1]} : vector<32x32xf32> to vector<8x32xf32>
    %cst_70 = arith.constant dense<0.000000e+00> : vector<16x32xf32>
    %169 = tpu.matmul %167, %168, %cst_70 {dimension_numbers = #tpu.dot_dimension_numbers<[1], [0], [0], [1], [0, 0, 1, 1], [], []>} : vector<16x8xf32>, vector<8x32xf32>, vector<16x32xf32> -> vector<16x32xf32>
    %170 = arith.addf %150, %169 : vector<16x32xf32>
    %171 = vector.extract_strided_slice %146 {offsets = [0, 0, 8], sizes = [2, 8, 8], strides = [1, 1, 1]} : vector<2x8x32xf32> to vector<2x8x8xf32>
    %172 = vector.extract_strided_slice %147 {offsets = [0, 0, 8], sizes = [2, 16, 8], strides = [1, 1, 1]} : vector<2x16x32xf32> to vector<2x16x8xf32>
    "tpu.trace_start"() <{level = 10 : i32, message = "bqd,bkd->bqk"}> : () -> ()
    %cst_71 = arith.constant dense<0.000000e+00> : vector<2x8x16xf32>
    %173 = tpu.matmul %171, %172, %cst_71 {dimension_numbers = #tpu.dot_dimension_numbers<[2], [2], [1], [1], [0, 0, 0, 1, 1, 1], [0], [0]>} : vector<2x8x8xf32>, vector<2x16x8xf32>, vector<2x8x16xf32> -> vector<2x8x16xf32>
    "tpu.trace_stop"() : () -> ()
    %174 = arith.addf %173, %17 : vector<2x8x16xf32>
    %cst_72 = arith.constant dense<0xFF800000> : vector<2x8xf32>
    %175 = vector.multi_reduction <maximumf>, %174, %cst_72 [2] : vector<2x8x16xf32> to vector<2x8xf32>
    %176 = vector.shape_cast %175 : vector<2x8xf32> to vector<2x8x1xf32>
    %177 = vector.broadcast %176 : vector<2x8x1xf32> to vector<2x8x16xf32>
    %178 = arith.subf %174, %177 : vector<2x8x16xf32>
    %179 = math.exp %178 : vector<2x8x16xf32>
    %cst_73 = arith.constant dense<0.000000e+00> : vector<2x8xf32>
    %180 = vector.multi_reduction <add>, %179, %cst_73 [2] : vector<2x8x16xf32> to vector<2x8xf32>
    %181 = vector.shape_cast %180 : vector<2x8xf32> to vector<2x8x1xf32>
    %182 = tpu.reciprocal %181 {approx = true} : vector<2x8x1xf32> -> vector<2x8x1xf32>
    %183 = vector.broadcast %182 : vector<2x8x1xf32> to vector<2x8x16xf32>
    %184 = arith.mulf %179, %183 : vector<2x8x16xf32>
    %185 = vector.extract_strided_slice %148 {offsets = [0, 0, 8], sizes = [2, 16, 8], strides = [1, 1, 1]} : vector<2x16x32xf32> to vector<2x16x8xf32>
    "tpu.trace_start"() <{level = 10 : i32, message = "bqk,bkd->bqd"}> : () -> ()
    %cst_74 = arith.constant dense<0.000000e+00> : vector<2x8x8xf32>
    %186 = tpu.matmul %184, %185, %cst_74 {dimension_numbers = #tpu.dot_dimension_numbers<[2], [1], [1], [2], [0, 0, 0, 1, 1, 2], [0], [0]>} : vector<2x8x16xf32>, vector<2x16x8xf32>, vector<2x8x8xf32> -> vector<2x8x8xf32>
    "tpu.trace_stop"() : () -> ()
    %187 = vector.shape_cast %186 : vector<2x8x8xf32> to vector<16x8xf32>
    %188 = vector.extract_strided_slice %149 {offsets = [8, 0], sizes = [8, 32], strides = [1, 1]} : vector<32x32xf32> to vector<8x32xf32>
    %cst_75 = arith.constant dense<0.000000e+00> : vector<16x32xf32>
    %189 = tpu.matmul %187, %188, %cst_75 {dimension_numbers = #tpu.dot_dimension_numbers<[1], [0], [0], [1], [0, 0, 1, 1], [], []>} : vector<16x8xf32>, vector<8x32xf32>, vector<16x32xf32> -> vector<16x32xf32>
    %190 = arith.addf %170, %189 : vector<16x32xf32>
    %191 = vector.extract_strided_slice %146 {offsets = [0, 0, 16], sizes = [2, 8, 8], strides = [1, 1, 1]} : vector<2x8x32xf32> to vector<2x8x8xf32>
    %192 = vector.extract_strided_slice %147 {offsets = [0, 0, 16], sizes = [2, 16, 8], strides = [1, 1, 1]} : vector<2x16x32xf32> to vector<2x16x8xf32>
    "tpu.trace_start"() <{level = 10 : i32, message = "bqd,bkd->bqk"}> : () -> ()
    %cst_76 = arith.constant dense<0.000000e+00> : vector<2x8x16xf32>
    %193 = tpu.matmul %191, %192, %cst_76 {dimension_numbers = #tpu.dot_dimension_numbers<[2], [2], [1], [1], [0, 0, 0, 1, 1, 1], [0], [0]>} : vector<2x8x8xf32>, vector<2x16x8xf32>, vector<2x8x16xf32> -> vector<2x8x16xf32>
    "tpu.trace_stop"() : () -> ()
    %194 = arith.addf %193, %17 : vector<2x8x16xf32>
    %cst_77 = arith.constant dense<0xFF800000> : vector<2x8xf32>
    %195 = vector.multi_reduction <maximumf>, %194, %cst_77 [2] : vector<2x8x16xf32> to vector<2x8xf32>
    %196 = vector.shape_cast %195 : vector<2x8xf32> to vector<2x8x1xf32>
    %197 = vector.broadcast %196 : vector<2x8x1xf32> to vector<2x8x16xf32>
    %198 = arith.subf %194, %197 : vector<2x8x16xf32>
    %199 = math.exp %198 : vector<2x8x16xf32>
    %cst_78 = arith.constant dense<0.000000e+00> : vector<2x8xf32>
    %200 = vector.multi_reduction <add>, %199, %cst_78 [2] : vector<2x8x16xf32> to vector<2x8xf32>
    %201 = vector.shape_cast %200 : vector<2x8xf32> to vector<2x8x1xf32>
    %202 = tpu.reciprocal %201 {approx = true} : vector<2x8x1xf32> -> vector<2x8x1xf32>
    %203 = vector.broadcast %202 : vector<2x8x1xf32> to vector<2x8x16xf32>
    %204 = arith.mulf %199, %203 : vector<2x8x16xf32>
    %205 = vector.extract_strided_slice %148 {offsets = [0, 0, 16], sizes = [2, 16, 8], strides = [1, 1, 1]} : vector<2x16x32xf32> to vector<2x16x8xf32>
    "tpu.trace_start"() <{level = 10 : i32, message = "bqk,bkd->bqd"}> : () -> ()
    %cst_79 = arith.constant dense<0.000000e+00> : vector<2x8x8xf32>
    %206 = tpu.matmul %204, %205, %cst_79 {dimension_numbers = #tpu.dot_dimension_numbers<[2], [1], [1], [2], [0, 0, 0, 1, 1, 2], [0], [0]>} : vector<2x8x16xf32>, vector<2x16x8xf32>, vector<2x8x8xf32> -> vector<2x8x8xf32>
    "tpu.trace_stop"() : () -> ()
    %207 = vector.shape_cast %206 : vector<2x8x8xf32> to vector<16x8xf32>
    %208 = vector.extract_strided_slice %149 {offsets = [16, 0], sizes = [8, 32], strides = [1, 1]} : vector<32x32xf32> to vector<8x32xf32>
    %cst_80 = arith.constant dense<0.000000e+00> : vector<16x32xf32>
    %209 = tpu.matmul %207, %208, %cst_80 {dimension_numbers = #tpu.dot_dimension_numbers<[1], [0], [0], [1], [0, 0, 1, 1], [], []>} : vector<16x8xf32>, vector<8x32xf32>, vector<16x32xf32> -> vector<16x32xf32>
    %210 = arith.addf %190, %209 : vector<16x32xf32>
    %211 = vector.extract_strided_slice %146 {offsets = [0, 0, 24], sizes = [2, 8, 8], strides = [1, 1, 1]} : vector<2x8x32xf32> to vector<2x8x8xf32>
    %212 = vector.extract_strided_slice %147 {offsets = [0, 0, 24], sizes = [2, 16, 8], strides = [1, 1, 1]} : vector<2x16x32xf32> to vector<2x16x8xf32>
    "tpu.trace_start"() <{level = 10 : i32, message = "bqd,bkd->bqk"}> : () -> ()
    %cst_81 = arith.constant dense<0.000000e+00> : vector<2x8x16xf32>
    %213 = tpu.matmul %211, %212, %cst_81 {dimension_numbers = #tpu.dot_dimension_numbers<[2], [2], [1], [1], [0, 0, 0, 1, 1, 1], [0], [0]>} : vector<2x8x8xf32>, vector<2x16x8xf32>, vector<2x8x16xf32> -> vector<2x8x16xf32>
    "tpu.trace_stop"() : () -> ()
    %214 = arith.addf %213, %17 : vector<2x8x16xf32>
    %cst_82 = arith.constant dense<0xFF800000> : vector<2x8xf32>
    %215 = vector.multi_reduction <maximumf>, %214, %cst_82 [2] : vector<2x8x16xf32> to vector<2x8xf32>
    %216 = vector.shape_cast %215 : vector<2x8xf32> to vector<2x8x1xf32>
    %217 = vector.broadcast %216 : vector<2x8x1xf32> to vector<2x8x16xf32>
    %218 = arith.subf %214, %217 : vector<2x8x16xf32>
    %219 = math.exp %218 : vector<2x8x16xf32>
    %cst_83 = arith.constant dense<0.000000e+00> : vector<2x8xf32>
    %220 = vector.multi_reduction <add>, %219, %cst_83 [2] : vector<2x8x16xf32> to vector<2x8xf32>
    %221 = vector.shape_cast %220 : vector<2x8xf32> to vector<2x8x1xf32>
    %222 = tpu.reciprocal %221 {approx = true} : vector<2x8x1xf32> -> vector<2x8x1xf32>
    %223 = vector.broadcast %222 : vector<2x8x1xf32> to vector<2x8x16xf32>
    %224 = arith.mulf %219, %223 : vector<2x8x16xf32>
    %225 = vector.extract_strided_slice %148 {offsets = [0, 0, 24], sizes = [2, 16, 8], strides = [1, 1, 1]} : vector<2x16x32xf32> to vector<2x16x8xf32>
    "tpu.trace_start"() <{level = 10 : i32, message = "bqk,bkd->bqd"}> : () -> ()
    %cst_84 = arith.constant dense<0.000000e+00> : vector<2x8x8xf32>
    %226 = tpu.matmul %224, %225, %cst_84 {dimension_numbers = #tpu.dot_dimension_numbers<[2], [1], [1], [2], [0, 0, 0, 1, 1, 2], [0], [0]>} : vector<2x8x16xf32>, vector<2x16x8xf32>, vector<2x8x8xf32> -> vector<2x8x8xf32>
    "tpu.trace_stop"() : () -> ()
    %227 = vector.shape_cast %226 : vector<2x8x8xf32> to vector<16x8xf32>
    %228 = vector.extract_strided_slice %149 {offsets = [24, 0], sizes = [8, 32], strides = [1, 1]} : vector<32x32xf32> to vector<8x32xf32>
    %cst_85 = arith.constant dense<0.000000e+00> : vector<16x32xf32>
    %229 = tpu.matmul %227, %228, %cst_85 {dimension_numbers = #tpu.dot_dimension_numbers<[1], [0], [0], [1], [0, 0, 1, 1], [], []>} : vector<16x8xf32>, vector<8x32xf32>, vector<16x32xf32> -> vector<16x32xf32>
    %230 = arith.addf %210, %229 : vector<16x32xf32>
    %231 = arith.addf %230, %137 : vector<16x32xf32>
    %cst_86 = arith.constant dense<0.000000e+00> : vector<16xf32>
    %232 = vector.multi_reduction <add>, %231, %cst_86 [1] : vector<16x32xf32> to vector<16xf32>
    %233 = vector.shape_cast %232 : vector<16xf32> to vector<16x1xf32>
    %cst_87 = arith.constant 3.200000e+01 : f32
    %234 = vector.broadcast %cst_87 : f32 to vector<16x1xf32>
    %235 = arith.divf %233, %234 : vector<16x1xf32>
    %236 = vector.broadcast %235 : vector<16x1xf32> to vector<16x32xf32>
    %237 = arith.subf %231, %236 : vector<16x32xf32>
    %238 = vector.broadcast %235 : vector<16x1xf32> to vector<16x32xf32>
    %239 = arith.subf %231, %238 : vector<16x32xf32>
    %240 = arith.mulf %237, %239 : vector<16x32xf32>
    %cst_88 = arith.constant dense<0.000000e+00> : vector<16xf32>
    %241 = vector.multi_reduction <add>, %240, %cst_88 [1] : vector<16x32xf32> to vector<16xf32>
    %242 = vector.shape_cast %241 : vector<16xf32> to vector<16x1xf32>
    %cst_89 = arith.constant 3.200000e+01 : f32
    %243 = vector.broadcast %cst_89 : f32 to vector<16x1xf32>
    %244 = arith.divf %242, %243 : vector<16x1xf32>
    %245 = vector.broadcast %235 : vector<16x1xf32> to vector<16x32xf32>
    %246 = arith.subf %231, %245 : vector<16x32xf32>
    %cst_90 = arith.constant 9.99999974E-6 : f32
    %247 = vector.broadcast %cst_90 : f32 to vector<16x1xf32>
    %248 = arith.addf %244, %247 : vector<16x1xf32>
    %249 = math.rsqrt %248 : vector<16x1xf32>
    %250 = vector.broadcast %249 : vector<16x1xf32> to vector<16x32xf32>
    %251 = arith.mulf %246, %250 : vector<16x32xf32>
    %c0_91 = arith.constant 0 : index
    %c0_92 = arith.constant 0 : index
    %252 = vector.load %arg15[%c0_91, %c0_92] : memref<1x32xf32, #tpu.memory_space<vmem>>, vector<1x32xf32>
    %253 = vector.broadcast %252 : vector<1x32xf32> to vector<16x32xf32>
    %254 = arith.mulf %251, %253 : vector<16x32xf32>
    %c0_93 = arith.constant 0 : index
    %c0_94 = arith.constant 0 : index
    %255 = vector.load %arg16[%c0_93, %c0_94] : memref<1x32xf32, #tpu.memory_space<vmem>>, vector<1x32xf32>
    %256 = vector.broadcast %255 : vector<1x32xf32> to vector<16x32xf32>
    %257 = arith.addf %254, %256 : vector<16x32xf32>
    %c0_95 = arith.constant 0 : index
    %c0_96 = arith.constant 0 : index
    %258 = vector.load %arg17[%c0_95, %c0_96] : memref<32x64xf32, #tpu.memory_space<vmem>>, vector<32x64xf32>
    %cst_97 = arith.constant dense<0.000000e+00> : vector<16x64xf32>
    %259 = tpu.matmul %257, %258, %cst_97 {dimension_numbers = #tpu.dot_dimension_numbers<[1], [0], [0], [1], [0, 0, 1, 1], [], []>} : vector<16x32xf32>, vector<32x64xf32>, vector<16x64xf32> -> vector<16x64xf32>
    %c0_98 = arith.constant 0 : index
    %c0_99 = arith.constant 0 : index
    %260 = vector.load %arg18[%c0_98, %c0_99] : memref<1x64xf32, #tpu.memory_space<vmem>>, vector<1x64xf32>
    %261 = vector.broadcast %260 : vector<1x64xf32> to vector<16x64xf32>
    %262 = arith.addf %259, %261 : vector<16x64xf32>
    %cst_100 = arith.constant 0.000000e+00 : f32
    %263 = vector.broadcast %cst_100 : f32 to vector<16x64xf32>
    %264 = arith.maximumf %262, %263 : vector<16x64xf32>
    %c0_101 = arith.constant 0 : index
    %c0_102 = arith.constant 0 : index
    %265 = vector.load %arg19[%c0_101, %c0_102] : memref<64x32xf32, #tpu.memory_space<vmem>>, vector<64x32xf32>
    %cst_103 = arith.constant dense<0.000000e+00> : vector<16x32xf32>
    %266 = tpu.matmul %264, %265, %cst_103 {dimension_numbers = #tpu.dot_dimension_numbers<[1], [0], [0], [1], [0, 0, 1, 1], [], []>} : vector<16x64xf32>, vector<64x32xf32>, vector<16x32xf32> -> vector<16x32xf32>
    %c0_104 = arith.constant 0 : index
    %c0_105 = arith.constant 0 : index
    %267 = vector.load %arg20[%c0_104, %c0_105] : memref<1x32xf32, #tpu.memory_space<vmem>>, vector<1x32xf32>
    %268 = vector.broadcast %267 : vector<1x32xf32> to vector<16x32xf32>
    %269 = arith.addf %266, %268 : vector<16x32xf32>
    %270 = arith.addf %269, %257 : vector<16x32xf32>
    %cst_106 = arith.constant dense<0.000000e+00> : vector<16xf32>
    %271 = vector.multi_reduction <add>, %270, %cst_106 [1] : vector<16x32xf32> to vector<16xf32>
    %272 = vector.shape_cast %271 : vector<16xf32> to vector<16x1xf32>
    %cst_107 = arith.constant 3.200000e+01 : f32
    %273 = vector.broadcast %cst_107 : f32 to vector<16x1xf32>
    %274 = arith.divf %272, %273 : vector<16x1xf32>
    %275 = vector.broadcast %274 : vector<16x1xf32> to vector<16x32xf32>
    %276 = arith.subf %270, %275 : vector<16x32xf32>
    %277 = vector.broadcast %274 : vector<16x1xf32> to vector<16x32xf32>
    %278 = arith.subf %270, %277 : vector<16x32xf32>
    %279 = arith.mulf %276, %278 : vector<16x32xf32>
    %cst_108 = arith.constant dense<0.000000e+00> : vector<16xf32>
    %280 = vector.multi_reduction <add>, %279, %cst_108 [1] : vector<16x32xf32> to vector<16xf32>
    %281 = vector.shape_cast %280 : vector<16xf32> to vector<16x1xf32>
    %cst_109 = arith.constant 3.200000e+01 : f32
    %282 = vector.broadcast %cst_109 : f32 to vector<16x1xf32>
    %283 = arith.divf %281, %282 : vector<16x1xf32>
    %284 = vector.broadcast %274 : vector<16x1xf32> to vector<16x32xf32>
    %285 = arith.subf %270, %284 : vector<16x32xf32>
    %cst_110 = arith.constant 9.99999974E-6 : f32
    %286 = vector.broadcast %cst_110 : f32 to vector<16x1xf32>
    %287 = arith.addf %283, %286 : vector<16x1xf32>
    %288 = math.rsqrt %287 : vector<16x1xf32>
    %289 = vector.broadcast %288 : vector<16x1xf32> to vector<16x32xf32>
    %290 = arith.mulf %285, %289 : vector<16x32xf32>
    %c0_111 = arith.constant 0 : index
    %c0_112 = arith.constant 0 : index
    %291 = vector.load %arg21[%c0_111, %c0_112] : memref<1x32xf32, #tpu.memory_space<vmem>>, vector<1x32xf32>
    %292 = vector.broadcast %291 : vector<1x32xf32> to vector<16x32xf32>
    %293 = arith.mulf %290, %292 : vector<16x32xf32>
    %c0_113 = arith.constant 0 : index
    %c0_114 = arith.constant 0 : index
    %294 = vector.load %arg22[%c0_113, %c0_114] : memref<1x32xf32, #tpu.memory_space<vmem>>, vector<1x32xf32>
    %295 = vector.broadcast %294 : vector<1x32xf32> to vector<16x32xf32>
    %296 = arith.addf %293, %295 : vector<16x32xf32>
    %c0_115 = arith.constant 0 : index
    %c0_116 = arith.constant 0 : index
    %297 = vector.load %arg23[%c0_115, %c0_116] : memref<16x32xf32, #tpu.memory_space<vmem>>, vector<16x32xf32>
    tpu.vector_store %arg23[%c0_115, %c0_116], %296 {strides = array<i32>} : memref<16x32xf32, #tpu.memory_space<vmem>>, vector<16x32xf32>,
    return
  }
  func.func @transform_0(%arg0: i32) -> (i32, i32) {
    %c0_i32 = arith.constant 0 : i32
    %c0_i32_0 = arith.constant 0 : i32
    return %arg0, %c0_i32 : i32, i32
  }
  func.func @transform_1(%arg0: i32) -> (i32, i32) {
    %c0_i32 = arith.constant 0 : i32
    %c0_i32_0 = arith.constant 0 : i32
    return %arg0, %c0_i32 : i32, i32
  }
  func.func @transform_2(%arg0: i32) -> (i32, i32) {
    %c0_i32 = arith.constant 0 : i32
    %c0_i32_0 = arith.constant 0 : i32
    return %arg0, %c0_i32 : i32, i32
  }
  func.func @transform_3(%arg0: i32) -> (i32, i32, i32) {
    %c0_i32 = arith.constant 0 : i32
    %c0_i32_0 = arith.constant 0 : i32
    %c0_i32_1 = arith.constant 0 : i32
    return %arg0, %c0_i32, %c0_i32_0 : i32, i32, i32
  }
  func.func @transform_4(%arg0: i32) -> (i32, i32) {
    %c0_i32 = arith.constant 0 : i32
    %c0_i32_0 = arith.constant 0 : i32
    %c0_i32_1 = arith.constant 0 : i32
    return %c0_i32, %c0_i32_0 : i32, i32
  }
  func.func @transform_5(%arg0: i32) -> (i32, i32) {
    %c0_i32 = arith.constant 0 : i32
    %c0_i32_0 = arith.constant 0 : i32
    %c0_i32_1 = arith.constant 0 : i32
    return %c0_i32, %c0_i32_0 : i32, i32
  }
  func.func @transform_6(%arg0: i32) -> (i32, i32) {
    %c0_i32 = arith.constant 0 : i32
    %c0_i32_0 = arith.constant 0 : i32
    %c0_i32_1 = arith.constant 0 : i32
    return %c0_i32, %c0_i32_0 : i32, i32
  }
  func.func @transform_7(%arg0: i32) -> (i32, i32) {
    %c0_i32 = arith.constant 0 : i32
    %c0_i32_0 = arith.constant 0 : i32
    %c0_i32_1 = arith.constant 0 : i32
    return %c0_i32, %c0_i32_0 : i32, i32
  }
  func.func @transform_8(%arg0: i32) -> (i32, i32) {
    %c0_i32 = arith.constant 0 : i32
    %c0_i32_0 = arith.constant 0 : i32
    %c0_i32_1 = arith.constant 0 : i32
    return %c0_i32, %c0_i32_0 : i32, i32
  }
  func.func @transform_9(%arg0: i32) -> (i32, i32) {
    %c0_i32 = arith.constant 0 : i32
    %c0_i32_0 = arith.constant 0 : i32
    %c0_i32_1 = arith.constant 0 : i32
    return %c0_i32, %c0_i32_0 : i32, i32
  }
  func.func @transform_10(%arg0: i32) -> (i32, i32) {
    %c0_i32 = arith.constant 0 : i32
    %c0_i32_0 = arith.constant 0 : i32
    %c0_i32_1 = arith.constant 0 : i32
    return %c0_i32, %c0_i32_0 : i32, i32
  }
  func.func @transform_11(%arg0: i32) -> (i32, i32) {
    %c0_i32 = arith.constant 0 : i32
    %c0_i32_0 = arith.constant 0 : i32
    %c0_i32_1 = arith.constant 0 : i32
    return %c0_i32, %c0_i32_0 : i32, i32
  }
  func.func @transform_12(%arg0: i32) -> (i32, i32) {
    %c0_i32 = arith.constant 0 : i32
    %c0_i32_0 = arith.constant 0 : i32
    %c0_i32_1 = arith.constant 0 : i32
    return %c0_i32, %c0_i32_0 : i32, i32
  }
  func.func @transform_13(%arg0: i32) -> (i32, i32) {
    %c0_i32 = arith.constant 0 : i32
    %c0_i32_0 = arith.constant 0 : i32
    %c0_i32_1 = arith.constant 0 : i32
    return %c0_i32, %c0_i32_0 : i32, i32
  }
  func.func @transform_14(%arg0: i32) -> (i32, i32) {
    %c0_i32 = arith.constant 0 : i32
    %c0_i32_0 = arith.constant 0 : i32
    %c0_i32_1 = arith.constant 0 : i32
    return %c0_i32, %c0_i32_0 : i32, i32
  }
  func.func @transform_15(%arg0: i32) -> (i32, i32) {
    %c0_i32 = arith.constant 0 : i32
    %c0_i32_0 = arith.constant 0 : i32
    %c0_i32_1 = arith.constant 0 : i32
    return %c0_i32, %c0_i32_0 : i32, i32
  }
  func.func @transform_16(%arg0: i32) -> (i32, i32) {
    %c0_i32 = arith.constant 0 : i32
    %c0_i32_0 = arith.constant 0 : i32
    %c0_i32_1 = arith.constant 0 : i32
    return %c0_i32, %c0_i32_0 : i32, i32
  }
  func.func @transform_17(%arg0: i32) -> (i32, i32) {
    %c0_i32 = arith.constant 0 : i32
    %c0_i32_0 = arith.constant 0 : i32
    %c0_i32_1 = arith.constant 0 : i32
    return %c0_i32, %c0_i32_0 : i32, i32
  }
  func.func @transform_18(%arg0: i32) -> (i32, i32) {
    %c0_i32 = arith.constant 0 : i32
    %c0_i32_0 = arith.constant 0 : i32
    %c0_i32_1 = arith.constant 0 : i32
    return %c0_i32, %c0_i32_0 : i32, i32
  }
  func.func @transform_19(%arg0: i32) -> (i32, i32) {
    %c0_i32 = arith.constant 0 : i32
    %c0_i32_0 = arith.constant 0 : i32
    %c0_i32_1 = arith.constant 0 : i32
    return %c0_i32, %c0_i32_0 : i32, i32
  }
  func.func @transform_20(%arg0: i32) -> (i32, i32) {
    %c0_i32 = arith.constant 0 : i32
    %c0_i32_0 = arith.constant 0 : i32
    %c0_i32_1 = arith.constant 0 : i32
    return %c0_i32, %c0_i32_0 : i32, i32
  }
  func.func @transform_21(%arg0: i32) -> (i32, i32) {
    %c0_i32 = arith.constant 0 : i32
    %c0_i32_0 = arith.constant 0 : i32
    %c0_i32_1 = arith.constant 0 : i32
    return %c0_i32, %c0_i32_0 : i32, i32
  }
  func.func @transform_22(%arg0: i32) -> (i32, i32) {
    %c0_i32 = arith.constant 0 : i32
    %c0_i32_0 = arith.constant 0 : i32
    return %arg0, %c0_i32 : i32, i32
  }
}

</mosaic_0001>

<llo_original>
// kernel: tpu_custom_call.1
$region0: #{tpu_custom_call.1}
  #allocation0 [shape = 'u32[]', space=smem, size = 0x4, offset = 0x4, fixed_abs, tag = 'smem constant byte address 0x4 - core index']
  #allocation1 [shape = 'u32[144,128]{1,0:T(1,128)}', space=vmem, size = 0x12000, scoped, tag = 'internal scratch']
  %s0 = inlined_call_operand.hbm [shape: f32[16,32], index: 0, kind: input, shape index: {}]
  %s1 = inlined_call_operand.hbm [shape: f32[16,32], index: 1, kind: input, shape index: {}]
  %s2 = inlined_call_operand.vmem [shape: f32[32,32], index: 2, kind: input, shape index: {}]
  %s3 = inlined_call_operand.vmem [shape: s32[2,1,1], index: 3, kind: input, shape index: {}]
  %s4 = inlined_call_operand.vmem [shape: f32[32,32], index: 4, kind: input, shape index: {}]
  %s5 = inlined_call_operand.vmem [shape: f32[32,32], index: 5, kind: input, shape index: {}]
  %s6 = inlined_call_operand.hbm [shape: f32[32,32], index: 6, kind: input, shape index: {}]
  %s7 = inlined_call_operand.hbm [shape: f32[32,32], index: 7, kind: input, shape index: {}]
  %s8 = inlined_call_operand.hbm [shape: f32[1,32], index: 8, kind: input, shape index: {}]
  %s9 = inlined_call_operand.hbm [shape: f32[1,32], index: 9, kind: input, shape index: {}]
  %s10 = inlined_call_operand.vmem [shape: f32[32,32], index: 10, kind: input, shape index: {}]
  %s11 = inlined_call_operand.hbm [shape: f32[32,32], index: 11, kind: input, shape index: {}]
  %s12 = inlined_call_operand.hbm [shape: f32[32,32], index: 12, kind: input, shape index: {}]
  %s13 = inlined_call_operand.hbm [shape: f32[32,32], index: 13, kind: input, shape index: {}]
  %s14 = inlined_call_operand.hbm [shape: f32[1,32], index: 14, kind: input, shape index: {}]
  %s15 = inlined_call_operand.hbm [shape: f32[1,32], index: 15, kind: input, shape index: {}]
  %s16 = inlined_call_operand.hbm [shape: f32[32,64], index: 16, kind: input, shape index: {}]
  %s17 = inlined_call_operand.vmem [shape: f32[1,64], index: 17, kind: input, shape index: {}]
  %s18 = inlined_call_operand.vmem [shape: f32[64,32], index: 18, kind: input, shape index: {}]
  %s19 = inlined_call_operand.vmem [shape: f32[1,32], index: 19, kind: input, shape index: {}]
  %s20 = inlined_call_operand.vmem [shape: f32[1,32], index: 20, kind: input, shape index: {}]
  %s21 = inlined_call_operand.vmem [shape: f32[1,32], index: 21, kind: input, shape index: {}]
  %s22 = inlined_call_operand.hbm [shape: f32[16,32], index: 22, kind: output, shape index: {}]
  %s23 = sld [smem:[#allocation0]]
  $region146: #{tpu_custom_call.1} parent=0
    _
  %s25 = ssub.s32 1, %s23
  %s26 = scalar_select 0, %s25, %s23
  $region1: #{tpu_custom_call.1} parent=0
    #allocation2 [shape = 'u8[8192]{0}', space=vmem, size = 0x2000, scoped, tag = 'input window, operand 0, single buffered']
    #allocation3 [shape = 's32[1]{0}', space=sflag, size = 0x4, scoped, tag = 'scoped memory for tpu_custom_call.1']
    #allocation4 [shape = 's32[1]{0}', space=sflag, size = 0x4, scoped, tag = 'scoped memory for tpu_custom_call.1']
    #allocation5 [shape = 'u8[8192]{0}', space=vmem, size = 0x2000, scoped, tag = 'input window, operand 1, single buffered']
    #allocation6 [shape = 's32[1]{0}', space=sflag, size = 0x4, scoped, tag = 'scoped memory for tpu_custom_call.1']
    #allocation7 [shape = 'u8[16384]{0}', space=vmem, size = 0x4000, scoped, tag = 'input window, operand 6, single buffered']
    #allocation8 [shape = 'u8[16384]{0}', space=vmem, size = 0x4000, scoped, tag = 'input window, operand 7, single buffered']
    #allocation9 [shape = 's32[1]{0}', space=sflag, size = 0x4, scoped, tag = 'scoped memory for tpu_custom_call.1']
    #allocation10 [shape = 'u8[512]{0}', space=vmem, size = 0x400, scoped, tag = 'input window, operand 8, single buffered']
    #allocation11 [shape = 'u8[512]{0}', space=vmem, size = 0x400, scoped, tag = 'input window, operand 9, single buffered']
    #allocation12 [shape = 's32[1]{0}', space=sflag, size = 0x4, scoped, tag = 'scoped memory for tpu_custom_call.1']
    #allocation13 [shape = 'u8[16384]{0}', space=vmem, size = 0x4000, scoped, tag = 'input window, operand 11, single buffered']
    #allocation14 [shape = 'u8[16384]{0}', space=vmem, size = 0x4000, scoped, tag = 'input window, operand 12, single buffered']
    #allocation15 [shape = 's32[1]{0}', space=sflag, size = 0x4, scoped, tag = 'scoped memory for tpu_custom_call.1']
    #allocation16 [shape = 'u8[16384]{0}', space=vmem, size = 0x4000, scoped, tag = 'input window, operand 13, single buffered']
    #allocation17 [shape = 'u8[512]{0}', space=vmem, size = 0x400, scoped, tag = 'input window, operand 14, single buffered']
    #allocation18 [shape = 's32[1]{0}', space=sflag, size = 0x4, scoped, tag = 'scoped memory for tpu_custom_call.1']
    #allocation19 [shape = 'u8[512]{0}', space=vmem, size = 0x400, scoped, tag = 'input window, operand 15, single buffered']
    #allocation20 [shape = 'u8[16384]{0}', space=vmem, size = 0x4000, scoped, tag = 'input window, operand 16, single buffered']
    #allocation21 [shape = 's32[1]{0}', space=sflag, size = 0x4, scoped, tag = 'scoped memory for tpu_custom_call.1']
    #allocation22 [shape = 'u8[8192]{0}', space=vmem, size = 0x2000, scoped, tag = 'output window, operand 0, single buffered']
    %27 = vsyncpa [#allocation3], 0
    %28 = vsyncpa [#allocation6], 0
    %29 = vsyncpa [#allocation9], 0
    %30 = vsyncpa [#allocation12], 0
    %31 = vsyncpa [#allocation15], 0
    %32 = vsyncpa [#allocation18], 0
    %33 = vsyncpa [#allocation21], 0
    %34 = vsyncpa [#allocation4], 0
    // Predicated region
    $region2: #{tpu_custom_call.1} parent=1 // pred_check
      _
    $region3: #{tpu_custom_call.1} parent=1 // pred_check_branch
      %36 = sbr.rel (0) target = $region5
    $region4: #{tpu_custom_call.1} parent=1 // pred_region
      %s38 = ssub.s32 256, 256
      %39 = vsyncadd [#allocation3], %s38
      %s40 = sshll.u32 [#allocation2], 4
      %s41 = int_to_ptr.vmem [resolvable:$true] %s40
      %46 = dma.hbm_to_vmem [thread:$0]  %s0, 256, %s41, [#allocation3], 128, 128, 8
    $region5: #{tpu_custom_call.1} parent=1 // pred_fallthru
      _
    // Predicated region
    $region6: #{tpu_custom_call.1} parent=1 // pred_check
      _
    $region7: #{tpu_custom_call.1} parent=1 // pred_check_branch
      %48 = sbr.rel (0) target = $region9
    $region8: #{tpu_custom_call.1} parent=1 // pred_region
      %s50 = ssub.s32 256, 256
      %51 = vsyncadd [#allocation6], %s50
      %s52 = sshll.u32 [#allocation5], 4
      %s53 = int_to_ptr.vmem [resolvable:$true] %s52
      %58 = dma.hbm_to_vmem [thread:$0]  %s1, 256, %s53, [#allocation6], 128, 128, 8
    $region9: #{tpu_custom_call.1} parent=1 // pred_fallthru
      _
    // Predicated region
    $region10: #{tpu_custom_call.1} parent=1 // pred_check
      _
    $region11: #{tpu_custom_call.1} parent=1 // pred_check_branch
      %60 = sbr.rel (0) target = $region13
    $region12: #{tpu_custom_call.1} parent=1 // pred_region
      _
    $region13: #{tpu_custom_call.1} parent=1 // pred_fallthru
      _
    // Predicated region
    $region14: #{tpu_custom_call.1} parent=1 // pred_check
      _
    $region15: #{tpu_custom_call.1} parent=1 // pred_check_branch
      %62 = sbr.rel (0) target = $region17
    $region16: #{tpu_custom_call.1} parent=1 // pred_region
      _
    $region17: #{tpu_custom_call.1} parent=1 // pred_fallthru
      _
    // Predicated region
    $region18: #{tpu_custom_call.1} parent=1 // pred_check
      _
    $region19: #{tpu_custom_call.1} parent=1 // pred_check_branch
      %64 = sbr.rel (0) target = $region21
    $region20: #{tpu_custom_call.1} parent=1 // pred_region
      _
    $region21: #{tpu_custom_call.1} parent=1 // pred_fallthru
      _
    // Predicated region
    $region22: #{tpu_custom_call.1} parent=1 // pred_check
      _
    $region23: #{tpu_custom_call.1} parent=1 // pred_check_branch
      %66 = sbr.rel (0) target = $region25
    $region24: #{tpu_custom_call.1} parent=1 // pred_region
      _
    $region25: #{tpu_custom_call.1} parent=1 // pred_fallthru
      _
    // Predicated region
    $region26: #{tpu_custom_call.1} parent=1 // pred_check
      _
    $region27: #{tpu_custom_call.1} parent=1 // pred_check_branch
      %68 = sbr.rel (0) target = $region29
    $region28: #{tpu_custom_call.1} parent=1 // pred_region
      %s70 = ssub.s32 512, 512
      %71 = vsyncadd [#allocation6], %s70
      %s72 = sshll.u32 [#allocation7], 4
      %s73 = int_to_ptr.vmem [resolvable:$true] %s72
      %78 = dma.hbm_to_vmem [thread:$0]  %s6, 512, %s73, [#allocation6], 128, 128, 8
    $region29: #{tpu_custom_call.1} parent=1 // pred_fallthru
      _
    // Predicated region
    $region30: #{tpu_custom_call.1} parent=1 // pred_check
      _
    $region31: #{tpu_custom_call.1} parent=1 // pred_check_branch
      %80 = sbr.rel (0) target = $region33
    $region32: #{tpu_custom_call.1} parent=1 // pred_region
      %s82 = ssub.s32 512, 512
      %83 = vsyncadd [#allocation9], %s82
      %s84 = sshll.u32 [#allocation8], 4
      %s85 = int_to_ptr.vmem [resolvable:$true] %s84
      %90 = dma.hbm_to_vmem [thread:$0]  %s7, 512, %s85, [#allocation9], 128, 128, 8
    $region33: #{tpu_custom_call.1} parent=1 // pred_fallthru
      _
    // Predicated region
    $region34: #{tpu_custom_call.1} parent=1 // pred_check
      _
    $region35: #{tpu_custom_call.1} parent=1 // pred_check_branch
      %92 = sbr.rel (0) target = $region37
    $region36: #{tpu_custom_call.1} parent=1 // pred_region
      %s94 = ssub.s32 16, 16
      %95 = vsyncadd [#allocation9], %s94
      %s97 = sshll.u32 [#allocation10], 4
      %s98 = int_to_ptr.vmem [resolvable:$true] %s97
      %100 = dma.hbm_to_vmem [thread:$0]  %s8, 16, %s98, [#allocation9]
    $region37: #{tpu_custom_call.1} parent=1 // pred_fallthru
      _
    // Predicated region
    $region38: #{tpu_custom_call.1} parent=1 // pred_check
      _
    $region39: #{tpu_custom_call.1} parent=1 // pred_check_branch
      %102 = sbr.rel (0) target = $region41
    $region40: #{tpu_custom_call.1} parent=1 // pred_region
      %s104 = ssub.s32 16, 16
      %105 = vsyncadd [#allocation12], %s104
      %s107 = sshll.u32 [#allocation11], 4
      %s108 = int_to_ptr.vmem [resolvable:$true] %s107
      %110 = dma.hbm_to_vmem [thread:$0]  %s9, 16, %s108, [#allocation12]
    $region41: #{tpu_custom_call.1} parent=1 // pred_fallthru
      _
    // Predicated region
    $region42: #{tpu_custom_call.1} parent=1 // pred_check
      _
    $region43: #{tpu_custom_call.1} parent=1 // pred_check_branch
      %112 = sbr.rel (0) target = $region45
    $region44: #{tpu_custom_call.1} parent=1 // pred_region
      _
    $region45: #{tpu_custom_call.1} parent=1 // pred_fallthru
      _
    // Predicated region
    $region46: #{tpu_custom_call.1} parent=1 // pred_check
      _
    $region47: #{tpu_custom_call.1} parent=1 // pred_check_branch
      %114 = sbr.rel (0) target = $region49
    $region48: #{tpu_custom_call.1} parent=1 // pred_region
      %s116 = ssub.s32 512, 512
      %117 = vsyncadd [#allocation12], %s116
      %s118 = sshll.u32 [#allocation13], 4
      %s119 = int_to_ptr.vmem [resolvable:$true] %s118
      %124 = dma.hbm_to_vmem [thread:$0]  %s11, 512, %s119, [#allocation12], 128, 128, 8
    $region49: #{tpu_custom_call.1} parent=1 // pred_fallthru
      _
    // Predicated region
    $region50: #{tpu_custom_call.1} parent=1 // pred_check
      _
    $region51: #{tpu_custom_call.1} parent=1 // pred_check_branch
      %126 = sbr.rel (0) target = $region53
    $region52: #{tpu_custom_call.1} parent=1 // pred_region
      %s128 = ssub.s32 512, 512
      %129 = vsyncadd [#allocation15], %s128
      %s130 = sshll.u32 [#allocation14], 4
      %s131 = int_to_ptr.vmem [resolvable:$true] %s130
      %136 = dma.hbm_to_vmem [thread:$0]  %s12, 512, %s131, [#allocation15], 128, 128, 8
    $region53: #{tpu_custom_call.1} parent=1 // pred_fallthru
      _
    // Predicated region
    $region54: #{tpu_custom_call.1} parent=1 // pred_check
      _
    $region55: #{tpu_custom_call.1} parent=1 // pred_check_branch
      %138 = sbr.rel (0) target = $region57
    $region56: #{tpu_custom_call.1} parent=1 // pred_region
      %s140 = ssub.s32 512, 512
      %141 = vsyncadd [#allocation15], %s140
      %s142 = sshll.u32 [#allocation16], 4
      %s143 = int_to_ptr.vmem [resolvable:$true] %s142
      %148 = dma.hbm_to_vmem [thread:$0]  %s13, 512, %s143, [#allocation15], 128, 128, 8
    $region57: #{tpu_custom_call.1} parent=1 // pred_fallthru
      _
    // Predicated region
    $region58: #{tpu_custom_call.1} parent=1 // pred_check
      _
    $region59: #{tpu_custom_call.1} parent=1 // pred_check_branch
      %150 = sbr.rel (0) target = $region61
    $region60: #{tpu_custom_call.1} parent=1 // pred_region
      %s152 = ssub.s32 16, 16
      %153 = vsyncadd [#allocation18], %s152
      %s155 = sshll.u32 [#allocation17], 4
      %s156 = int_to_ptr.vmem [resolvable:$true] %s155
      %158 = dma.hbm_to_vmem [thread:$0]  %s14, 16, %s156, [#allocation18]
    $region61: #{tpu_custom_call.1} parent=1 // pred_fallthru
      _
    // Predicated region
    $region62: #{tpu_custom_call.1} parent=1 // pred_check
      _
    $region63: #{tpu_custom_call.1} parent=1 // pred_check_branch
      %160 = sbr.rel (0) target = $region65
    $region64: #{tpu_custom_call.1} parent=1 // pred_region
      %s162 = ssub.s32 16, 16
      %163 = vsyncadd [#allocation18], %s162
      %s165 = sshll.u32 [#allocation19], 4
      %s166 = int_to_ptr.vmem [resolvable:$true] %s165
      %168 = dma.hbm_to_vmem [thread:$0]  %s15, 16, %s166, [#allocation18]
    $region65: #{tpu_custom_call.1} parent=1 // pred_fallthru
      _
    // Predicated region
    $region66: #{tpu_custom_call.1} parent=1 // pred_check
      _
    $region67: #{tpu_custom_call.1} parent=1 // pred_check_branch
      %170 = sbr.rel (0) target = $region69
    $region68: #{tpu_custom_call.1} parent=1 // pred_region
      %s172 = ssub.s32 512, 512
      %173 = vsyncadd [#allocation21], %s172
      %s174 = sshll.u32 [#allocation20], 4
      %s175 = int_to_ptr.vmem [resolvable:$true] %s174
      %180 = dma.hbm_to_vmem [thread:$0]  %s16, 512, %s175, [#allocation21], 128, 128, 8
    $region69: #{tpu_custom_call.1} parent=1 // pred_fallthru
      _
    // Predicated region
    $region70: #{tpu_custom_call.1} parent=1 // pred_check
      _
    $region71: #{tpu_custom_call.1} parent=1 // pred_check_branch
      %182 = sbr.rel (0) target = $region73
    $region72: #{tpu_custom_call.1} parent=1 // pred_region
      _
    $region73: #{tpu_custom_call.1} parent=1 // pred_fallthru
      _
    // Predicated region
    $region74: #{tpu_custom_call.1} parent=1 // pred_check
      _
    $region75: #{tpu_custom_call.1} parent=1 // pred_check_branch
      %184 = sbr.rel (0) target = $region77
    $region76: #{tpu_custom_call.1} parent=1 // pred_region
      _
    $region77: #{tpu_custom_call.1} parent=1 // pred_fallthru
      _
    // Predicated region
    $region78: #{tpu_custom_call.1} parent=1 // pred_check
      _
    $region79: #{tpu_custom_call.1} parent=1 // pred_check_branch
      %186 = sbr.rel (0) target = $region81
    $region80: #{tpu_custom_call.1} parent=1 // pred_region
      _
    $region81: #{tpu_custom_call.1} parent=1 // pred_fallthru
      _
    // Predicated region
    $region82: #{tpu_custom_call.1} parent=1 // pred_check
      _
    $region83: #{tpu_custom_call.1} parent=1 // pred_check_branch
      %188 = sbr.rel (0) target = $region85
    $region84: #{tpu_custom_call.1} parent=1 // pred_region
      _
    $region85: #{tpu_custom_call.1} parent=1 // pred_fallthru
      _
    // Predicated region
    $region86: #{tpu_custom_call.1} parent=1 // pred_check
      _
    $region87: #{tpu_custom_call.1} parent=1 // pred_check_branch
      %190 = sbr.rel (0) target = $region89
    $region88: #{tpu_custom_call.1} parent=1 // pred_region
      _
    $region89: #{tpu_custom_call.1} parent=1 // pred_fallthru
      _
    // Predicated region
    $region90: #{tpu_custom_call.1} parent=1 // pred_check
      _
    $region91: #{tpu_custom_call.1} parent=1 // pred_check_branch
      %192 = sbr.rel (0) target = $region93
    $region92: #{tpu_custom_call.1} parent=1 // pred_region
      %193 = dma.done [#allocation3], 256
    $region93: #{tpu_custom_call.1} parent=1 // pred_fallthru
      _
    // Predicated region
    $region94: #{tpu_custom_call.1} parent=1 // pred_check
      _
    $region95: #{tpu_custom_call.1} parent=1 // pred_check_branch
      %195 = sbr.rel (0) target = $region97
    $region96: #{tpu_custom_call.1} parent=1 // pred_region
      %196 = dma.done [#allocation6], 256
    $region97: #{tpu_custom_call.1} parent=1 // pred_fallthru
      _
    // Predicated region
    $region98: #{tpu_custom_call.1} parent=1 // pred_check
      _
    $region99: #{tpu_custom_call.1} parent=1 // pred_check_branch
      %198 = sbr.rel (0) target = $region101
    $region100: #{tpu_custom_call.1} parent=1 // pred_region
      %199 = dma.done [#allocation6], 512
    $region101: #{tpu_custom_call.1} parent=1 // pred_fallthru
      _
    // Predicated region
    $region102: #{tpu_custom_call.1} parent=1 // pred_check
      _
    $region103: #{tpu_custom_call.1} parent=1 // pred_check_branch
      %201 = sbr.rel (0) target = $region105
    $region104: #{tpu_custom_call.1} parent=1 // pred_region
      %202 = dma.done [#allocation9], 512
    $region105: #{tpu_custom_call.1} parent=1 // pred_fallthru
      _
    // Predicated region
    $region106: #{tpu_custom_call.1} parent=1 // pred_check
      _
    $region107: #{tpu_custom_call.1} parent=1 // pred_check_branch
      %204 = sbr.rel (0) target = $region109
    $region108: #{tpu_custom_call.1} parent=1 // pred_region
      %205 = dma.done [#allocation9], 16
    $region109: #{tpu_custom_call.1} parent=1 // pred_fallthru
      _
    // Predicated region
    $region110: #{tpu_custom_call.1} parent=1 // pred_check
      _
    $region111: #{tpu_custom_call.1} parent=1 // pred_check_branch
      %207 = sbr.rel (0) target = $region113
    $region112: #{tpu_custom_call.1} parent=1 // pred_region
      %208 = dma.done [#allocation12], 16
    $region113: #{tpu_custom_call.1} parent=1 // pred_fallthru
      _
    // Predicated region
    $region114: #{tpu_custom_call.1} parent=1 // pred_check
      _
    $region115: #{tpu_custom_call.1} parent=1 // pred_check_branch
      %210 = sbr.rel (0) target = $region117
    $region116: #{tpu_custom_call.1} parent=1 // pred_region
      %211 = dma.done [#allocation12], 512
    $region117: #{tpu_custom_call.1} parent=1 // pred_fallthru
      _
    // Predicated region
    $region118: #{tpu_custom_call.1} parent=1 // pred_check
      _
    $region119: #{tpu_custom_call.1} parent=1 // pred_check_branch
      %213 = sbr.rel (0) target = $region121
    $region120: #{tpu_custom_call.1} parent=1 // pred_region
      %214 = dma.done [#allocation15], 512
    $region121: #{tpu_custom_call.1} parent=1 // pred_fallthru
      _
    // Predicated region
    $region122: #{tpu_custom_call.1} parent=1 // pred_check
      _
    $region123: #{tpu_custom_call.1} parent=1 // pred_check_branch
      %216 = sbr.rel (0) target = $region125
    $region124: #{tpu_custom_call.1} parent=1 // pred_region
      %217 = dma.done [#allocation15], 512
    $region125: #{tpu_custom_call.1} parent=1 // pred_fallthru
      _
    // Predicated region
    $region126: #{tpu_custom_call.1} parent=1 // pred_check
      _
    $region127: #{tpu_custom_call.1} parent=1 // pred_check_branch
      %219 = sbr.rel (0) target = $region129
    $region128: #{tpu_custom_call.1} parent=1 // pred_region
      %220 = dma.done [#allocation18], 16
    $region129: #{tpu_custom_call.1} parent=1 // pred_fallthru
      _
    // Predicated region
    $region130: #{tpu_custom_call.1} parent=1 // pred_check
      _
    $region131: #{tpu_custom_call.1} parent=1 // pred_check_branch
      %222 = sbr.rel (0) target = $region133
    $region132: #{tpu_custom_call.1} parent=1 // pred_region
      %223 = dma.done [#allocation18], 16
    $region133: #{tpu_custom_call.1} parent=1 // pred_fallthru
      _
    // Predicated region
    $region134: #{tpu_custom_call.1} parent=1 // pred_check
      _
    $region135: #{tpu_custom_call.1} parent=1 // pred_check_branch
      %225 = sbr.rel (0) target = $region137
    $region136: #{tpu_custom_call.1} parent=1 // pred_region
      %226 = dma.done [#allocation21], 512
    $region137: #{tpu_custom_call.1} parent=1 // pred_fallthru
      _
    %v227 = vld [vmem:[#allocation2] sm:$0xff]
    %v228 = vld [vmem:[#allocation2 + $0x8] sm:$0xff]
    %v229 = vld [vmem:[#allocation5] sm:$0xff]
    %v230 = vld [vmem:[#allocation5 + $0x8] sm:$0xff]
    %v231 = vld [vmem:[%s2] sm:$0xff]
    %v232 = vld [vmem:[%s2 + $0x8] sm:$0xff]
    %v233 = vld [vmem:[%s2 + $0x10] sm:$0xff]
    %v234 = vld [vmem:[%s2 + $0x18] sm:$0xff]
    %v235 = vlaneseq
    %v236 = vshrl.u32 %v235, 7
    %v237 = vlaneseq
    %v238 = vand.u32 %v237, 127
    %vm239 = vcmp.le.s32.totalorder %v238, %v236
    %v240 = vsel %vm239, 0.0, -1000000.0
    %v241 = vld [vmem:[%s3] sm:$0x1]
    %v242 = vld [vmem:[%s3 + $0x1] sm:$0x1]
    %v243 = vlaneseq
    %v244 = vshrl.u32 %v243, 7
    %v245 = vsub.s32 0, %v244
    %v246 = vrot.slane %v241, %v245
    %v247 = vlaneseq
    %v248 = vshrl.u32 %v247, 7
    %v249 = vsub.s32 0, %v248
    %v250 = vrot.slane %v242, %v249
    %251 = vset.pattern.permute.xlu0 0
    %252 = vperm.xlu0 %251, %v246
    %v253 = vpop.permute.xlu0 %252
    %254 = vset.pattern.permute.xlu0 0
    %255 = vperm.xlu0 %254, %v250
    %v256 = vpop.permute.xlu0 %255
    %vm257 = vcmp.lt.s32.totalorder %v238, %v253
    %vm258 = vcmp.lt.s32.totalorder %v238, %v256
    %v259 = vsel %vm257, 0.0, -1000000.0
    %v260 = vsel %vm258, 0.0, -1000000.0
    %v261 = vld [vmem:[%s4] sm:$0xff]
    %v262 = vld [vmem:[%s4 + $0x8] sm:$0xff]
    %v263 = vld [vmem:[%s4 + $0x10] sm:$0xff]
    %v264 = vld [vmem:[%s4 + $0x18] sm:$0xff]
    %vm265 = vcmask 261120
    %v267 = vsel %vm265, %v227, 0
    %v270 = vsel %vm265, %v228, 0
    %272 = vmatprep.subr.mxu0 0.0
    %273 = vmatpush1.msra.mxu0 %v261
    %274 = vmatprep.subr.mxu0 0.0
    %275 = vmatpush1.msra.mxu0 %v262
    %276 = vmatprep.subr.mxu0 0.0
    %277 = vmatpush1.msra.mxu0 %v263
    %278 = vmatprep.subr.mxu0 0.0
    %279 = vmatpush1.msra.mxu0 %v264
    %280 = vmatprep.subr.mxu0 0.0
    %281 = vmatpush1.msra.mxu0 0.0
    %282 = vmatprep.subr.mxu0 0.0
    %283 = vmatpush1.msra.mxu0 0.0
    %284 = vmatprep.subr.mxu0 0.0
    %285 = vmatpush1.msra.mxu0 0.0
    %286 = vmatprep.subr.mxu0 0.0
    %287 = vmatpush1.msra.mxu0 0.0
    %288 = vmatprep.subr.mxu0 0.0
    %289 = vmatpush1.msra.mxu0 0.0
    %290 = vmatprep.subr.mxu0 0.0
    %291 = vmatpush1.msra.mxu0 0.0
    %292 = vmatprep.subr.mxu0 0.0
    %293 = vmatpush1.msra.mxu0 0.0
    %294 = vmatprep.subr.mxu0 0.0
    %295 = vmatpush1.msra.mxu0 0.0
    %296 = vmatprep.subr.mxu0 0.0
    %297 = vmatpush1.msra.mxu0 0.0
    %298 = vmatprep.subr.mxu0 0.0
    %299 = vmatpush1.msra.mxu0 0.0
    %300 = vmatprep.subr.mxu0 0.0
    %301 = vmatpush1.msra.mxu0 0.0
    %302 = vmatprep.subr.mxu0 0.0
    %303 = vmatpush1.msra.mxu0 0.0
    %304 = vmatprep.subr.mxu0 0.0
    %305 = vmatpush1.msra.mxu0 0.0
    %306 = vmatprep.subr.mxu0 0.0
    %307 = vmatpush1.msra.mxu0 0.0
    %308 = vmatprep.subr.mxu0 0.0
    %309 = vmatpush1.msra.mxu0 0.0
    %310 = vmatprep.subr.mxu0 0.0
    %311 = vmatpush1.msra.mxu0 0.0
    %312 = vmatprep.subr.mxu0 0.0
    %313 = vmatpush1.msra.mxu0 0.0
    %314 = vmatprep.subr.mxu0 0.0
    %315 = vmatpush1.msra.mxu0 0.0
    %316 = vmatprep.subr.mxu0 0.0
    %317 = vmatpush1.msra.mxu0 0.0
    %318 = vmatprep.subr.mxu0 0.0
    %319 = vmatpush1.msra.mxu0 0.0
    %320 = vmatprep.subr.mxu0 0.0
    %321 = vmatpush1.msra.mxu0 0.0
    %322 = vmatprep.subr.mxu0 0.0
    %323 = vmatpush1.msra.mxu0 0.0
    %324 = vmatprep.subr.mxu0 0.0
    %325 = vmatpush1.msra.mxu0 0.0
    %326 = vmatprep.subr.mxu0 0.0
    %327 = vmatpush1.msra.mxu0 0.0
    %328 = vmatprep.subr.mxu0 0.0
    %329 = vmatpush1.msra.mxu0 0.0
    %330 = vmatprep.subr.mxu0 0.0
    %331 = vmatpush1.msra.mxu0 0.0
    %332 = vmatprep.subr.mxu0 0.0
    %333 = vmatpush1.msra.mxu0 0.0
    %334 = vmatprep.subr.mxu0 0.0
    %335 = vmatpush1.msra.mxu0 0.0
    %336 = vmatprep.mubr.f32.mxu0 0.0
    %337 = vmatmul.mubr.f32.gmra.mrb[0].mxu0 %v267
    %v338 = vpop.f32.mrb[0].mxu0
    %v339 = vadd.f32 0.0, %v338
    %v340 = vpop.f32.mrb[0].mxu0
    %341 = vmatprep.mubr.f32.mxu0 0.0
    %342 = vmatmul.mubr.f32.gmra.mrb[0].mxu0 %v270
    %v343 = vpop.f32.mrb[0].mxu0
    %v344 = vadd.f32 0.0, %v343
    %v345 = vpop.f32.mrb[0].mxu0
    %346 = vdwg.mxu0
    %v347 = vmul.f32 %v339, 0.35355338
    %v348 = vmul.f32 %v344, 0.35355338
    %v349 = vld [vmem:[%s5] sm:$0xff]
    %v350 = vld [vmem:[%s5 + $0x8] sm:$0xff]
    %v351 = vld [vmem:[%s5 + $0x10] sm:$0xff]
    %v352 = vld [vmem:[%s5 + $0x18] sm:$0xff]
    %v354 = vsel %vm265, %v229, 0
    %v357 = vsel %vm265, %v230, 0
    %359 = vmatprep.subr.mxu0 0.0
    %360 = vmatpush1.msra.mxu0 %v349
    %361 = vmatprep.subr.mxu0 0.0
    %362 = vmatpush1.msra.mxu0 %v350
    %363 = vmatprep.subr.mxu0 0.0
    %364 = vmatpush1.msra.mxu0 %v351
    %365 = vmatprep.subr.mxu0 0.0
    %366 = vmatpush1.msra.mxu0 %v352
    %367 = vmatprep.subr.mxu0 0.0
    %368 = vmatpush1.msra.mxu0 0.0
    %369 = vmatprep.subr.mxu0 0.0
    %370 = vmatpush1.msra.mxu0 0.0
    %371 = vmatprep.subr.mxu0 0.0
    %372 = vmatpush1.msra.mxu0 0.0
    %373 = vmatprep.subr.mxu0 0.0
    %374 = vmatpush1.msra.mxu0 0.0
    %375 = vmatprep.subr.mxu0 0.0
    %376 = vmatpush1.msra.mxu0 0.0
    %377 = vmatprep.subr.mxu0 0.0
    %378 = vmatpush1.msra.mxu0 0.0
    %379 = vmatprep.subr.mxu0 0.0
    %380 = vmatpush1.msra.mxu0 0.0
    %381 = vmatprep.subr.mxu0 0.0
    %382 = vmatpush1.msra.mxu0 0.0
    %383 = vmatprep.subr.mxu0 0.0
    %384 = vmatpush1.msra.mxu0 0.0
    %385 = vmatprep.subr.mxu0 0.0
    %386 = vmatpush1.msra.mxu0 0.0
    %387 = vmatprep.subr.mxu0 0.0
    %388 = vmatpush1.msra.mxu0 0.0
    %389 = vmatprep.subr.mxu0 0.0
    %390 = vmatpush1.msra.mxu0 0.0
    %391 = vmatprep.subr.mxu0 0.0
    %392 = vmatpush1.msra.mxu0 0.0
    %393 = vmatprep.subr.mxu0 0.0
    %394 = vmatpush1.msra.mxu0 0.0
    %395 = vmatprep.subr.mxu0 0.0
    %396 = vmatpush1.msra.mxu0 0.0
    %397 = vmatprep.subr.mxu0 0.0
    %398 = vmatpush1.msra.mxu0 0.0
    %399 = vmatprep.subr.mxu0 0.0
    %400 = vmatpush1.msra.mxu0 0.0
    %401 = vmatprep.subr.mxu0 0.0
    %402 = vmatpush1.msra.mxu0 0.0
    %403 = vmatprep.subr.mxu0 0.0
    %404 = vmatpush1.msra.mxu0 0.0
    %405 = vmatprep.subr.mxu0 0.0
    %406 = vmatpush1.msra.mxu0 0.0
    %407 = vmatprep.subr.mxu0 0.0
    %408 = vmatpush1.msra.mxu0 0.0
    %409 = vmatprep.subr.mxu0 0.0
    %410 = vmatpush1.msra.mxu0 0.0
    %411 = vmatprep.subr.mxu0 0.0
    %412 = vmatpush1.msra.mxu0 0.0
    %413 = vmatprep.subr.mxu0 0.0
    %414 = vmatpush1.msra.mxu0 0.0
    %415 = vmatprep.subr.mxu0 0.0
    %416 = vmatpush1.msra.mxu0 0.0
    %417 = vmatprep.subr.mxu0 0.0
    %418 = vmatpush1.msra.mxu0 0.0
    %419 = vmatprep.subr.mxu0 0.0
    %420 = vmatpush1.msra.mxu0 0.0
    %421 = vmatprep.subr.mxu0 0.0
    %422 = vmatpush1.msra.mxu0 0.0
    %423 = vmatprep.mubr.f32.mxu0 0.0
    %424 = vmatmul.mubr.f32.gmra.mrb[0].mxu0 %v354
    %v425 = vpop.f32.mrb[0].mxu0
    %v426 = vadd.f32 0.0, %v425
    %v427 = vpop.f32.mrb[0].mxu0
    %428 = vmatprep.mubr.f32.mxu0 0.0
    %429 = vmatmul.mubr.f32.gmra.mrb[0].mxu0 %v357
    %v430 = vpop.f32.mrb[0].mxu0
    %v431 = vadd.f32 0.0, %v430
    %v432 = vpop.f32.mrb[0].mxu0
    %433 = vdwg.mxu0
    %v434 = vld [vmem:[#allocation7] sm:$0xff]
    %v435 = vld [vmem:[#allocation7 + $0x8] sm:$0xff]
    %v436 = vld [vmem:[#allocation7 + $0x10] sm:$0xff]
    %v437 = vld [vmem:[#allocation7 + $0x18] sm:$0xff]
    %438 = vmatprep.subr.mxu0 0.0
    %439 = vmatpush1.msra.mxu0 %v434
    %440 = vmatprep.subr.mxu0 0.0
    %441 = vmatpush1.msra.mxu0 %v435
    %442 = vmatprep.subr.mxu0 0.0
    %443 = vmatpush1.msra.mxu0 %v436
    %444 = vmatprep.subr.mxu0 0.0
    %445 = vmatpush1.msra.mxu0 %v437
    %446 = vmatprep.subr.mxu0 0.0
    %447 = vmatpush1.msra.mxu0 0.0
    %448 = vmatprep.subr.mxu0 0.0
    %449 = vmatpush1.msra.mxu0 0.0
    %450 = vmatprep.subr.mxu0 0.0
    %451 = vmatpush1.msra.mxu0 0.0
    %452 = vmatprep.subr.mxu0 0.0
    %453 = vmatpush1.msra.mxu0 0.0
    %454 = vmatprep.subr.mxu0 0.0
    %455 = vmatpush1.msra.mxu0 0.0
    %456 = vmatprep.subr.mxu0 0.0
    %457 = vmatpush1.msra.mxu0 0.0
    %458 = vmatprep.subr.mxu0 0.0
    %459 = vmatpush1.msra.mxu0 0.0
    %460 = vmatprep.subr.mxu0 0.0
    %461 = vmatpush1.msra.mxu0 0.0
    %462 = vmatprep.subr.mxu0 0.0
    %463 = vmatpush1.msra.mxu0 0.0
    %464 = vmatprep.subr.mxu0 0.0
    %465 = vmatpush1.msra.mxu0 0.0
    %466 = vmatprep.subr.mxu0 0.0
    %467 = vmatpush1.msra.mxu0 0.0
    %468 = vmatprep.subr.mxu0 0.0
    %469 = vmatpush1.msra.mxu0 0.0
    %470 = vmatprep.subr.mxu0 0.0
    %471 = vmatpush1.msra.mxu0 0.0
    %472 = vmatprep.subr.mxu0 0.0
    %473 = vmatpush1.msra.mxu0 0.0
    %474 = vmatprep.subr.mxu0 0.0
    %475 = vmatpush1.msra.mxu0 0.0
    %476 = vmatprep.subr.mxu0 0.0
    %477 = vmatpush1.msra.mxu0 0.0
    %478 = vmatprep.subr.mxu0 0.0
    %479 = vmatpush1.msra.mxu0 0.0
    %480 = vmatprep.subr.mxu0 0.0
    %481 = vmatpush1.msra.mxu0 0.0
    %482 = vmatprep.subr.mxu0 0.0
    %483 = vmatpush1.msra.mxu0 0.0
    %484 = vmatprep.subr.mxu0 0.0
    %485 = vmatpush1.msra.mxu0 0.0
    %486 = vmatprep.subr.mxu0 0.0
    %487 = vmatpush1.msra.mxu0 0.0
    %488 = vmatprep.subr.mxu0 0.0
    %489 = vmatpush1.msra.mxu0 0.0
    %490 = vmatprep.subr.mxu0 0.0
    %491 = vmatpush1.msra.mxu0 0.0
    %492 = vmatprep.subr.mxu0 0.0
    %493 = vmatpush1.msra.mxu0 0.0
    %494 = vmatprep.subr.mxu0 0.0
    %495 = vmatpush1.msra.mxu0 0.0
    %496 = vmatprep.subr.mxu0 0.0
    %497 = vmatpush1.msra.mxu0 0.0
    %498 = vmatprep.subr.mxu0 0.0
    %499 = vmatpush1.msra.mxu0 0.0
    %500 = vmatprep.subr.mxu0 0.0
    %501 = vmatpush1.msra.mxu0 0.0
    %502 = vmatprep.mubr.f32.mxu0 0.0
    %503 = vmatmul.mubr.f32.gmra.mrb[0].mxu0 %v354
    %v504 = vpop.f32.mrb[0].mxu0
    %v505 = vadd.f32 0.0, %v504
    %v506 = vpop.f32.mrb[0].mxu0
    %507 = vmatprep.mubr.f32.mxu0 0.0
    %508 = vmatmul.mubr.f32.gmra.mrb[0].mxu0 %v357
    %v509 = vpop.f32.mrb[0].mxu0
    %v510 = vadd.f32 0.0, %v509
    %v511 = vpop.f32.mrb[0].mxu0
    %512 = vdwg.mxu0
    %v513 = vld [vmem:[#allocation8] sm:$0xff]
    %v514 = vld [vmem:[#allocation8 + $0x8] sm:$0xff]
    %v515 = vld [vmem:[#allocation8 + $0x10] sm:$0xff]
    %v516 = vld [vmem:[#allocation8 + $0x18] sm:$0xff]
    %vm517 = vcmask 64512
    %v519 = vsel %vm517, %v347, 0
    %v522 = vsel %vm517, %v426, 0
    %524 = vmatprep.subr.mxu0 0.0
    %525 = vmatpush1.xpose.msra.mxu0 %v522
    %526 = vmatprep.subr.mxu0 0.0
    %527 = vmatpush1.xpose.msra.mxu0 0.0
    %528 = vmatprep.subr.mxu0 0.0
    %529 = vmatpush1.xpose.msra.mxu0 0.0
    %530 = vmatprep.subr.mxu0 0.0
    %531 = vmatpush1.xpose.msra.mxu0 0.0
    %532 = vmatprep.subr.mxu0 0.0
    %533 = vmatpush1.xpose.msra.mxu0 0.0
    %534 = vmatprep.subr.mxu0 0.0
    %535 = vmatpush1.xpose.msra.mxu0 0.0
    %536 = vmatprep.subr.mxu0 0.0
    %537 = vmatpush1.xpose.msra.mxu0 0.0
    %538 = vmatprep.subr.mxu0 0.0
    %539 = vmatpush1.xpose.msra.mxu0 0.0
    %540 = vmatprep.subr.mxu0 0.0
    %541 = vmatpush1.xpose.msra.mxu0 0.0
    %542 = vmatprep.subr.mxu0 0.0
    %543 = vmatpush1.xpose.msra.mxu0 0.0
    %544 = vmatprep.subr.mxu0 0.0
    %545 = vmatpush1.xpose.msra.mxu0 0.0
    %546 = vmatprep.subr.mxu0 0.0
    %547 = vmatpush1.xpose.msra.mxu0 0.0
    %548 = vmatprep.subr.mxu0 0.0
    %549 = vmatpush1.xpose.msra.mxu0 0.0
    %550 = vmatprep.subr.mxu0 0.0
    %551 = vmatpush1.xpose.msra.mxu0 0.0
    %552 = vmatprep.subr.mxu0 0.0
    %553 = vmatpush1.xpose.msra.mxu0 0.0
    %554 = vmatprep.subr.mxu0 0.0
    %555 = vmatpush1.xpose.msra.mxu0 0.0
    %556 = vmatprep.subr.mxu0 0.0
    %557 = vmatpush1.xpose.msra.mxu0 0.0
    %558 = vmatprep.subr.mxu0 0.0
    %559 = vmatpush1.xpose.msra.mxu0 0.0
    %560 = vmatprep.subr.mxu0 0.0
    %561 = vmatpush1.xpose.msra.mxu0 0.0
    %562 = vmatprep.subr.mxu0 0.0
    %563 = vmatpush1.xpose.msra.mxu0 0.0
    %564 = vmatprep.subr.mxu0 0.0
    %565 = vmatpush1.xpose.msra.mxu0 0.0
    %566 = vmatprep.subr.mxu0 0.0
    %567 = vmatpush1.xpose.msra.mxu0 0.0
    %568 = vmatprep.subr.mxu0 0.0
    %569 = vmatpush1.xpose.msra.mxu0 0.0
    %570 = vmatprep.subr.mxu0 0.0
    %571 = vmatpush1.xpose.msra.mxu0 0.0
    %572 = vmatprep.subr.mxu0 0.0
    %573 = vmatpush1.xpose.msra.mxu0 0.0
    %574 = vmatprep.subr.mxu0 0.0
    %575 = vmatpush1.xpose.msra.mxu0 0.0
    %576 = vmatprep.subr.mxu0 0.0
    %577 = vmatpush1.xpose.msra.mxu0 0.0
    %578 = vmatprep.subr.mxu0 0.0
    %579 = vmatpush1.xpose.msra.mxu0 0.0
    %580 = vmatprep.subr.mxu0 0.0
    %581 = vmatpush1.xpose.msra.mxu0 0.0
    %582 = vmatprep.subr.mxu0 0.0
    %583 = vmatpush1.xpose.msra.mxu0 0.0
    %584 = vmatprep.subr.mxu0 0.0
    %585 = vmatpush1.xpose.msra.mxu0 0.0
    %586 = vmatprep.subr.mxu0 0.0
    %587 = vmatpush1.xpose.msra.mxu0 0.0
    %588 = vmatprep.mubr.f32.mxu0 0.0
    %589 = vmatmul.mubr.f32.gmra.mrb[0].mxu0 %v519
    %v590 = vpop.f32.mrb[0].mxu0
    %v591 = vadd.f32 %v240, %v590
    %v592 = vpop.f32.mrb[0].mxu0
    %593 = vdwg.mxu0
    %v595 = vsel %vm517, %v348, 0
    %v598 = vsel %vm517, %v431, 0
    %600 = vmatprep.subr.mxu0 0.0
    %601 = vmatpush1.xpose.msra.mxu0 %v598
    %602 = vmatprep.subr.mxu0 0.0
    %603 = vmatpush1.xpose.msra.mxu0 0.0
    %604 = vmatprep.subr.mxu0 0.0
    %605 = vmatpush1.xpose.msra.mxu0 0.0
    %606 = vmatprep.subr.mxu0 0.0
    %607 = vmatpush1.xpose.msra.mxu0 0.0
    %608 = vmatprep.subr.mxu0 0.0
    %609 = vmatpush1.xpose.msra.mxu0 0.0
    %610 = vmatprep.subr.mxu0 0.0
    %611 = vmatpush1.xpose.msra.mxu0 0.0
    %612 = vmatprep.subr.mxu0 0.0
    %613 = vmatpush1.xpose.msra.mxu0 0.0
    %614 = vmatprep.subr.mxu0 0.0
    %615 = vmatpush1.xpose.msra.mxu0 0.0
    %616 = vmatprep.subr.mxu0 0.0
    %617 = vmatpush1.xpose.msra.mxu0 0.0
    %618 = vmatprep.subr.mxu0 0.0
    %619 = vmatpush1.xpose.msra.mxu0 0.0
    %620 = vmatprep.subr.mxu0 0.0
    %621 = vmatpush1.xpose.msra.mxu0 0.0
    %622 = vmatprep.subr.mxu0 0.0
    %623 = vmatpush1.xpose.msra.mxu0 0.0
    %624 = vmatprep.subr.mxu0 0.0
    %625 = vmatpush1.xpose.msra.mxu0 0.0
    %626 = vmatprep.subr.mxu0 0.0
    %627 = vmatpush1.xpose.msra.mxu0 0.0
    %628 = vmatprep.subr.mxu0 0.0
    %629 = vmatpush1.xpose.msra.mxu0 0.0
    %630 = vmatprep.subr.mxu0 0.0
    %631 = vmatpush1.xpose.msra.mxu0 0.0
    %632 = vmatprep.subr.mxu0 0.0
    %633 = vmatpush1.xpose.msra.mxu0 0.0
    %634 = vmatprep.subr.mxu0 0.0
    %635 = vmatpush1.xpose.msra.mxu0 0.0
    %636 = vmatprep.subr.mxu0 0.0
    %637 = vmatpush1.xpose.msra.mxu0 0.0
    %638 = vmatprep.subr.mxu0 0.0
    %639 = vmatpush1.xpose.msra.mxu0 0.0
    %640 = vmatprep.subr.mxu0 0.0
    %641 = vmatpush1.xpose.msra.mxu0 0.0
    %642 = vmatprep.subr.mxu0 0.0
    %643 = vmatpush1.xpose.msra.mxu0 0.0
    %644 = vmatprep.subr.mxu0 0.0
    %645 = vmatpush1.xpose.msra.mxu0 0.0
    %646 = vmatprep.subr.mxu0 0.0
    %647 = vmatpush1.xpose.msra.mxu0 0.0
    %648 = vmatprep.subr.mxu0 0.0
    %649 = vmatpush1.xpose.msra.mxu0 0.0
    %650 = vmatprep.subr.mxu0 0.0
    %651 = vmatpush1.xpose.msra.mxu0 0.0
    %652 = vmatprep.subr.mxu0 0.0
    %653 = vmatpush1.xpose.msra.mxu0 0.0
    %654 = vmatprep.subr.mxu0 0.0
    %655 = vmatpush1.xpose.msra.mxu0 0.0
    %656 = vmatprep.subr.mxu0 0.0
    %657 = vmatpush1.xpose.msra.mxu0 0.0
    %658 = vmatprep.subr.mxu0 0.0
    %659 = vmatpush1.xpose.msra.mxu0 0.0
    %660 = vmatprep.subr.mxu0 0.0
    %661 = vmatpush1.xpose.msra.mxu0 0.0
    %662 = vmatprep.subr.mxu0 0.0
    %663 = vmatpush1.xpose.msra.mxu0 0.0
    %664 = vmatprep.mubr.f32.mxu0 0.0
    %665 = vmatmul.mubr.f32.gmra.mrb[0].mxu0 %v595
    %v666 = vpop.f32.mrb[0].mxu0
    %v667 = vadd.f32 %v240, %v666
    %v668 = vpop.f32.mrb[0].mxu0
    %669 = vdwg.mxu0
    %v670 = vsel %vm517, %v591, -inf
    %671 = vmax.xlane.f32.xlu0 %v670
    %v672 = vpop.xlane.xlu0 %671
    %v673 = vsel %vm517, %v667, -inf
    %674 = vmax.xlane.f32.xlu0 %v673
    %v675 = vpop.xlane.xlu0 %674
    %v676 = vsub.f32 %v591, %v672
    %v677 = vsub.f32 %v667, %v675
    %v678 = vmul.f32 %v676, 1.442695
    %v679 = vpow.pop %v678
    %v680 = vmul.f32 %v677, 1.442695
    %v681 = vpow.pop %v680
    %v682 = vsel %vm517, %v679, 0.0
    %683 = vadd.xlane.f32.xlu0 %v682
    %v684 = vpop.xlane.xlu0 %683
    %v685 = vsel %vm517, %v681, 0.0
    %686 = vadd.xlane.f32.xlu0 %v685
    %v687 = vpop.xlane.xlu0 %686
    %v688 = vrcp.pop %v684
    %v689 = vrcp.pop %v687
    %v690 = vmul.f32 %v679, %v688
    %v691 = vmul.f32 %v681, %v689
    %v693 = vsel %vm517, %v690, 0
    %695 = vmatprep.subr.mxu0 0.0
    %696 = vmatpush1.msra.mxu0 %v505
    %697 = vmatprep.subr.mxu0 0.0
    %698 = vmatpush1.msra.mxu0 0.0
    %699 = vmatprep.subr.mxu0 0.0
    %700 = vmatpush1.msra.mxu0 0.0
    %701 = vmatprep.subr.mxu0 0.0
    %702 = vmatpush1.msra.mxu0 0.0
    %703 = vmatprep.subr.mxu0 0.0
    %704 = vmatpush1.msra.mxu0 0.0
    %705 = vmatprep.subr.mxu0 0.0
    %706 = vmatpush1.msra.mxu0 0.0
    %707 = vmatprep.subr.mxu0 0.0
    %708 = vmatpush1.msra.mxu0 0.0
    %709 = vmatprep.subr.mxu0 0.0
    %710 = vmatpush1.msra.mxu0 0.0
    %711 = vmatprep.subr.mxu0 0.0
    %712 = vmatpush1.msra.mxu0 0.0
    %713 = vmatprep.subr.mxu0 0.0
    %714 = vmatpush1.msra.mxu0 0.0
    %715 = vmatprep.subr.mxu0 0.0
    %716 = vmatpush1.msra.mxu0 0.0
    %717 = vmatprep.subr.mxu0 0.0
    %718 = vmatpush1.msra.mxu0 0.0
    %719 = vmatprep.subr.mxu0 0.0
    %720 = vmatpush1.msra.mxu0 0.0
    %721 = vmatprep.subr.mxu0 0.0
    %722 = vmatpush1.msra.mxu0 0.0
    %723 = vmatprep.subr.mxu0 0.0
    %724 = vmatpush1.msra.mxu0 0.0
    %725 = vmatprep.subr.mxu0 0.0
    %726 = vmatpush1.msra.mxu0 0.0
    %727 = vmatprep.subr.mxu0 0.0
    %728 = vmatpush1.msra.mxu0 0.0
    %729 = vmatprep.subr.mxu0 0.0
    %730 = vmatpush1.msra.mxu0 0.0
    %731 = vmatprep.subr.mxu0 0.0
    %732 = vmatpush1.msra.mxu0 0.0
    %733 = vmatprep.subr.mxu0 0.0
    %734 = vmatpush1.msra.mxu0 0.0
    %735 = vmatprep.subr.mxu0 0.0
    %736 = vmatpush1.msra.mxu0 0.0
    %737 = vmatprep.subr.mxu0 0.0
    %738 = vmatpush1.msra.mxu0 0.0
    %739 = vmatprep.subr.mxu0 0.0
    %740 = vmatpush1.msra.mxu0 0.0
    %741 = vmatprep.subr.mxu0 0.0
    %742 = vmatpush1.msra.mxu0 0.0
    %743 = vmatprep.subr.mxu0 0.0
    %744 = vmatpush1.msra.mxu0 0.0
    %745 = vmatprep.subr.mxu0 0.0
    %746 = vmatpush1.msra.mxu0 0.0
    %747 = vmatprep.subr.mxu0 0.0
    %748 = vmatpush1.msra.mxu0 0.0
    %749 = vmatprep.subr.mxu0 0.0
    %750 = vmatpush1.msra.mxu0 0.0
    %751 = vmatprep.subr.mxu0 0.0
    %752 = vmatpush1.msra.mxu0 0.0
    %753 = vmatprep.subr.mxu0 0.0
    %754 = vmatpush1.msra.mxu0 0.0
    %755 = vmatprep.subr.mxu0 0.0
    %756 = vmatpush1.msra.mxu0 0.0
    %757 = vmatprep.subr.mxu0 0.0
    %758 = vmatpush1.msra.mxu0 0.0
    %759 = vmatprep.mubr.f32.mxu0 0.0
    %760 = vmatmul.mubr.f32.gmra.mrb[0].mxu0 %v693
    %v761 = vpop.f32.mrb[0].mxu0
    %v762 = vadd.f32 0.0, %v761
    %v763 = vpop.f32.mrb[0].mxu0
    %764 = vdwg.mxu0
    %v766 = vsel %vm517, %v691, 0
    %768 = vmatprep.subr.mxu0 0.0
    %769 = vmatpush1.msra.mxu0 %v510
    %770 = vmatprep.subr.mxu0 0.0
    %771 = vmatpush1.msra.mxu0 0.0
    %772 = vmatprep.subr.mxu0 0.0
    %773 = vmatpush1.msra.mxu0 0.0
    %774 = vmatprep.subr.mxu0 0.0
    %775 = vmatpush1.msra.mxu0 0.0
    %776 = vmatprep.subr.mxu0 0.0
    %777 = vmatpush1.msra.mxu0 0.0
    %778 = vmatprep.subr.mxu0 0.0
    %779 = vmatpush1.msra.mxu0 0.0
    %780 = vmatprep.subr.mxu0 0.0
    %781 = vmatpush1.msra.mxu0 0.0
    %782 = vmatprep.subr.mxu0 0.0
    %783 = vmatpush1.msra.mxu0 0.0
    %784 = vmatprep.subr.mxu0 0.0
    %785 = vmatpush1.msra.mxu0 0.0
    %786 = vmatprep.subr.mxu0 0.0
    %787 = vmatpush1.msra.mxu0 0.0
    %788 = vmatprep.subr.mxu0 0.0
    %789 = vmatpush1.msra.mxu0 0.0
    %790 = vmatprep.subr.mxu0 0.0
    %791 = vmatpush1.msra.mxu0 0.0
    %792 = vmatprep.subr.mxu0 0.0
    %793 = vmatpush1.msra.mxu0 0.0
    %794 = vmatprep.subr.mxu0 0.0
    %795 = vmatpush1.msra.mxu0 0.0
    %796 = vmatprep.subr.mxu0 0.0
    %797 = vmatpush1.msra.mxu0 0.0
    %798 = vmatprep.subr.mxu0 0.0
    %799 = vmatpush1.msra.mxu0 0.0
    %800 = vmatprep.subr.mxu0 0.0
    %801 = vmatpush1.msra.mxu0 0.0
    %802 = vmatprep.subr.mxu0 0.0
    %803 = vmatpush1.msra.mxu0 0.0
    %804 = vmatprep.subr.mxu0 0.0
    %805 = vmatpush1.msra.mxu0 0.0
    %806 = vmatprep.subr.mxu0 0.0
    %807 = vmatpush1.msra.mxu0 0.0
    %808 = vmatprep.subr.mxu0 0.0
    %809 = vmatpush1.msra.mxu0 0.0
    %810 = vmatprep.subr.mxu0 0.0
    %811 = vmatpush1.msra.mxu0 0.0
    %812 = vmatprep.subr.mxu0 0.0
    %813 = vmatpush1.msra.mxu0 0.0
    %814 = vmatprep.subr.mxu0 0.0
    %815 = vmatpush1.msra.mxu0 0.0
    %816 = vmatprep.subr.mxu0 0.0
    %817 = vmatpush1.msra.mxu0 0.0
    %818 = vmatprep.subr.mxu0 0.0
    %819 = vmatpush1.msra.mxu0 0.0
    %820 = vmatprep.subr.mxu0 0.0
    %821 = vmatpush1.msra.mxu0 0.0
    %822 = vmatprep.subr.mxu0 0.0
    %823 = vmatpush1.msra.mxu0 0.0
    %824 = vmatprep.subr.mxu0 0.0
    %825 = vmatpush1.msra.mxu0 0.0
    %826 = vmatprep.subr.mxu0 0.0
    %827 = vmatpush1.msra.mxu0 0.0
    %828 = vmatprep.subr.mxu0 0.0
    %829 = vmatpush1.msra.mxu0 0.0
    %830 = vmatprep.subr.mxu0 0.0
    %831 = vmatpush1.msra.mxu0 0.0
    %832 = vmatprep.mubr.f32.mxu0 0.0
    %833 = vmatmul.mubr.f32.gmra.mrb[0].mxu0 %v766
    %v834 = vpop.f32.mrb[0].mxu0
    %v835 = vadd.f32 0.0, %v834
    %v836 = vpop.f32.mrb[0].mxu0
    %837 = vdwg.mxu0
    %838 = vrot.lane.b32.xlu0 %v347, 120
    %v839 = vpop.permute.xlu0 %838
    %840 = vrot.lane.b32.xlu0 %v426, 120
    %v841 = vpop.permute.xlu0 %840
    %v842 = vsel %vm517, %v839, 0
    %v844 = vsel %vm517, %v841, 0
    %846 = vmatprep.subr.mxu0 0.0
    %847 = vmatpush1.xpose.msra.mxu0 %v844
    %848 = vmatprep.subr.mxu0 0.0
    %849 = vmatpush1.xpose.msra.mxu0 0.0
    %850 = vmatprep.subr.mxu0 0.0
    %851 = vmatpush1.xpose.msra.mxu0 0.0
    %852 = vmatprep.subr.mxu0 0.0
    %853 = vmatpush1.xpose.msra.mxu0 0.0
    %854 = vmatprep.subr.mxu0 0.0
    %855 = vmatpush1.xpose.msra.mxu0 0.0
    %856 = vmatprep.subr.mxu0 0.0
    %857 = vmatpush1.xpose.msra.mxu0 0.0
    %858 = vmatprep.subr.mxu0 0.0
    %859 = vmatpush1.xpose.msra.mxu0 0.0
    %860 = vmatprep.subr.mxu0 0.0
    %861 = vmatpush1.xpose.msra.mxu0 0.0
    %862 = vmatprep.subr.mxu0 0.0
    %863 = vmatpush1.xpose.msra.mxu0 0.0
    %864 = vmatprep.subr.mxu0 0.0
    %865 = vmatpush1.xpose.msra.mxu0 0.0
    %866 = vmatprep.subr.mxu0 0.0
    %867 = vmatpush1.xpose.msra.mxu0 0.0
    %868 = vmatprep.subr.mxu0 0.0
    %869 = vmatpush1.xpose.msra.mxu0 0.0
    %870 = vmatprep.subr.mxu0 0.0
    %871 = vmatpush1.xpose.msra.mxu0 0.0
    %872 = vmatprep.subr.mxu0 0.0
    %873 = vmatpush1.xpose.msra.mxu0 0.0
    %874 = vmatprep.subr.mxu0 0.0
    %875 = vmatpush1.xpose.msra.mxu0 0.0
    %876 = vmatprep.subr.mxu0 0.0
    %877 = vmatpush1.xpose.msra.mxu0 0.0
    %878 = vmatprep.subr.mxu0 0.0
    %879 = vmatpush1.xpose.msra.mxu0 0.0
    %880 = vmatprep.subr.mxu0 0.0
    %881 = vmatpush1.xpose.msra.mxu0 0.0
    %882 = vmatprep.subr.mxu0 0.0
    %883 = vmatpush1.xpose.msra.mxu0 0.0
    %884 = vmatprep.subr.mxu0 0.0
    %885 = vmatpush1.xpose.msra.mxu0 0.0
    %886 = vmatprep.subr.mxu0 0.0
    %887 = vmatpush1.xpose.msra.mxu0 0.0
    %888 = vmatprep.subr.mxu0 0.0
    %889 = vmatpush1.xpose.msra.mxu0 0.0
    %890 = vmatprep.subr.mxu0 0.0
    %891 = vmatpush1.xpose.msra.mxu0 0.0
    %892 = vmatprep.subr.mxu0 0.0
    %893 = vmatpush1.xpose.msra.mxu0 0.0
    %894 = vmatprep.subr.mxu0 0.0
    %895 = vmatpush1.xpose.msra.mxu0 0.0
    %896 = vmatprep.subr.mxu0 0.0
    %897 = vmatpush1.xpose.msra.mxu0 0.0
    %898 = vmatprep.subr.mxu0 0.0
    %899 = vmatpush1.xpose.msra.mxu0 0.0
    %900 = vmatprep.subr.mxu0 0.0
    %901 = vmatpush1.xpose.msra.mxu0 0.0
    %902 = vmatprep.subr.mxu0 0.0
    %903 = vmatpush1.xpose.msra.mxu0 0.0
    %904 = vmatprep.subr.mxu0 0.0
    %905 = vmatpush1.xpose.msra.mxu0 0.0
    %906 = vmatprep.subr.mxu0 0.0
    %907 = vmatpush1.xpose.msra.mxu0 0.0
    %908 = vmatprep.subr.mxu0 0.0
    %909 = vmatpush1.xpose.msra.mxu0 0.0
    %910 = vmatprep.mubr.f32.mxu0 0.0
    %911 = vmatmul.mubr.f32.gmra.mrb[0].mxu0 %v842
    %v912 = vpop.f32.mrb[0].mxu0
    %v913 = vadd.f32 %v240, %v912
    %v914 = vpop.f32.mrb[0].mxu0
    %915 = vdwg.mxu0
    %916 = vrot.lane.b32.xlu0 %v348, 120
    %v917 = vpop.permute.xlu0 %916
    %918 = vrot.lane.b32.xlu0 %v431, 120
    %v919 = vpop.permute.xlu0 %918
    %v920 = vsel %vm517, %v917, 0
    %v922 = vsel %vm517, %v919, 0
    %924 = vmatprep.subr.mxu0 0.0
    %925 = vmatpush1.xpose.msra.mxu0 %v922
    %926 = vmatprep.subr.mxu0 0.0
    %927 = vmatpush1.xpose.msra.mxu0 0.0
    %928 = vmatprep.subr.mxu0 0.0
    %929 = vmatpush1.xpose.msra.mxu0 0.0
    %930 = vmatprep.subr.mxu0 0.0
    %931 = vmatpush1.xpose.msra.mxu0 0.0
    %932 = vmatprep.subr.mxu0 0.0
    %933 = vmatpush1.xpose.msra.mxu0 0.0
    %934 = vmatprep.subr.mxu0 0.0
    %935 = vmatpush1.xpose.msra.mxu0 0.0
    %936 = vmatprep.subr.mxu0 0.0
    %937 = vmatpush1.xpose.msra.mxu0 0.0
    %938 = vmatprep.subr.mxu0 0.0
    %939 = vmatpush1.xpose.msra.mxu0 0.0
    %940 = vmatprep.subr.mxu0 0.0
    %941 = vmatpush1.xpose.msra.mxu0 0.0
    %942 = vmatprep.subr.mxu0 0.0
    %943 = vmatpush1.xpose.msra.mxu0 0.0
    %944 = vmatprep.subr.mxu0 0.0
    %945 = vmatpush1.xpose.msra.mxu0 0.0
    %946 = vmatprep.subr.mxu0 0.0
    %947 = vmatpush1.xpose.msra.mxu0 0.0
    %948 = vmatprep.subr.mxu0 0.0
    %949 = vmatpush1.xpose.msra.mxu0 0.0
    %950 = vmatprep.subr.mxu0 0.0
    %951 = vmatpush1.xpose.msra.mxu0 0.0
    %952 = vmatprep.subr.mxu0 0.0
    %953 = vmatpush1.xpose.msra.mxu0 0.0
    %954 = vmatprep.subr.mxu0 0.0
    %955 = vmatpush1.xpose.msra.mxu0 0.0
    %956 = vmatprep.subr.mxu0 0.0
    %957 = vmatpush1.xpose.msra.mxu0 0.0
    %958 = vmatprep.subr.mxu0 0.0
    %959 = vmatpush1.xpose.msra.mxu0 0.0
    %960 = vmatprep.subr.mxu0 0.0
    %961 = vmatpush1.xpose.msra.mxu0 0.0
    %962 = vmatprep.subr.mxu0 0.0
    %963 = vmatpush1.xpose.msra.mxu0 0.0
    %964 = vmatprep.subr.mxu0 0.0
    %965 = vmatpush1.xpose.msra.mxu0 0.0
    %966 = vmatprep.subr.mxu0 0.0
    %967 = vmatpush1.xpose.msra.mxu0 0.0
    %968 = vmatprep.subr.mxu0 0.0
    %969 = vmatpush1.xpose.msra.mxu0 0.0
    %970 = vmatprep.subr.mxu0 0.0
    %971 = vmatpush1.xpose.msra.mxu0 0.0
    %972 = vmatprep.subr.mxu0 0.0
    %973 = vmatpush1.xpose.msra.mxu0 0.0
    %974 = vmatprep.subr.mxu0 0.0
    %975 = vmatpush1.xpose.msra.mxu0 0.0
    %976 = vmatprep.subr.mxu0 0.0
    %977 = vmatpush1.xpose.msra.mxu0 0.0
    %978 = vmatprep.subr.mxu0 0.0
    %979 = vmatpush1.xpose.msra.mxu0 0.0
    %980 = vmatprep.subr.mxu0 0.0
    %981 = vmatpush1.xpose.msra.mxu0 0.0
    %982 = vmatprep.subr.mxu0 0.0
    %983 = vmatpush1.xpose.msra.mxu0 0.0
    %984 = vmatprep.subr.mxu0 0.0
    %985 = vmatpush1.xpose.msra.mxu0 0.0
    %986 = vmatprep.subr.mxu0 0.0
    %987 = vmatpush1.xpose.msra.mxu0 0.0
    %988 = vmatprep.mubr.f32.mxu0 0.0
    %989 = vmatmul.mubr.f32.gmra.mrb[0].mxu0 %v920
    %v990 = vpop.f32.mrb[0].mxu0
    %v991 = vadd.f32 %v240, %v990
    %v992 = vpop.f32.mrb[0].mxu0
    %993 = vdwg.mxu0
    %v994 = vsel %vm517, %v913, -inf
    %995 = vmax.xlane.f32.xlu0 %v994
    %v996 = vpop.xlane.xlu0 %995
    %v997 = vsel %vm517, %v991, -inf
    %998 = vmax.xlane.f32.xlu0 %v997
    %v999 = vpop.xlane.xlu0 %998
    %v1000 = vsub.f32 %v913, %v996
    %v1001 = vsub.f32 %v991, %v999
    %v1002 = vmul.f32 %v1000, 1.442695
    %v1003 = vpow.pop %v1002
    %v1004 = vmul.f32 %v1001, 1.442695
    %v1005 = vpow.pop %v1004
    %v1006 = vsel %vm517, %v1003, 0.0
    %1007 = vadd.xlane.f32.xlu0 %v1006
    %v1008 = vpop.xlane.xlu0 %1007
    %v1009 = vsel %vm517, %v1005, 0.0
    %1010 = vadd.xlane.f32.xlu0 %v1009
    %v1011 = vpop.xlane.xlu0 %1010
    %v1012 = vrcp.pop %v1008
    %v1013 = vrcp.pop %v1011
    %v1014 = vmul.f32 %v1003, %v1012
    %v1015 = vmul.f32 %v1005, %v1013
    %1017 = vrot.lane.b32.xlu0 %v505, 120
    %v1018 = vpop.permute.xlu0 %1017
    %v1021 = vsel %vm517, %v1014, 0
    %1023 = vmatprep.subr.mxu0 0.0
    %1024 = vmatpush1.msra.mxu0 %v1018
    %1025 = vmatprep.subr.mxu0 0.0
    %1026 = vmatpush1.msra.mxu0 0.0
    %1027 = vmatprep.subr.mxu0 0.0
    %1028 = vmatpush1.msra.mxu0 0.0
    %1029 = vmatprep.subr.mxu0 0.0
    %1030 = vmatpush1.msra.mxu0 0.0
    %1031 = vmatprep.subr.mxu0 0.0
    %1032 = vmatpush1.msra.mxu0 0.0
    %1033 = vmatprep.subr.mxu0 0.0
    %1034 = vmatpush1.msra.mxu0 0.0
    %1035 = vmatprep.subr.mxu0 0.0
    %1036 = vmatpush1.msra.mxu0 0.0
    %1037 = vmatprep.subr.mxu0 0.0
    %1038 = vmatpush1.msra.mxu0 0.0
    %1039 = vmatprep.subr.mxu0 0.0
    %1040 = vmatpush1.msra.mxu0 0.0
    %1041 = vmatprep.subr.mxu0 0.0
    %1042 = vmatpush1.msra.mxu0 0.0
    %1043 = vmatprep.subr.mxu0 0.0
    %1044 = vmatpush1.msra.mxu0 0.0
    %1045 = vmatprep.subr.mxu0 0.0
    %1046 = vmatpush1.msra.mxu0 0.0
    %1047 = vmatprep.subr.mxu0 0.0
    %1048 = vmatpush1.msra.mxu0 0.0
    %1049 = vmatprep.subr.mxu0 0.0
    %1050 = vmatpush1.msra.mxu0 0.0
    %1051 = vmatprep.subr.mxu0 0.0
    %1052 = vmatpush1.msra.mxu0 0.0
    %1053 = vmatprep.subr.mxu0 0.0
    %1054 = vmatpush1.msra.mxu0 0.0
    %1055 = vmatprep.subr.mxu0 0.0
    %1056 = vmatpush1.msra.mxu0 0.0
    %1057 = vmatprep.subr.mxu0 0.0
    %1058 = vmatpush1.msra.mxu0 0.0
    %1059 = vmatprep.subr.mxu0 0.0
    %1060 = vmatpush1.msra.mxu0 0.0
    %1061 = vmatprep.subr.mxu0 0.0
    %1062 = vmatpush1.msra.mxu0 0.0
    %1063 = vmatprep.subr.mxu0 0.0
    %1064 = vmatpush1.msra.mxu0 0.0
    %1065 = vmatprep.subr.mxu0 0.0
    %1066 = vmatpush1.msra.mxu0 0.0
    %1067 = vmatprep.subr.mxu0 0.0
    %1068 = vmatpush1.msra.mxu0 0.0
    %1069 = vmatprep.subr.mxu0 0.0
    %1070 = vmatpush1.msra.mxu0 0.0
    %1071 = vmatprep.subr.mxu0 0.0
    %1072 = vmatpush1.msra.mxu0 0.0
    %1073 = vmatprep.subr.mxu0 0.0
    %1074 = vmatpush1.msra.mxu0 0.0
    %1075 = vmatprep.subr.mxu0 0.0
    %1076 = vmatpush1.msra.mxu0 0.0
    %1077 = vmatprep.subr.mxu0 0.0
    %1078 = vmatpush1.msra.mxu0 0.0
    %1079 = vmatprep.subr.mxu0 0.0
    %1080 = vmatpush1.msra.mxu0 0.0
    %1081 = vmatprep.subr.mxu0 0.0
    %1082 = vmatpush1.msra.mxu0 0.0
    %1083 = vmatprep.subr.mxu0 0.0
    %1084 = vmatpush1.msra.mxu0 0.0
    %1085 = vmatprep.subr.mxu0 0.0
    %1086 = vmatpush1.msra.mxu0 0.0
    %1087 = vmatprep.mubr.f32.mxu0 0.0
    %1088 = vmatmul.mubr.f32.gmra.mrb[0].mxu0 %v1021
    %v1089 = vpop.f32.mrb[0].mxu0
    %v1090 = vadd.f32 0.0, %v1089
    %v1091 = vpop.f32.mrb[0].mxu0
    %1092 = vdwg.mxu0
    %1094 = vrot.lane.b32.xlu0 %v510, 120
    %v1095 = vpop.permute.xlu0 %1094
    %v1098 = vsel %vm517, %v1015, 0
    %1100 = vmatprep.subr.mxu0 0.0
    %1101 = vmatpush1.msra.mxu0 %v1095
    %1102 = vmatprep.subr.mxu0 0.0
    %1103 = vmatpush1.msra.mxu0 0.0
    %1104 = vmatprep.subr.mxu0 0.0
    %1105 = vmatpush1.msra.mxu0 0.0
    %1106 = vmatprep.subr.mxu0 0.0
    %1107 = vmatpush1.msra.mxu0 0.0
    %1108 = vmatprep.subr.mxu0 0.0
    %1109 = vmatpush1.msra.mxu0 0.0
    %1110 = vmatprep.subr.mxu0 0.0
    %1111 = vmatpush1.msra.mxu0 0.0
    %1112 = vmatprep.subr.mxu0 0.0
    %1113 = vmatpush1.msra.mxu0 0.0
    %1114 = vmatprep.subr.mxu0 0.0
    %1115 = vmatpush1.msra.mxu0 0.0
    %1116 = vmatprep.subr.mxu0 0.0
    %1117 = vmatpush1.msra.mxu0 0.0
    %1118 = vmatprep.subr.mxu0 0.0
    %1119 = vmatpush1.msra.mxu0 0.0
    %1120 = vmatprep.subr.mxu0 0.0
    %1121 = vmatpush1.msra.mxu0 0.0
    %1122 = vmatprep.subr.mxu0 0.0
    %1123 = vmatpush1.msra.mxu0 0.0
    %1124 = vmatprep.subr.mxu0 0.0
    %1125 = vmatpush1.msra.mxu0 0.0
    %1126 = vmatprep.subr.mxu0 0.0
    %1127 = vmatpush1.msra.mxu0 0.0
    %1128 = vmatprep.subr.mxu0 0.0
    %1129 = vmatpush1.msra.mxu0 0.0
    %1130 = vmatprep.subr.mxu0 0.0
    %1131 = vmatpush1.msra.mxu0 0.0
    %1132 = vmatprep.subr.mxu0 0.0
    %1133 = vmatpush1.msra.mxu0 0.0
    %1134 = vmatprep.subr.mxu0 0.0
    %1135 = vmatpush1.msra.mxu0 0.0
    %1136 = vmatprep.subr.mxu0 0.0
    %1137 = vmatpush1.msra.mxu0 0.0
    %1138 = vmatprep.subr.mxu0 0.0
    %1139 = vmatpush1.msra.mxu0 0.0
    %1140 = vmatprep.subr.mxu0 0.0
    %1141 = vmatpush1.msra.mxu0 0.0
    %1142 = vmatprep.subr.mxu0 0.0
    %1143 = vmatpush1.msra.mxu0 0.0
    %1144 = vmatprep.subr.mxu0 0.0
    %1145 = vmatpush1.msra.mxu0 0.0
    %1146 = vmatprep.subr.mxu0 0.0
    %1147 = vmatpush1.msra.mxu0 0.0
    %1148 = vmatprep.subr.mxu0 0.0
    %1149 = vmatpush1.msra.mxu0 0.0
    %1150 = vmatprep.subr.mxu0 0.0
    %1151 = vmatpush1.msra.mxu0 0.0
    %1152 = vmatprep.subr.mxu0 0.0
    %1153 = vmatpush1.msra.mxu0 0.0
    %1154 = vmatprep.subr.mxu0 0.0
    %1155 = vmatpush1.msra.mxu0 0.0
    %1156 = vmatprep.subr.mxu0 0.0
    %1157 = vmatpush1.msra.mxu0 0.0
    %1158 = vmatprep.subr.mxu0 0.0
    %1159 = vmatpush1.msra.mxu0 0.0
    %1160 = vmatprep.subr.mxu0 0.0
    %1161 = vmatpush1.msra.mxu0 0.0
    %1162 = vmatprep.subr.mxu0 0.0
    %1163 = vmatpush1.msra.mxu0 0.0
    %1164 = vmatprep.mubr.f32.mxu0 0.0
    %1165 = vmatmul.mubr.f32.gmra.mrb[0].mxu0 %v1098
    %v1166 = vpop.f32.mrb[0].mxu0
    %v1167 = vadd.f32 0.0, %v1166
    %v1168 = vpop.f32.mrb[0].mxu0
    %1169 = vdwg.mxu0
    %v1171 = vsel %vm517, %v1090, 0
    %v1174 = vsel %vm517, %v1167, 0
    %1176 = vmatprep.subr.mxu0 0.0
    %1177 = vmatpush1.msra.mxu0 %v514
    %1178 = vmatprep.subr.mxu0 0.0
    %1179 = vmatpush1.msra.mxu0 0.0
    %1180 = vmatprep.subr.mxu0 0.0
    %1181 = vmatpush1.msra.mxu0 0.0
    %1182 = vmatprep.subr.mxu0 0.0
    %1183 = vmatpush1.msra.mxu0 0.0
    %1184 = vmatprep.subr.mxu0 0.0
    %1185 = vmatpush1.msra.mxu0 0.0
    %1186 = vmatprep.subr.mxu0 0.0
    %1187 = vmatpush1.msra.mxu0 0.0
    %1188 = vmatprep.subr.mxu0 0.0
    %1189 = vmatpush1.msra.mxu0 0.0
    %1190 = vmatprep.subr.mxu0 0.0
    %1191 = vmatpush1.msra.mxu0 0.0
    %1192 = vmatprep.subr.mxu0 0.0
    %1193 = vmatpush1.msra.mxu0 0.0
    %1194 = vmatprep.subr.mxu0 0.0
    %1195 = vmatpush1.msra.mxu0 0.0
    %1196 = vmatprep.subr.mxu0 0.0
    %1197 = vmatpush1.msra.mxu0 0.0
    %1198 = vmatprep.subr.mxu0 0.0
    %1199 = vmatpush1.msra.mxu0 0.0
    %1200 = vmatprep.subr.mxu0 0.0
    %1201 = vmatpush1.msra.mxu0 0.0
    %1202 = vmatprep.subr.mxu0 0.0
    %1203 = vmatpush1.msra.mxu0 0.0
    %1204 = vmatprep.subr.mxu0 0.0
    %1205 = vmatpush1.msra.mxu0 0.0
    %1206 = vmatprep.subr.mxu0 0.0
    %1207 = vmatpush1.msra.mxu0 0.0
    %1208 = vmatprep.subr.mxu0 0.0
    %1209 = vmatpush1.msra.mxu0 0.0
    %1210 = vmatprep.subr.mxu0 0.0
    %1211 = vmatpush1.msra.mxu0 0.0
    %1212 = vmatprep.subr.mxu0 0.0
    %1213 = vmatpush1.msra.mxu0 0.0
    %1214 = vmatprep.subr.mxu0 0.0
    %1215 = vmatpush1.msra.mxu0 0.0
    %1216 = vmatprep.subr.mxu0 0.0
    %1217 = vmatpush1.msra.mxu0 0.0
    %1218 = vmatprep.subr.mxu0 0.0
    %1219 = vmatpush1.msra.mxu0 0.0
    %1220 = vmatprep.subr.mxu0 0.0
    %1221 = vmatpush1.msra.mxu0 0.0
    %1222 = vmatprep.subr.mxu0 0.0
    %1223 = vmatpush1.msra.mxu0 0.0
    %1224 = vmatprep.subr.mxu0 0.0
    %1225 = vmatpush1.msra.mxu0 0.0
    %1226 = vmatprep.subr.mxu0 0.0
    %1227 = vmatpush1.msra.mxu0 0.0
    %1228 = vmatprep.subr.mxu0 0.0
    %1229 = vmatpush1.msra.mxu0 0.0
    %1230 = vmatprep.subr.mxu0 0.0
    %1231 = vmatpush1.msra.mxu0 0.0
    %1232 = vmatprep.subr.mxu0 0.0
    %1233 = vmatpush1.msra.mxu0 0.0
    %1234 = vmatprep.subr.mxu0 0.0
    %1235 = vmatpush1.msra.mxu0 0.0
    %1236 = vmatprep.subr.mxu0 0.0
    %1237 = vmatpush1.msra.mxu0 0.0
    %1238 = vmatprep.subr.mxu0 0.0
    %1239 = vmatpush1.msra.mxu0 0.0
    %1240 = vmatprep.mubr.f32.mxu0 0.0
    %1241 = vmatmul.mubr.f32.gmra.mrb[0].mxu0 %v1171
    %v1242 = vpop.f32.mrb[0].mxu0
    %v1243 = vadd.f32 0.0, %v1242
    %v1244 = vpop.f32.mrb[0].mxu0
    %1245 = vmatprep.mubr.f32.mxu0 0.0
    %1246 = vmatmul.mubr.f32.gmra.mrb[0].mxu0 %v1174
    %v1247 = vpop.f32.mrb[0].mxu0
    %v1248 = vadd.f32 0.0, %v1247
    %v1249 = vpop.f32.mrb[0].mxu0
    %1250 = vdwg.mxu0
    %v1252 = vsel %vm517, %v762, 0
    %v1255 = vsel %vm517, %v835, 0
    %1257 = vmatprep.subr.mxu0 0.0
    %1258 = vmatpush1.msra.mxu0 %v513
    %1259 = vmatprep.subr.mxu0 0.0
    %1260 = vmatpush1.msra.mxu0 0.0
    %1261 = vmatprep.subr.mxu0 0.0
    %1262 = vmatpush1.msra.mxu0 0.0
    %1263 = vmatprep.subr.mxu0 0.0
    %1264 = vmatpush1.msra.mxu0 0.0
    %1265 = vmatprep.subr.mxu0 0.0
    %1266 = vmatpush1.msra.mxu0 0.0
    %1267 = vmatprep.subr.mxu0 0.0
    %1268 = vmatpush1.msra.mxu0 0.0
    %1269 = vmatprep.subr.mxu0 0.0
    %1270 = vmatpush1.msra.mxu0 0.0
    %1271 = vmatprep.subr.mxu0 0.0
    %1272 = vmatpush1.msra.mxu0 0.0
    %1273 = vmatprep.subr.mxu0 0.0
    %1274 = vmatpush1.msra.mxu0 0.0
    %1275 = vmatprep.subr.mxu0 0.0
    %1276 = vmatpush1.msra.mxu0 0.0
    %1277 = vmatprep.subr.mxu0 0.0
    %1278 = vmatpush1.msra.mxu0 0.0
    %1279 = vmatprep.subr.mxu0 0.0
    %1280 = vmatpush1.msra.mxu0 0.0
    %1281 = vmatprep.subr.mxu0 0.0
    %1282 = vmatpush1.msra.mxu0 0.0
    %1283 = vmatprep.subr.mxu0 0.0
    %1284 = vmatpush1.msra.mxu0 0.0
    %1285 = vmatprep.subr.mxu0 0.0
    %1286 = vmatpush1.msra.mxu0 0.0
    %1287 = vmatprep.subr.mxu0 0.0
    %1288 = vmatpush1.msra.mxu0 0.0
    %1289 = vmatprep.subr.mxu0 0.0
    %1290 = vmatpush1.msra.mxu0 0.0
    %1291 = vmatprep.subr.mxu0 0.0
    %1292 = vmatpush1.msra.mxu0 0.0
    %1293 = vmatprep.subr.mxu0 0.0
    %1294 = vmatpush1.msra.mxu0 0.0
    %1295 = vmatprep.subr.mxu0 0.0
    %1296 = vmatpush1.msra.mxu0 0.0
    %1297 = vmatprep.subr.mxu0 0.0
    %1298 = vmatpush1.msra.mxu0 0.0
    %1299 = vmatprep.subr.mxu0 0.0
    %1300 = vmatpush1.msra.mxu0 0.0
    %1301 = vmatprep.subr.mxu0 0.0
    %1302 = vmatpush1.msra.mxu0 0.0
    %1303 = vmatprep.subr.mxu0 0.0
    %1304 = vmatpush1.msra.mxu0 0.0
    %1305 = vmatprep.subr.mxu0 0.0
    %1306 = vmatpush1.msra.mxu0 0.0
    %1307 = vmatprep.subr.mxu0 0.0
    %1308 = vmatpush1.msra.mxu0 0.0
    %1309 = vmatprep.subr.mxu0 0.0
    %1310 = vmatpush1.msra.mxu0 0.0
    %1311 = vmatprep.subr.mxu0 0.0
    %1312 = vmatpush1.msra.mxu0 0.0
    %1313 = vmatprep.subr.mxu0 0.0
    %1314 = vmatpush1.msra.mxu0 0.0
    %1315 = vmatprep.subr.mxu0 0.0
    %1316 = vmatpush1.msra.mxu0 0.0
    %1317 = vmatprep.subr.mxu0 0.0
    %1318 = vmatpush1.msra.mxu0 0.0
    %1319 = vmatprep.subr.mxu0 0.0
    %1320 = vmatpush1.msra.mxu0 0.0
    %1321 = vmatprep.mubr.f32.mxu0 0.0
    %1322 = vmatmul.mubr.f32.gmra.mrb[0].mxu0 %v1252
    %v1323 = vpop.f32.mrb[0].mxu0
    %v1324 = vadd.f32 %v1243, %v1323
    %v1325 = vpop.f32.mrb[0].mxu0
    %1326 = vmatprep.mubr.f32.mxu0 0.0
    %1327 = vmatmul.mubr.f32.gmra.mrb[0].mxu0 %v1255
    %v1328 = vpop.f32.mrb[0].mxu0
    %v1329 = vadd.f32 %v1248, %v1328
    %v1330 = vpop.f32.mrb[0].mxu0
    %1331 = vdwg.mxu0
    %1332 = vrot.lane.b32.xlu0 %v347, 112
    %v1333 = vpop.permute.xlu0 %1332
    %1334 = vrot.lane.b32.xlu0 %v426, 112
    %v1335 = vpop.permute.xlu0 %1334
    %v1336 = vsel %vm517, %v1333, 0
    %v1338 = vsel %vm517, %v1335, 0
    %1340 = vmatprep.subr.mxu0 0.0
    %1341 = vmatpush1.xpose.msra.mxu0 %v1338
    %1342 = vmatprep.subr.mxu0 0.0
    %1343 = vmatpush1.xpose.msra.mxu0 0.0
    %1344 = vmatprep.subr.mxu0 0.0
    %1345 = vmatpush1.xpose.msra.mxu0 0.0
    %1346 = vmatprep.subr.mxu0 0.0
    %1347 = vmatpush1.xpose.msra.mxu0 0.0
    %1348 = vmatprep.subr.mxu0 0.0
    %1349 = vmatpush1.xpose.msra.mxu0 0.0
    %1350 = vmatprep.subr.mxu0 0.0
    %1351 = vmatpush1.xpose.msra.mxu0 0.0
    %1352 = vmatprep.subr.mxu0 0.0
    %1353 = vmatpush1.xpose.msra.mxu0 0.0
    %1354 = vmatprep.subr.mxu0 0.0
    %1355 = vmatpush1.xpose.msra.mxu0 0.0
    %1356 = vmatprep.subr.mxu0 0.0
    %1357 = vmatpush1.xpose.msra.mxu0 0.0
    %1358 = vmatprep.subr.mxu0 0.0
    %1359 = vmatpush1.xpose.msra.mxu0 0.0
    %1360 = vmatprep.subr.mxu0 0.0
    %1361 = vmatpush1.xpose.msra.mxu0 0.0
    %1362 = vmatprep.subr.mxu0 0.0
    %1363 = vmatpush1.xpose.msra.mxu0 0.0
    %1364 = vmatprep.subr.mxu0 0.0
    %1365 = vmatpush1.xpose.msra.mxu0 0.0
    %1366 = vmatprep.subr.mxu0 0.0
    %1367 = vmatpush1.xpose.msra.mxu0 0.0
    %1368 = vmatprep.subr.mxu0 0.0
    %1369 = vmatpush1.xpose.msra.mxu0 0.0
    %1370 = vmatprep.subr.mxu0 0.0
    %1371 = vmatpush1.xpose.msra.mxu0 0.0
    %1372 = vmatprep.subr.mxu0 0.0
    %1373 = vmatpush1.xpose.msra.mxu0 0.0
    %1374 = vmatprep.subr.mxu0 0.0
    %1375 = vmatpush1.xpose.msra.mxu0 0.0
    %1376 = vmatprep.subr.mxu0 0.0
    %1377 = vmatpush1.xpose.msra.mxu0 0.0
    %1378 = vmatprep.subr.mxu0 0.0
    %1379 = vmatpush1.xpose.msra.mxu0 0.0
    %1380 = vmatprep.subr.mxu0 0.0
    %1381 = vmatpush1.xpose.msra.mxu0 0.0
    %1382 = vmatprep.subr.mxu0 0.0
    %1383 = vmatpush1.xpose.msra.mxu0 0.0
    %1384 = vmatprep.subr.mxu0 0.0
    %1385 = vmatpush1.xpose.msra.mxu0 0.0
    %1386 = vmatprep.subr.mxu0 0.0
    %1387 = vmatpush1.xpose.msra.mxu0 0.0
    %1388 = vmatprep.subr.mxu0 0.0
    %1389 = vmatpush1.xpose.msra.mxu0 0.0
    %1390 = vmatprep.subr.mxu0 0.0
    %1391 = vmatpush1.xpose.msra.mxu0 0.0
    %1392 = vmatprep.subr.mxu0 0.0
    %1393 = vmatpush1.xpose.msra.mxu0 0.0
    %1394 = vmatprep.subr.mxu0 0.0
    %1395 = vmatpush1.xpose.msra.mxu0 0.0
    %1396 = vmatprep.subr.mxu0 0.0
    %1397 = vmatpush1.xpose.msra.mxu0 0.0
    %1398 = vmatprep.subr.mxu0 0.0
    %1399 = vmatpush1.xpose.msra.mxu0 0.0
    %1400 = vmatprep.subr.mxu0 0.0
    %1401 = vmatpush1.xpose.msra.mxu0 0.0
    %1402 = vmatprep.subr.mxu0 0.0
    %1403 = vmatpush1.xpose.msra.mxu0 0.0
    %1404 = vmatprep.mubr.f32.mxu0 0.0
    %1405 = vmatmul.mubr.f32.gmra.mrb[0].mxu0 %v1336
    %v1406 = vpop.f32.mrb[0].mxu0
    %v1407 = vadd.f32 %v240, %v1406
    %v1408 = vpop.f32.mrb[0].mxu0
    %1409 = vdwg.mxu0
    %1410 = vrot.lane.b32.xlu0 %v348, 112
    %v1411 = vpop.permute.xlu0 %1410
    %1412 = vrot.lane.b32.xlu0 %v431, 112
    %v1413 = vpop.permute.xlu0 %1412
    %v1414 = vsel %vm517, %v1411, 0
    %v1416 = vsel %vm517, %v1413, 0
    %1418 = vmatprep.subr.mxu0 0.0
    %1419 = vmatpush1.xpose.msra.mxu0 %v1416
    %1420 = vmatprep.subr.mxu0 0.0
    %1421 = vmatpush1.xpose.msra.mxu0 0.0
    %1422 = vmatprep.subr.mxu0 0.0
    %1423 = vmatpush1.xpose.msra.mxu0 0.0
    %1424 = vmatprep.subr.mxu0 0.0
    %1425 = vmatpush1.xpose.msra.mxu0 0.0
    %1426 = vmatprep.subr.mxu0 0.0
    %1427 = vmatpush1.xpose.msra.mxu0 0.0
    %1428 = vmatprep.subr.mxu0 0.0
    %1429 = vmatpush1.xpose.msra.mxu0 0.0
    %1430 = vmatprep.subr.mxu0 0.0
    %1431 = vmatpush1.xpose.msra.mxu0 0.0
    %1432 = vmatprep.subr.mxu0 0.0
    %1433 = vmatpush1.xpose.msra.mxu0 0.0
    %1434 = vmatprep.subr.mxu0 0.0
    %1435 = vmatpush1.xpose.msra.mxu0 0.0
    %1436 = vmatprep.subr.mxu0 0.0
    %1437 = vmatpush1.xpose.msra.mxu0 0.0
    %1438 = vmatprep.subr.mxu0 0.0
    %1439 = vmatpush1.xpose.msra.mxu0 0.0
    %1440 = vmatprep.subr.mxu0 0.0
    %1441 = vmatpush1.xpose.msra.mxu0 0.0
    %1442 = vmatprep.subr.mxu0 0.0
    %1443 = vmatpush1.xpose.msra.mxu0 0.0
    %1444 = vmatprep.subr.mxu0 0.0
    %1445 = vmatpush1.xpose.msra.mxu0 0.0
    %1446 = vmatprep.subr.mxu0 0.0
    %1447 = vmatpush1.xpose.msra.mxu0 0.0
    %1448 = vmatprep.subr.mxu0 0.0
    %1449 = vmatpush1.xpose.msra.mxu0 0.0
    %1450 = vmatprep.subr.mxu0 0.0
    %1451 = vmatpush1.xpose.msra.mxu0 0.0
    %1452 = vmatprep.subr.mxu0 0.0
    %1453 = vmatpush1.xpose.msra.mxu0 0.0
    %1454 = vmatprep.subr.mxu0 0.0
    %1455 = vmatpush1.xpose.msra.mxu0 0.0
    %1456 = vmatprep.subr.mxu0 0.0
    %1457 = vmatpush1.xpose.msra.mxu0 0.0
    %1458 = vmatprep.subr.mxu0 0.0
    %1459 = vmatpush1.xpose.msra.mxu0 0.0
    %1460 = vmatprep.subr.mxu0 0.0
    %1461 = vmatpush1.xpose.msra.mxu0 0.0
    %1462 = vmatprep.subr.mxu0 0.0
    %1463 = vmatpush1.xpose.msra.mxu0 0.0
    %1464 = vmatprep.subr.mxu0 0.0
    %1465 = vmatpush1.xpose.msra.mxu0 0.0
    %1466 = vmatprep.subr.mxu0 0.0
    %1467 = vmatpush1.xpose.msra.mxu0 0.0
    %1468 = vmatprep.subr.mxu0 0.0
    %1469 = vmatpush1.xpose.msra.mxu0 0.0
    %1470 = vmatprep.subr.mxu0 0.0
    %1471 = vmatpush1.xpose.msra.mxu0 0.0
    %1472 = vmatprep.subr.mxu0 0.0
    %1473 = vmatpush1.xpose.msra.mxu0 0.0
    %1474 = vmatprep.subr.mxu0 0.0
    %1475 = vmatpush1.xpose.msra.mxu0 0.0
    %1476 = vmatprep.subr.mxu0 0.0
    %1477 = vmatpush1.xpose.msra.mxu0 0.0
    %1478 = vmatprep.subr.mxu0 0.0
    %1479 = vmatpush1.xpose.msra.mxu0 0.0
    %1480 = vmatprep.subr.mxu0 0.0
    %1481 = vmatpush1.xpose.msra.mxu0 0.0
    %1482 = vmatprep.mubr.f32.mxu0 0.0
    %1483 = vmatmul.mubr.f32.gmra.mrb[0].mxu0 %v1414
    %v1484 = vpop.f32.mrb[0].mxu0
    %v1485 = vadd.f32 %v240, %v1484
    %v1486 = vpop.f32.mrb[0].mxu0
    %1487 = vdwg.mxu0
    %v1488 = vsel %vm517, %v1407, -inf
    %1489 = vmax.xlane.f32.xlu0 %v1488
    %v1490 = vpop.xlane.xlu0 %1489
    %v1491 = vsel %vm517, %v1485, -inf
    %1492 = vmax.xlane.f32.xlu0 %v1491
    %v1493 = vpop.xlane.xlu0 %1492
    %v1494 = vsub.f32 %v1407, %v1490
    %v1495 = vsub.f32 %v1485, %v1493
    %v1496 = vmul.f32 %v1494, 1.442695
    %v1497 = vpow.pop %v1496
    %v1498 = vmul.f32 %v1495, 1.442695
    %v1499 = vpow.pop %v1498
    %v1500 = vsel %vm517, %v1497, 0.0
    %1501 = vadd.xlane.f32.xlu0 %v1500
    %v1502 = vpop.xlane.xlu0 %1501
    %v1503 = vsel %vm517, %v1499, 0.0
    %1504 = vadd.xlane.f32.xlu0 %v1503
    %v1505 = vpop.xlane.xlu0 %1504
    %v1506 = vrcp.pop %v1502
    %v1507 = vrcp.pop %v1505
    %v1508 = vmul.f32 %v1497, %v1506
    %v1509 = vmul.f32 %v1499, %v1507
    %1510 = vrot.lane.b32.xlu0 %v505, 112
    %v1511 = vpop.permute.xlu0 %1510
    %v1514 = vsel %vm517, %v1508, 0
    %1516 = vmatprep.subr.mxu0 0.0
    %1517 = vmatpush1.msra.mxu0 %v1511
    %1518 = vmatprep.subr.mxu0 0.0
    %1519 = vmatpush1.msra.mxu0 0.0
    %1520 = vmatprep.subr.mxu0 0.0
    %1521 = vmatpush1.msra.mxu0 0.0
    %1522 = vmatprep.subr.mxu0 0.0
    %1523 = vmatpush1.msra.mxu0 0.0
    %1524 = vmatprep.subr.mxu0 0.0
    %1525 = vmatpush1.msra.mxu0 0.0
    %1526 = vmatprep.subr.mxu0 0.0
    %1527 = vmatpush1.msra.mxu0 0.0
    %1528 = vmatprep.subr.mxu0 0.0
    %1529 = vmatpush1.msra.mxu0 0.0
    %1530 = vmatprep.subr.mxu0 0.0
    %1531 = vmatpush1.msra.mxu0 0.0
    %1532 = vmatprep.subr.mxu0 0.0
    %1533 = vmatpush1.msra.mxu0 0.0
    %1534 = vmatprep.subr.mxu0 0.0
    %1535 = vmatpush1.msra.mxu0 0.0
    %1536 = vmatprep.subr.mxu0 0.0
    %1537 = vmatpush1.msra.mxu0 0.0
    %1538 = vmatprep.subr.mxu0 0.0
    %1539 = vmatpush1.msra.mxu0 0.0
    %1540 = vmatprep.subr.mxu0 0.0
    %1541 = vmatpush1.msra.mxu0 0.0
    %1542 = vmatprep.subr.mxu0 0.0
    %1543 = vmatpush1.msra.mxu0 0.0
    %1544 = vmatprep.subr.mxu0 0.0
    %1545 = vmatpush1.msra.mxu0 0.0
    %1546 = vmatprep.subr.mxu0 0.0
    %1547 = vmatpush1.msra.mxu0 0.0
    %1548 = vmatprep.subr.mxu0 0.0
    %1549 = vmatpush1.msra.mxu0 0.0
    %1550 = vmatprep.subr.mxu0 0.0
    %1551 = vmatpush1.msra.mxu0 0.0
    %1552 = vmatprep.subr.mxu0 0.0
    %1553 = vmatpush1.msra.mxu0 0.0
    %1554 = vmatprep.subr.mxu0 0.0
    %1555 = vmatpush1.msra.mxu0 0.0
    %1556 = vmatprep.subr.mxu0 0.0
    %1557 = vmatpush1.msra.mxu0 0.0
    %1558 = vmatprep.subr.mxu0 0.0
    %1559 = vmatpush1.msra.mxu0 0.0
    %1560 = vmatprep.subr.mxu0 0.0
    %1561 = vmatpush1.msra.mxu0 0.0
    %1562 = vmatprep.subr.mxu0 0.0
    %1563 = vmatpush1.msra.mxu0 0.0
    %1564 = vmatprep.subr.mxu0 0.0
    %1565 = vmatpush1.msra.mxu0 0.0
    %1566 = vmatprep.subr.mxu0 0.0
    %1567 = vmatpush1.msra.mxu0 0.0
    %1568 = vmatprep.subr.mxu0 0.0
    %1569 = vmatpush1.msra.mxu0 0.0
    %1570 = vmatprep.subr.mxu0 0.0
    %1571 = vmatpush1.msra.mxu0 0.0
    %1572 = vmatprep.subr.mxu0 0.0
    %1573 = vmatpush1.msra.mxu0 0.0
    %1574 = vmatprep.subr.mxu0 0.0
    %1575 = vmatpush1.msra.mxu0 0.0
    %1576 = vmatprep.subr.mxu0 0.0
    %1577 = vmatpush1.msra.mxu0 0.0
    %1578 = vmatprep.subr.mxu0 0.0
    %1579 = vmatpush1.msra.mxu0 0.0
    %1580 = vmatprep.mubr.f32.mxu0 0.0
    %1581 = vmatmul.mubr.f32.gmra.mrb[0].mxu0 %v1514
    %v1582 = vpop.f32.mrb[0].mxu0
    %v1583 = vadd.f32 0.0, %v1582
    %v1584 = vpop.f32.mrb[0].mxu0
    %1585 = vdwg.mxu0
    %1586 = vrot.lane.b32.xlu0 %v510, 112
    %v1587 = vpop.permute.xlu0 %1586
    %v1590 = vsel %vm517, %v1509, 0
    %1592 = vmatprep.subr.mxu0 0.0
    %1593 = vmatpush1.msra.mxu0 %v1587
    %1594 = vmatprep.subr.mxu0 0.0
    %1595 = vmatpush1.msra.mxu0 0.0
    %1596 = vmatprep.subr.mxu0 0.0
    %1597 = vmatpush1.msra.mxu0 0.0
    %1598 = vmatprep.subr.mxu0 0.0
    %1599 = vmatpush1.msra.mxu0 0.0
    %1600 = vmatprep.subr.mxu0 0.0
    %1601 = vmatpush1.msra.mxu0 0.0
    %1602 = vmatprep.subr.mxu0 0.0
    %1603 = vmatpush1.msra.mxu0 0.0
    %1604 = vmatprep.subr.mxu0 0.0
    %1605 = vmatpush1.msra.mxu0 0.0
    %1606 = vmatprep.subr.mxu0 0.0
    %1607 = vmatpush1.msra.mxu0 0.0
    %1608 = vmatprep.subr.mxu0 0.0
    %1609 = vmatpush1.msra.mxu0 0.0
    %1610 = vmatprep.subr.mxu0 0.0
    %1611 = vmatpush1.msra.mxu0 0.0
    %1612 = vmatprep.subr.mxu0 0.0
    %1613 = vmatpush1.msra.mxu0 0.0
    %1614 = vmatprep.subr.mxu0 0.0
    %1615 = vmatpush1.msra.mxu0 0.0
    %1616 = vmatprep.subr.mxu0 0.0
    %1617 = vmatpush1.msra.mxu0 0.0
    %1618 = vmatprep.subr.mxu0 0.0
    %1619 = vmatpush1.msra.mxu0 0.0
    %1620 = vmatprep.subr.mxu0 0.0
    %1621 = vmatpush1.msra.mxu0 0.0
    %1622 = vmatprep.subr.mxu0 0.0
    %1623 = vmatpush1.msra.mxu0 0.0
    %1624 = vmatprep.subr.mxu0 0.0
    %1625 = vmatpush1.msra.mxu0 0.0
    %1626 = vmatprep.subr.mxu0 0.0
    %1627 = vmatpush1.msra.mxu0 0.0
    %1628 = vmatprep.subr.mxu0 0.0
    %1629 = vmatpush1.msra.mxu0 0.0
    %1630 = vmatprep.subr.mxu0 0.0
    %1631 = vmatpush1.msra.mxu0 0.0
    %1632 = vmatprep.subr.mxu0 0.0
    %1633 = vmatpush1.msra.mxu0 0.0
    %1634 = vmatprep.subr.mxu0 0.0
    %1635 = vmatpush1.msra.mxu0 0.0
    %1636 = vmatprep.subr.mxu0 0.0
    %1637 = vmatpush1.msra.mxu0 0.0
    %1638 = vmatprep.subr.mxu0 0.0
    %1639 = vmatpush1.msra.mxu0 0.0
    %1640 = vmatprep.subr.mxu0 0.0
    %1641 = vmatpush1.msra.mxu0 0.0
    %1642 = vmatprep.subr.mxu0 0.0
    %1643 = vmatpush1.msra.mxu0 0.0
    %1644 = vmatprep.subr.mxu0 0.0
    %1645 = vmatpush1.msra.mxu0 0.0
    %1646 = vmatprep.subr.mxu0 0.0
    %1647 = vmatpush1.msra.mxu0 0.0
    %1648 = vmatprep.subr.mxu0 0.0
    %1649 = vmatpush1.msra.mxu0 0.0
    %1650 = vmatprep.subr.mxu0 0.0
    %1651 = vmatpush1.msra.mxu0 0.0
    %1652 = vmatprep.subr.mxu0 0.0
    %1653 = vmatpush1.msra.mxu0 0.0
    %1654 = vmatprep.subr.mxu0 0.0
    %1655 = vmatpush1.msra.mxu0 0.0
    %1656 = vmatprep.mubr.f32.mxu0 0.0
    %1657 = vmatmul.mubr.f32.gmra.mrb[0].mxu0 %v1590
    %v1658 = vpop.f32.mrb[0].mxu0
    %v1659 = vadd.f32 0.0, %v1658
    %v1660 = vpop.f32.mrb[0].mxu0
    %1661 = vdwg.mxu0
    %v1663 = vsel %vm517, %v1583, 0
    %v1666 = vsel %vm517, %v1659, 0
    %1668 = vmatprep.subr.mxu0 0.0
    %1669 = vmatpush1.msra.mxu0 %v515
    %1670 = vmatprep.subr.mxu0 0.0
    %1671 = vmatpush1.msra.mxu0 0.0
    %1672 = vmatprep.subr.mxu0 0.0
    %1673 = vmatpush1.msra.mxu0 0.0
    %1674 = vmatprep.subr.mxu0 0.0
    %1675 = vmatpush1.msra.mxu0 0.0
    %1676 = vmatprep.subr.mxu0 0.0
    %1677 = vmatpush1.msra.mxu0 0.0
    %1678 = vmatprep.subr.mxu0 0.0
    %1679 = vmatpush1.msra.mxu0 0.0
    %1680 = vmatprep.subr.mxu0 0.0
    %1681 = vmatpush1.msra.mxu0 0.0
    %1682 = vmatprep.subr.mxu0 0.0
    %1683 = vmatpush1.msra.mxu0 0.0
    %1684 = vmatprep.subr.mxu0 0.0
    %1685 = vmatpush1.msra.mxu0 0.0
    %1686 = vmatprep.subr.mxu0 0.0
    %1687 = vmatpush1.msra.mxu0 0.0
    %1688 = vmatprep.subr.mxu0 0.0
    %1689 = vmatpush1.msra.mxu0 0.0
    %1690 = vmatprep.subr.mxu0 0.0
    %1691 = vmatpush1.msra.mxu0 0.0
    %1692 = vmatprep.subr.mxu0 0.0
    %1693 = vmatpush1.msra.mxu0 0.0
    %1694 = vmatprep.subr.mxu0 0.0
    %1695 = vmatpush1.msra.mxu0 0.0
    %1696 = vmatprep.subr.mxu0 0.0
    %1697 = vmatpush1.msra.mxu0 0.0
    %1698 = vmatprep.subr.mxu0 0.0
    %1699 = vmatpush1.msra.mxu0 0.0
    %1700 = vmatprep.subr.mxu0 0.0
    %1701 = vmatpush1.msra.mxu0 0.0
    %1702 = vmatprep.subr.mxu0 0.0
    %1703 = vmatpush1.msra.mxu0 0.0
    %1704 = vmatprep.subr.mxu0 0.0
    %1705 = vmatpush1.msra.mxu0 0.0
    %1706 = vmatprep.subr.mxu0 0.0
    %1707 = vmatpush1.msra.mxu0 0.0
    %1708 = vmatprep.subr.mxu0 0.0
    %1709 = vmatpush1.msra.mxu0 0.0
    %1710 = vmatprep.subr.mxu0 0.0
    %1711 = vmatpush1.msra.mxu0 0.0
    %1712 = vmatprep.subr.mxu0 0.0
    %1713 = vmatpush1.msra.mxu0 0.0
    %1714 = vmatprep.subr.mxu0 0.0
    %1715 = vmatpush1.msra.mxu0 0.0
    %1716 = vmatprep.subr.mxu0 0.0
    %1717 = vmatpush1.msra.mxu0 0.0
    %1718 = vmatprep.subr.mxu0 0.0
    %1719 = vmatpush1.msra.mxu0 0.0
    %1720 = vmatprep.subr.mxu0 0.0
    %1721 = vmatpush1.msra.mxu0 0.0
    %1722 = vmatprep.subr.mxu0 0.0
    %1723 = vmatpush1.msra.mxu0 0.0
    %1724 = vmatprep.subr.mxu0 0.0
    %1725 = vmatpush1.msra.mxu0 0.0
    %1726 = vmatprep.subr.mxu0 0.0
    %1727 = vmatpush1.msra.mxu0 0.0
    %1728 = vmatprep.subr.mxu0 0.0
    %1729 = vmatpush1.msra.mxu0 0.0
    %1730 = vmatprep.subr.mxu0 0.0
    %1731 = vmatpush1.msra.mxu0 0.0
    %1732 = vmatprep.mubr.f32.mxu0 0.0
    %1733 = vmatmul.mubr.f32.gmra.mrb[0].mxu0 %v1663
    %v1734 = vpop.f32.mrb[0].mxu0
    %v1735 = vadd.f32 0.0, %v1734
    %v1736 = vpop.f32.mrb[0].mxu0
    %1737 = vmatprep.mubr.f32.mxu0 0.0
    %1738 = vmatmul.mubr.f32.gmra.mrb[0].mxu0 %v1666
    %v1739 = vpop.f32.mrb[0].mxu0
    %v1740 = vadd.f32 0.0, %v1739
    %v1741 = vpop.f32.mrb[0].mxu0
    %1742 = vdwg.mxu0
    %v1743 = vadd.f32 %v1324, %v1735
    %v1744 = vadd.f32 %v1329, %v1740
    %1745 = vrot.lane.b32.xlu0 %v347, 104
    %v1746 = vpop.permute.xlu0 %1745
    %1747 = vrot.lane.b32.xlu0 %v426, 104
    %v1748 = vpop.permute.xlu0 %1747
    %v1749 = vsel %vm517, %v1746, 0
    %v1751 = vsel %vm517, %v1748, 0
    %1753 = vmatprep.subr.mxu0 0.0
    %1754 = vmatpush1.xpose.msra.mxu0 %v1751
    %1755 = vmatprep.subr.mxu0 0.0
    %1756 = vmatpush1.xpose.msra.mxu0 0.0
    %1757 = vmatprep.subr.mxu0 0.0
    %1758 = vmatpush1.xpose.msra.mxu0 0.0
    %1759 = vmatprep.subr.mxu0 0.0
    %1760 = vmatpush1.xpose.msra.mxu0 0.0
    %1761 = vmatprep.subr.mxu0 0.0
    %1762 = vmatpush1.xpose.msra.mxu0 0.0
    %1763 = vmatprep.subr.mxu0 0.0
    %1764 = vmatpush1.xpose.msra.mxu0 0.0
    %1765 = vmatprep.subr.mxu0 0.0
    %1766 = vmatpush1.xpose.msra.mxu0 0.0
    %1767 = vmatprep.subr.mxu0 0.0
    %1768 = vmatpush1.xpose.msra.mxu0 0.0
    %1769 = vmatprep.subr.mxu0 0.0
    %1770 = vmatpush1.xpose.msra.mxu0 0.0
    %1771 = vmatprep.subr.mxu0 0.0
    %1772 = vmatpush1.xpose.msra.mxu0 0.0
    %1773 = vmatprep.subr.mxu0 0.0
    %1774 = vmatpush1.xpose.msra.mxu0 0.0
    %1775 = vmatprep.subr.mxu0 0.0
    %1776 = vmatpush1.xpose.msra.mxu0 0.0
    %1777 = vmatprep.subr.mxu0 0.0
    %1778 = vmatpush1.xpose.msra.mxu0 0.0
    %1779 = vmatprep.subr.mxu0 0.0
    %1780 = vmatpush1.xpose.msra.mxu0 0.0
    %1781 = vmatprep.subr.mxu0 0.0
    %1782 = vmatpush1.xpose.msra.mxu0 0.0
    %1783 = vmatprep.subr.mxu0 0.0
    %1784 = vmatpush1.xpose.msra.mxu0 0.0
    %1785 = vmatprep.subr.mxu0 0.0
    %1786 = vmatpush1.xpose.msra.mxu0 0.0
    %1787 = vmatprep.subr.mxu0 0.0
    %1788 = vmatpush1.xpose.msra.mxu0 0.0
    %1789 = vmatprep.subr.mxu0 0.0
    %1790 = vmatpush1.xpose.msra.mxu0 0.0
    %1791 = vmatprep.subr.mxu0 0.0
    %1792 = vmatpush1.xpose.msra.mxu0 0.0
    %1793 = vmatprep.subr.mxu0 0.0
    %1794 = vmatpush1.xpose.msra.mxu0 0.0
    %1795 = vmatprep.subr.mxu0 0.0
    %1796 = vmatpush1.xpose.msra.mxu0 0.0
    %1797 = vmatprep.subr.mxu0 0.0
    %1798 = vmatpush1.xpose.msra.mxu0 0.0
    %1799 = vmatprep.subr.mxu0 0.0
    %1800 = vmatpush1.xpose.msra.mxu0 0.0
    %1801 = vmatprep.subr.mxu0 0.0
    %1802 = vmatpush1.xpose.msra.mxu0 0.0
    %1803 = vmatprep.subr.mxu0 0.0
    %1804 = vmatpush1.xpose.msra.mxu0 0.0
    %1805 = vmatprep.subr.mxu0 0.0
    %1806 = vmatpush1.xpose.msra.mxu0 0.0
    %1807 = vmatprep.subr.mxu0 0.0
    %1808 = vmatpush1.xpose.msra.mxu0 0.0
    %1809 = vmatprep.subr.mxu0 0.0
    %1810 = vmatpush1.xpose.msra.mxu0 0.0
    %1811 = vmatprep.subr.mxu0 0.0
    %1812 = vmatpush1.xpose.msra.mxu0 0.0
    %1813 = vmatprep.subr.mxu0 0.0
    %1814 = vmatpush1.xpose.msra.mxu0 0.0
    %1815 = vmatprep.subr.mxu0 0.0
    %1816 = vmatpush1.xpose.msra.mxu0 0.0
    %1817 = vmatprep.mubr.f32.mxu0 0.0
    %1818 = vmatmul.mubr.f32.gmra.mrb[0].mxu0 %v1749
    %v1819 = vpop.f32.mrb[0].mxu0
    %v1820 = vadd.f32 %v240, %v1819
    %v1821 = vpop.f32.mrb[0].mxu0
    %1822 = vdwg.mxu0
    %1823 = vrot.lane.b32.xlu0 %v348, 104
    %v1824 = vpop.permute.xlu0 %1823
    %1825 = vrot.lane.b32.xlu0 %v431, 104
    %v1826 = vpop.permute.xlu0 %1825
    %v1827 = vsel %vm517, %v1824, 0
    %v1829 = vsel %vm517, %v1826, 0
    %1831 = vmatprep.subr.mxu0 0.0
    %1832 = vmatpush1.xpose.msra.mxu0 %v1829
    %1833 = vmatprep.subr.mxu0 0.0
    %1834 = vmatpush1.xpose.msra.mxu0 0.0
    %1835 = vmatprep.subr.mxu0 0.0
    %1836 = vmatpush1.xpose.msra.mxu0 0.0
    %1837 = vmatprep.subr.mxu0 0.0
    %1838 = vmatpush1.xpose.msra.mxu0 0.0
    %1839 = vmatprep.subr.mxu0 0.0
    %1840 = vmatpush1.xpose.msra.mxu0 0.0
    %1841 = vmatprep.subr.mxu0 0.0
    %1842 = vmatpush1.xpose.msra.mxu0 0.0
    %1843 = vmatprep.subr.mxu0 0.0
    %1844 = vmatpush1.xpose.msra.mxu0 0.0
    %1845 = vmatprep.subr.mxu0 0.0
    %1846 = vmatpush1.xpose.msra.mxu0 0.0
    %1847 = vmatprep.subr.mxu0 0.0
    %1848 = vmatpush1.xpose.msra.mxu0 0.0
    %1849 = vmatprep.subr.mxu0 0.0
    %1850 = vmatpush1.xpose.msra.mxu0 0.0
    %1851 = vmatprep.subr.mxu0 0.0
    %1852 = vmatpush1.xpose.msra.mxu0 0.0
    %1853 = vmatprep.subr.mxu0 0.0
    %1854 = vmatpush1.xpose.msra.mxu0 0.0
    %1855 = vmatprep.subr.mxu0 0.0
    %1856 = vmatpush1.xpose.msra.mxu0 0.0
    %1857 = vmatprep.subr.mxu0 0.0
    %1858 = vmatpush1.xpose.msra.mxu0 0.0
    %1859 = vmatprep.subr.mxu0 0.0
    %1860 = vmatpush1.xpose.msra.mxu0 0.0
    %1861 = vmatprep.subr.mxu0 0.0
    %1862 = vmatpush1.xpose.msra.mxu0 0.0
    %1863 = vmatprep.subr.mxu0 0.0
    %1864 = vmatpush1.xpose.msra.mxu0 0.0
    %1865 = vmatprep.subr.mxu0 0.0
    %1866 = vmatpush1.xpose.msra.mxu0 0.0
    %1867 = vmatprep.subr.mxu0 0.0
    %1868 = vmatpush1.xpose.msra.mxu0 0.0
    %1869 = vmatprep.subr.mxu0 0.0
    %1870 = vmatpush1.xpose.msra.mxu0 0.0
    %1871 = vmatprep.subr.mxu0 0.0
    %1872 = vmatpush1.xpose.msra.mxu0 0.0
    %1873 = vmatprep.subr.mxu0 0.0
    %1874 = vmatpush1.xpose.msra.mxu0 0.0
    %1875 = vmatprep.subr.mxu0 0.0
    %1876 = vmatpush1.xpose.msra.mxu0 0.0
    %1877 = vmatprep.subr.mxu0 0.0
    %1878 = vmatpush1.xpose.msra.mxu0 0.0
    %1879 = vmatprep.subr.mxu0 0.0
    %1880 = vmatpush1.xpose.msra.mxu0 0.0
    %1881 = vmatprep.subr.mxu0 0.0
    %1882 = vmatpush1.xpose.msra.mxu0 0.0
    %1883 = vmatprep.subr.mxu0 0.0
    %1884 = vmatpush1.xpose.msra.mxu0 0.0
    %1885 = vmatprep.subr.mxu0 0.0
    %1886 = vmatpush1.xpose.msra.mxu0 0.0
    %1887 = vmatprep.subr.mxu0 0.0
    %1888 = vmatpush1.xpose.msra.mxu0 0.0
    %1889 = vmatprep.subr.mxu0 0.0
    %1890 = vmatpush1.xpose.msra.mxu0 0.0
    %1891 = vmatprep.subr.mxu0 0.0
    %1892 = vmatpush1.xpose.msra.mxu0 0.0
    %1893 = vmatprep.subr.mxu0 0.0
    %1894 = vmatpush1.xpose.msra.mxu0 0.0
    %1895 = vmatprep.mubr.f32.mxu0 0.0
    %1896 = vmatmul.mubr.f32.gmra.mrb[0].mxu0 %v1827
    %v1897 = vpop.f32.mrb[0].mxu0
    %v1898 = vadd.f32 %v240, %v1897
    %v1899 = vpop.f32.mrb[0].mxu0
    %1900 = vdwg.mxu0
    %v1901 = vsel %vm517, %v1820, -inf
    %1902 = vmax.xlane.f32.xlu0 %v1901
    %v1903 = vpop.xlane.xlu0 %1902
    %v1904 = vsel %vm517, %v1898, -inf
    %1905 = vmax.xlane.f32.xlu0 %v1904
    %v1906 = vpop.xlane.xlu0 %1905
    %v1907 = vsub.f32 %v1820, %v1903
    %v1908 = vsub.f32 %v1898, %v1906
    %v1909 = vmul.f32 %v1907, 1.442695
    %v1910 = vpow.pop %v1909
    %v1911 = vmul.f32 %v1908, 1.442695
    %v1912 = vpow.pop %v1911
    %v1913 = vsel %vm517, %v1910, 0.0
    %1914 = vadd.xlane.f32.xlu0 %v1913
    %v1915 = vpop.xlane.xlu0 %1914
    %v1916 = vsel %vm517, %v1912, 0.0
    %1917 = vadd.xlane.f32.xlu0 %v1916
    %v1918 = vpop.xlane.xlu0 %1917
    %v1919 = vrcp.pop %v1915
    %v1920 = vrcp.pop %v1918
    %v1921 = vmul.f32 %v1910, %v1919
    %v1922 = vmul.f32 %v1912, %v1920
    %1923 = vrot.lane.b32.xlu0 %v505, 104
    %v1924 = vpop.permute.xlu0 %1923
    %v1927 = vsel %vm517, %v1921, 0
    %1929 = vmatprep.subr.mxu0 0.0
    %1930 = vmatpush1.msra.mxu0 %v1924
    %1931 = vmatprep.subr.mxu0 0.0
    %1932 = vmatpush1.msra.mxu0 0.0
    %1933 = vmatprep.subr.mxu0 0.0
    %1934 = vmatpush1.msra.mxu0 0.0
    %1935 = vmatprep.subr.mxu0 0.0
    %1936 = vmatpush1.msra.mxu0 0.0
    %1937 = vmatprep.subr.mxu0 0.0
    %1938 = vmatpush1.msra.mxu0 0.0
    %1939 = vmatprep.subr.mxu0 0.0
    %1940 = vmatpush1.msra.mxu0 0.0
    %1941 = vmatprep.subr.mxu0 0.0
    %1942 = vmatpush1.msra.mxu0 0.0
    %1943 = vmatprep.subr.mxu0 0.0
    %1944 = vmatpush1.msra.mxu0 0.0
    %1945 = vmatprep.subr.mxu0 0.0
    %1946 = vmatpush1.msra.mxu0 0.0
    %1947 = vmatprep.subr.mxu0 0.0
    %1948 = vmatpush1.msra.mxu0 0.0
    %1949 = vmatprep.subr.mxu0 0.0
    %1950 = vmatpush1.msra.mxu0 0.0
    %1951 = vmatprep.subr.mxu0 0.0
    %1952 = vmatpush1.msra.mxu0 0.0
    %1953 = vmatprep.subr.mxu0 0.0
    %1954 = vmatpush1.msra.mxu0 0.0
    %1955 = vmatprep.subr.mxu0 0.0
    %1956 = vmatpush1.msra.mxu0 0.0
    %1957 = vmatprep.subr.mxu0 0.0
    %1958 = vmatpush1.msra.mxu0 0.0
    %1959 = vmatprep.subr.mxu0 0.0
    %1960 = vmatpush1.msra.mxu0 0.0
    %1961 = vmatprep.subr.mxu0 0.0
    %1962 = vmatpush1.msra.mxu0 0.0
    %1963 = vmatprep.subr.mxu0 0.0
    %1964 = vmatpush1.msra.mxu0 0.0
    %1965 = vmatprep.subr.mxu0 0.0
    %1966 = vmatpush1.msra.mxu0 0.0
    %1967 = vmatprep.subr.mxu0 0.0
    %1968 = vmatpush1.msra.mxu0 0.0
    %1969 = vmatprep.subr.mxu0 0.0
    %1970 = vmatpush1.msra.mxu0 0.0
    %1971 = vmatprep.subr.mxu0 0.0
    %1972 = vmatpush1.msra.mxu0 0.0
    %1973 = vmatprep.subr.mxu0 0.0
    %1974 = vmatpush1.msra.mxu0 0.0
    %1975 = vmatprep.subr.mxu0 0.0
    %1976 = vmatpush1.msra.mxu0 0.0
    %1977 = vmatprep.subr.mxu0 0.0
    %1978 = vmatpush1.msra.mxu0 0.0
    %1979 = vmatprep.subr.mxu0 0.0
    %1980 = vmatpush1.msra.mxu0 0.0
    %1981 = vmatprep.subr.mxu0 0.0
    %1982 = vmatpush1.msra.mxu0 0.0
    %1983 = vmatprep.subr.mxu0 0.0
    %1984 = vmatpush1.msra.mxu0 0.0
    %1985 = vmatprep.subr.mxu0 0.0
    %1986 = vmatpush1.msra.mxu0 0.0
    %1987 = vmatprep.subr.mxu0 0.0
    %1988 = vmatpush1.msra.mxu0 0.0
    %1989 = vmatprep.subr.mxu0 0.0
    %1990 = vmatpush1.msra.mxu0 0.0
    %1991 = vmatprep.subr.mxu0 0.0
    %1992 = vmatpush1.msra.mxu0 0.0
    %1993 = vmatprep.mubr.f32.mxu0 0.0
    %1994 = vmatmul.mubr.f32.gmra.mrb[0].mxu0 %v1927
    %v1995 = vpop.f32.mrb[0].mxu0
    %v1996 = vadd.f32 0.0, %v1995
    %v1997 = vpop.f32.mrb[0].mxu0
    %1998 = vdwg.mxu0
    %1999 = vrot.lane.b32.xlu0 %v510, 104
    %v2000 = vpop.permute.xlu0 %1999
    %v2003 = vsel %vm517, %v1922, 0
    %2005 = vmatprep.subr.mxu0 0.0
    %2006 = vmatpush1.msra.mxu0 %v2000
    %2007 = vmatprep.subr.mxu0 0.0
    %2008 = vmatpush1.msra.mxu0 0.0
    %2009 = vmatprep.subr.mxu0 0.0
    %2010 = vmatpush1.msra.mxu0 0.0
    %2011 = vmatprep.subr.mxu0 0.0
    %2012 = vmatpush1.msra.mxu0 0.0
    %2013 = vmatprep.subr.mxu0 0.0
    %2014 = vmatpush1.msra.mxu0 0.0
    %2015 = vmatprep.subr.mxu0 0.0
    %2016 = vmatpush1.msra.mxu0 0.0
    %2017 = vmatprep.subr.mxu0 0.0
    %2018 = vmatpush1.msra.mxu0 0.0
    %2019 = vmatprep.subr.mxu0 0.0
    %2020 = vmatpush1.msra.mxu0 0.0
    %2021 = vmatprep.subr.mxu0 0.0
    %2022 = vmatpush1.msra.mxu0 0.0
    %2023 = vmatprep.subr.mxu0 0.0
    %2024 = vmatpush1.msra.mxu0 0.0
    %2025 = vmatprep.subr.mxu0 0.0
    %2026 = vmatpush1.msra.mxu0 0.0
    %2027 = vmatprep.subr.mxu0 0.0
    %2028 = vmatpush1.msra.mxu0 0.0
    %2029 = vmatprep.subr.mxu0 0.0
    %2030 = vmatpush1.msra.mxu0 0.0
    %2031 = vmatprep.subr.mxu0 0.0
    %2032 = vmatpush1.msra.mxu0 0.0
    %2033 = vmatprep.subr.mxu0 0.0
    %2034 = vmatpush1.msra.mxu0 0.0
    %2035 = vmatprep.subr.mxu0 0.0
    %2036 = vmatpush1.msra.mxu0 0.0
    %2037 = vmatprep.subr.mxu0 0.0
    %2038 = vmatpush1.msra.mxu0 0.0
    %2039 = vmatprep.subr.mxu0 0.0
    %2040 = vmatpush1.msra.mxu0 0.0
    %2041 = vmatprep.subr.mxu0 0.0
    %2042 = vmatpush1.msra.mxu0 0.0
    %2043 = vmatprep.subr.mxu0 0.0
    %2044 = vmatpush1.msra.mxu0 0.0
    %2045 = vmatprep.subr.mxu0 0.0
    %2046 = vmatpush1.msra.mxu0 0.0
    %2047 = vmatprep.subr.mxu0 0.0
    %2048 = vmatpush1.msra.mxu0 0.0
    %2049 = vmatprep.subr.mxu0 0.0
    %2050 = vmatpush1.msra.mxu0 0.0
    %2051 = vmatprep.subr.mxu0 0.0
    %2052 = vmatpush1.msra.mxu0 0.0
    %2053 = vmatprep.subr.mxu0 0.0
    %2054 = vmatpush1.msra.mxu0 0.0
    %2055 = vmatprep.subr.mxu0 0.0
    %2056 = vmatpush1.msra.mxu0 0.0
    %2057 = vmatprep.subr.mxu0 0.0
    %2058 = vmatpush1.msra.mxu0 0.0
    %2059 = vmatprep.subr.mxu0 0.0
    %2060 = vmatpush1.msra.mxu0 0.0
    %2061 = vmatprep.subr.mxu0 0.0
    %2062 = vmatpush1.msra.mxu0 0.0
    %2063 = vmatprep.subr.mxu0 0.0
    %2064 = vmatpush1.msra.mxu0 0.0
    %2065 = vmatprep.subr.mxu0 0.0
    %2066 = vmatpush1.msra.mxu0 0.0
    %2067 = vmatprep.subr.mxu0 0.0
    %2068 = vmatpush1.msra.mxu0 0.0
    %2069 = vmatprep.mubr.f32.mxu0 0.0
    %2070 = vmatmul.mubr.f32.gmra.mrb[0].mxu0 %v2003
    %v2071 = vpop.f32.mrb[0].mxu0
    %v2072 = vadd.f32 0.0, %v2071
    %v2073 = vpop.f32.mrb[0].mxu0
    %2074 = vdwg.mxu0
    %v2076 = vsel %vm517, %v1996, 0
    %v2079 = vsel %vm517, %v2072, 0
    %2081 = vmatprep.subr.mxu0 0.0
    %2082 = vmatpush1.msra.mxu0 %v516
    %2083 = vmatprep.subr.mxu0 0.0
    %2084 = vmatpush1.msra.mxu0 0.0
    %2085 = vmatprep.subr.mxu0 0.0
    %2086 = vmatpush1.msra.mxu0 0.0
    %2087 = vmatprep.subr.mxu0 0.0
    %2088 = vmatpush1.msra.mxu0 0.0
    %2089 = vmatprep.subr.mxu0 0.0
    %2090 = vmatpush1.msra.mxu0 0.0
    %2091 = vmatprep.subr.mxu0 0.0
    %2092 = vmatpush1.msra.mxu0 0.0
    %2093 = vmatprep.subr.mxu0 0.0
    %2094 = vmatpush1.msra.mxu0 0.0
    %2095 = vmatprep.subr.mxu0 0.0
    %2096 = vmatpush1.msra.mxu0 0.0
    %2097 = vmatprep.subr.mxu0 0.0
    %2098 = vmatpush1.msra.mxu0 0.0
    %2099 = vmatprep.subr.mxu0 0.0
    %2100 = vmatpush1.msra.mxu0 0.0
    %2101 = vmatprep.subr.mxu0 0.0
    %2102 = vmatpush1.msra.mxu0 0.0
    %2103 = vmatprep.subr.mxu0 0.0
    %2104 = vmatpush1.msra.mxu0 0.0
    %2105 = vmatprep.subr.mxu0 0.0
    %2106 = vmatpush1.msra.mxu0 0.0
    %2107 = vmatprep.subr.mxu0 0.0
    %2108 = vmatpush1.msra.mxu0 0.0
    %2109 = vmatprep.subr.mxu0 0.0
    %2110 = vmatpush1.msra.mxu0 0.0
    %2111 = vmatprep.subr.mxu0 0.0
    %2112 = vmatpush1.msra.mxu0 0.0
    %2113 = vmatprep.subr.mxu0 0.0
    %2114 = vmatpush1.msra.mxu0 0.0
    %2115 = vmatprep.subr.mxu0 0.0
    %2116 = vmatpush1.msra.mxu0 0.0
    %2117 = vmatprep.subr.mxu0 0.0
    %2118 = vmatpush1.msra.mxu0 0.0
    %2119 = vmatprep.subr.mxu0 0.0
    %2120 = vmatpush1.msra.mxu0 0.0
    %2121 = vmatprep.subr.mxu0 0.0
    %2122 = vmatpush1.msra.mxu0 0.0
    %2123 = vmatprep.subr.mxu0 0.0
    %2124 = vmatpush1.msra.mxu0 0.0
    %2125 = vmatprep.subr.mxu0 0.0
    %2126 = vmatpush1.msra.mxu0 0.0
    %2127 = vmatprep.subr.mxu0 0.0
    %2128 = vmatpush1.msra.mxu0 0.0
    %2129 = vmatprep.subr.mxu0 0.0
    %2130 = vmatpush1.msra.mxu0 0.0
    %2131 = vmatprep.subr.mxu0 0.0
    %2132 = vmatpush1.msra.mxu0 0.0
    %2133 = vmatprep.subr.mxu0 0.0
    %2134 = vmatpush1.msra.mxu0 0.0
    %2135 = vmatprep.subr.mxu0 0.0
    %2136 = vmatpush1.msra.mxu0 0.0
    %2137 = vmatprep.subr.mxu0 0.0
    %2138 = vmatpush1.msra.mxu0 0.0
    %2139 = vmatprep.subr.mxu0 0.0
    %2140 = vmatpush1.msra.mxu0 0.0
    %2141 = vmatprep.subr.mxu0 0.0
    %2142 = vmatpush1.msra.mxu0 0.0
    %2143 = vmatprep.subr.mxu0 0.0
    %2144 = vmatpush1.msra.mxu0 0.0
    %2145 = vmatprep.mubr.f32.mxu0 0.0
    %2146 = vmatmul.mubr.f32.gmra.mrb[0].mxu0 %v2076
    %v2147 = vpop.f32.mrb[0].mxu0
    %v2148 = vadd.f32 0.0, %v2147
    %v2149 = vpop.f32.mrb[0].mxu0
    %2150 = vmatprep.mubr.f32.mxu0 0.0
    %2151 = vmatmul.mubr.f32.gmra.mrb[0].mxu0 %v2079
    %v2152 = vpop.f32.mrb[0].mxu0
    %v2153 = vadd.f32 0.0, %v2152
    %v2154 = vpop.f32.mrb[0].mxu0
    %2155 = vdwg.mxu0
    %v2156 = vadd.f32 %v1743, %v2148
    %v2157 = vadd.f32 %v1744, %v2153
    %v2158 = vadd.f32 %v2156, %v227
    %v2159 = vadd.f32 %v2157, %v228
    %v2160 = vsel %vm265, %v2158, 0.0
    %2161 = vadd.xlane.f32.xlu0 %v2160
    %v2162 = vpop.xlane.xlu0 %2161
    %v2163 = vsel %vm265, %v2159, 0.0
    %2164 = vadd.xlane.f32.xlu0 %v2163
    %v2165 = vpop.xlane.xlu0 %2164
    %v2166 = vrcp.pop 32.0
    %v2167 = vmul.f32 %v2162, %v2166
    %v2168 = vmul.f32 %v2165, %v2166
    %v2169 = vsub.f32 %v2158, %v2167
    %v2170 = vsub.f32 %v2159, %v2168
    %v2171 = vmul.f32 %v2169, %v2169
    %v2172 = vmul.f32 %v2170, %v2170
    %v2173 = vsel %vm265, %v2171, 0.0
    %2174 = vadd.xlane.f32.xlu0 %v2173
    %v2175 = vpop.xlane.xlu0 %2174
    %v2176 = vsel %vm265, %v2172, 0.0
    %2177 = vadd.xlane.f32.xlu0 %v2176
    %v2178 = vpop.xlane.xlu0 %2177
    %v2179 = vmul.f32 %v2175, %v2166
    %v2180 = vmul.f32 %v2178, %v2166
    %v2181 = vadd.f32 %v2179, 1e-05
    %v2182 = vadd.f32 %v2180, 1e-05
    %v2183 = vrsqrt.pop %v2181
    %v2184 = vrsqrt.pop %v2182
    %v2185 = vmul.f32 %v2169, %v2183
    %v2186 = vmul.f32 %v2170, %v2184
    %v2187 = vld [vmem:[#allocation10] sm:$0x1]
    %v2189 = vlaneseq
    %v2190 = vshrl.u32 %v2189, 7
    %v2191 = vsub.s32 0, %v2190
    %v2192 = vrot.slane %v2187, %v2191
    %v2194 = vmul.f32 %v2185, %v2192
    %v2195 = vmul.f32 %v2186, %v2192
    %v2196 = vld [vmem:[#allocation11] sm:$0x1]
    %v2198 = vlaneseq
    %v2199 = vshrl.u32 %v2198, 7
    %v2200 = vsub.s32 0, %v2199
    %v2201 = vrot.slane %v2196, %v2200
    %v2203 = vadd.f32 %v2194, %v2201
    %v2204 = vadd.f32 %v2195, %v2201
    %v2205 = vld [vmem:[%s10] sm:$0xff]
    %v2206 = vld [vmem:[%s10 + $0x8] sm:$0xff]
    %v2207 = vld [vmem:[%s10 + $0x10] sm:$0xff]
    %v2208 = vld [vmem:[%s10 + $0x18] sm:$0xff]
    %v2210 = vsel %vm265, %v2203, 0
    %v2213 = vsel %vm265, %v2204, 0
    %2215 = vmatprep.subr.mxu0 0.0
    %2216 = vmatpush1.msra.mxu0 %v2205
    %2217 = vmatprep.subr.mxu0 0.0
    %2218 = vmatpush1.msra.mxu0 %v2206
    %2219 = vmatprep.subr.mxu0 0.0
    %2220 = vmatpush1.msra.mxu0 %v2207
    %2221 = vmatprep.subr.mxu0 0.0
    %2222 = vmatpush1.msra.mxu0 %v2208
    %2223 = vmatprep.subr.mxu0 0.0
    %2224 = vmatpush1.msra.mxu0 0.0
    %2225 = vmatprep.subr.mxu0 0.0
    %2226 = vmatpush1.msra.mxu0 0.0
    %2227 = vmatprep.subr.mxu0 0.0
    %2228 = vmatpush1.msra.mxu0 0.0
    %2229 = vmatprep.subr.mxu0 0.0
    %2230 = vmatpush1.msra.mxu0 0.0
    %2231 = vmatprep.subr.mxu0 0.0
    %2232 = vmatpush1.msra.mxu0 0.0
    %2233 = vmatprep.subr.mxu0 0.0
    %2234 = vmatpush1.msra.mxu0 0.0
    %2235 = vmatprep.subr.mxu0 0.0
    %2236 = vmatpush1.msra.mxu0 0.0
    %2237 = vmatprep.subr.mxu0 0.0
    %2238 = vmatpush1.msra.mxu0 0.0
    %2239 = vmatprep.subr.mxu0 0.0
    %2240 = vmatpush1.msra.mxu0 0.0
    %2241 = vmatprep.subr.mxu0 0.0
    %2242 = vmatpush1.msra.mxu0 0.0
    %2243 = vmatprep.subr.mxu0 0.0
    %2244 = vmatpush1.msra.mxu0 0.0
    %2245 = vmatprep.subr.mxu0 0.0
    %2246 = vmatpush1.msra.mxu0 0.0
    %2247 = vmatprep.subr.mxu0 0.0
    %2248 = vmatpush1.msra.mxu0 0.0
    %2249 = vmatprep.subr.mxu0 0.0
    %2250 = vmatpush1.msra.mxu0 0.0
    %2251 = vmatprep.subr.mxu0 0.0
    %2252 = vmatpush1.msra.mxu0 0.0
    %2253 = vmatprep.subr.mxu0 0.0
    %2254 = vmatpush1.msra.mxu0 0.0
    %2255 = vmatprep.subr.mxu0 0.0
    %2256 = vmatpush1.msra.mxu0 0.0
    %2257 = vmatprep.subr.mxu0 0.0
    %2258 = vmatpush1.msra.mxu0 0.0
    %2259 = vmatprep.subr.mxu0 0.0
    %2260 = vmatpush1.msra.mxu0 0.0
    %2261 = vmatprep.subr.mxu0 0.0
    %2262 = vmatpush1.msra.mxu0 0.0
    %2263 = vmatprep.subr.mxu0 0.0
    %2264 = vmatpush1.msra.mxu0 0.0
    %2265 = vmatprep.subr.mxu0 0.0
    %2266 = vmatpush1.msra.mxu0 0.0
    %2267 = vmatprep.subr.mxu0 0.0
    %2268 = vmatpush1.msra.mxu0 0.0
    %2269 = vmatprep.subr.mxu0 0.0
    %2270 = vmatpush1.msra.mxu0 0.0
    %2271 = vmatprep.subr.mxu0 0.0
    %2272 = vmatpush1.msra.mxu0 0.0
    %2273 = vmatprep.subr.mxu0 0.0
    %2274 = vmatpush1.msra.mxu0 0.0
    %2275 = vmatprep.subr.mxu0 0.0
    %2276 = vmatpush1.msra.mxu0 0.0
    %2277 = vmatprep.subr.mxu0 0.0
    %2278 = vmatpush1.msra.mxu0 0.0
    %2279 = vmatprep.mubr.f32.mxu0 0.0
    %2280 = vmatmul.mubr.f32.gmra.mrb[0].mxu0 %v2210
    %v2281 = vpop.f32.mrb[0].mxu0
    %v2282 = vadd.f32 0.0, %v2281
    %v2283 = vpop.f32.mrb[0].mxu0
    %2284 = vmatprep.mubr.f32.mxu0 0.0
    %2285 = vmatmul.mubr.f32.gmra.mrb[0].mxu0 %v2213
    %v2286 = vpop.f32.mrb[0].mxu0
    %v2287 = vadd.f32 0.0, %v2286
    %v2288 = vpop.f32.mrb[0].mxu0
    %2289 = vdwg.mxu0
    %v2290 = vmul.f32 %v2282, 0.35355338
    %v2291 = vmul.f32 %v2287, 0.35355338
    %v2292 = vld [vmem:[#allocation13] sm:$0xff]
    %v2293 = vld [vmem:[#allocation13 + $0x8] sm:$0xff]
    %v2294 = vld [vmem:[#allocation13 + $0x10] sm:$0xff]
    %v2295 = vld [vmem:[#allocation13 + $0x18] sm:$0xff]
    %v2297 = vsel %vm265, %v231, 0
    %v2300 = vsel %vm265, %v232, 0
    %v2303 = vsel %vm265, %v233, 0
    %v2306 = vsel %vm265, %v234, 0
    %2308 = vmatprep.subr.mxu0 0.0
    %2309 = vmatpush1.msra.mxu0 %v2292
    %2310 = vmatprep.subr.mxu0 0.0
    %2311 = vmatpush1.msra.mxu0 %v2293
    %2312 = vmatprep.subr.mxu0 0.0
    %2313 = vmatpush1.msra.mxu0 %v2294
    %2314 = vmatprep.subr.mxu0 0.0
    %2315 = vmatpush1.msra.mxu0 %v2295
    %2316 = vmatprep.subr.mxu0 0.0
    %2317 = vmatpush1.msra.mxu0 0.0
    %2318 = vmatprep.subr.mxu0 0.0
    %2319 = vmatpush1.msra.mxu0 0.0
    %2320 = vmatprep.subr.mxu0 0.0
    %2321 = vmatpush1.msra.mxu0 0.0
    %2322 = vmatprep.subr.mxu0 0.0
    %2323 = vmatpush1.msra.mxu0 0.0
    %2324 = vmatprep.subr.mxu0 0.0
    %2325 = vmatpush1.msra.mxu0 0.0
    %2326 = vmatprep.subr.mxu0 0.0
    %2327 = vmatpush1.msra.mxu0 0.0
    %2328 = vmatprep.subr.mxu0 0.0
    %2329 = vmatpush1.msra.mxu0 0.0
    %2330 = vmatprep.subr.mxu0 0.0
    %2331 = vmatpush1.msra.mxu0 0.0
    %2332 = vmatprep.subr.mxu0 0.0
    %2333 = vmatpush1.msra.mxu0 0.0
    %2334 = vmatprep.subr.mxu0 0.0
    %2335 = vmatpush1.msra.mxu0 0.0
    %2336 = vmatprep.subr.mxu0 0.0
    %2337 = vmatpush1.msra.mxu0 0.0
    %2338 = vmatprep.subr.mxu0 0.0
    %2339 = vmatpush1.msra.mxu0 0.0
    %2340 = vmatprep.subr.mxu0 0.0
    %2341 = vmatpush1.msra.mxu0 0.0
    %2342 = vmatprep.subr.mxu0 0.0
    %2343 = vmatpush1.msra.mxu0 0.0
    %2344 = vmatprep.subr.mxu0 0.0
    %2345 = vmatpush1.msra.mxu0 0.0
    %2346 = vmatprep.subr.mxu0 0.0
    %2347 = vmatpush1.msra.mxu0 0.0
    %2348 = vmatprep.subr.mxu0 0.0
    %2349 = vmatpush1.msra.mxu0 0.0
    %2350 = vmatprep.subr.mxu0 0.0
    %2351 = vmatpush1.msra.mxu0 0.0
    %2352 = vmatprep.subr.mxu0 0.0
    %2353 = vmatpush1.msra.mxu0 0.0
    %2354 = vmatprep.subr.mxu0 0.0
    %2355 = vmatpush1.msra.mxu0 0.0
    %2356 = vmatprep.subr.mxu0 0.0
    %2357 = vmatpush1.msra.mxu0 0.0
    %2358 = vmatprep.subr.mxu0 0.0
    %2359 = vmatpush1.msra.mxu0 0.0
    %2360 = vmatprep.subr.mxu0 0.0
    %2361 = vmatpush1.msra.mxu0 0.0
    %2362 = vmatprep.subr.mxu0 0.0
    %2363 = vmatpush1.msra.mxu0 0.0
    %2364 = vmatprep.subr.mxu0 0.0
    %2365 = vmatpush1.msra.mxu0 0.0
    %2366 = vmatprep.subr.mxu0 0.0
    %2367 = vmatpush1.msra.mxu0 0.0
    %2368 = vmatprep.subr.mxu0 0.0
    %2369 = vmatpush1.msra.mxu0 0.0
    %2370 = vmatprep.subr.mxu0 0.0
    %2371 = vmatpush1.msra.mxu0 0.0
    %2372 = vmatprep.mubr.f32.mxu0 0.0
    %2373 = vmatmul.mubr.f32.gmra.mrb[0].mxu0 %v2297
    %v2374 = vpop.f32.mrb[0].mxu0
    %v2375 = vadd.f32 0.0, %v2374
    %v2376 = vpop.f32.mrb[0].mxu0
    %2377 = vmatprep.mubr.f32.mxu0 0.0
    %2378 = vmatmul.mubr.f32.gmra.mrb[0].mxu0 %v2300
    %v2379 = vpop.f32.mrb[0].mxu0
    %v2380 = vadd.f32 0.0, %v2379
    %v2381 = vpop.f32.mrb[0].mxu0
    %2382 = vmatprep.mubr.f32.mxu0 0.0
    %2383 = vmatmul.mubr.f32.gmra.mrb[0].mxu0 %v2303
    %v2384 = vpop.f32.mrb[0].mxu0
    %v2385 = vadd.f32 0.0, %v2384
    %v2386 = vpop.f32.mrb[0].mxu0
    %2387 = vmatprep.mubr.f32.mxu0 0.0
    %2388 = vmatmul.mubr.f32.gmra.mrb[0].mxu0 %v2306
    %v2389 = vpop.f32.mrb[0].mxu0
    %v2390 = vadd.f32 0.0, %v2389
    %v2391 = vpop.f32.mrb[0].mxu0
    %2392 = vdwg.mxu0
    %v2393 = vld [vmem:[#allocation14] sm:$0xff]
    %v2394 = vld [vmem:[#allocation14 + $0x8] sm:$0xff]
    %v2395 = vld [vmem:[#allocation14 + $0x10] sm:$0xff]
    %v2396 = vld [vmem:[#allocation14 + $0x18] sm:$0xff]
    %2397 = vmatprep.subr.mxu0 0.0
    %2398 = vmatpush1.msra.mxu0 %v2393
    %2399 = vmatprep.subr.mxu0 0.0
    %2400 = vmatpush1.msra.mxu0 %v2394
    %2401 = vmatprep.subr.mxu0 0.0
    %2402 = vmatpush1.msra.mxu0 %v2395
    %2403 = vmatprep.subr.mxu0 0.0
    %2404 = vmatpush1.msra.mxu0 %v2396
    %2405 = vmatprep.subr.mxu0 0.0
    %2406 = vmatpush1.msra.mxu0 0.0
    %2407 = vmatprep.subr.mxu0 0.0
    %2408 = vmatpush1.msra.mxu0 0.0
    %2409 = vmatprep.subr.mxu0 0.0
    %2410 = vmatpush1.msra.mxu0 0.0
    %2411 = vmatprep.subr.mxu0 0.0
    %2412 = vmatpush1.msra.mxu0 0.0
    %2413 = vmatprep.subr.mxu0 0.0
    %2414 = vmatpush1.msra.mxu0 0.0
    %2415 = vmatprep.subr.mxu0 0.0
    %2416 = vmatpush1.msra.mxu0 0.0
    %2417 = vmatprep.subr.mxu0 0.0
    %2418 = vmatpush1.msra.mxu0 0.0
    %2419 = vmatprep.subr.mxu0 0.0
    %2420 = vmatpush1.msra.mxu0 0.0
    %2421 = vmatprep.subr.mxu0 0.0
    %2422 = vmatpush1.msra.mxu0 0.0
    %2423 = vmatprep.subr.mxu0 0.0
    %2424 = vmatpush1.msra.mxu0 0.0
    %2425 = vmatprep.subr.mxu0 0.0
    %2426 = vmatpush1.msra.mxu0 0.0
    %2427 = vmatprep.subr.mxu0 0.0
    %2428 = vmatpush1.msra.mxu0 0.0
    %2429 = vmatprep.subr.mxu0 0.0
    %2430 = vmatpush1.msra.mxu0 0.0
    %2431 = vmatprep.subr.mxu0 0.0
    %2432 = vmatpush1.msra.mxu0 0.0
    %2433 = vmatprep.subr.mxu0 0.0
    %2434 = vmatpush1.msra.mxu0 0.0
    %2435 = vmatprep.subr.mxu0 0.0
    %2436 = vmatpush1.msra.mxu0 0.0
    %2437 = vmatprep.subr.mxu0 0.0
    %2438 = vmatpush1.msra.mxu0 0.0
    %2439 = vmatprep.subr.mxu0 0.0
    %2440 = vmatpush1.msra.mxu0 0.0
    %2441 = vmatprep.subr.mxu0 0.0
    %2442 = vmatpush1.msra.mxu0 0.0
    %2443 = vmatprep.subr.mxu0 0.0
    %2444 = vmatpush1.msra.mxu0 0.0
    %2445 = vmatprep.subr.mxu0 0.0
    %2446 = vmatpush1.msra.mxu0 0.0
    %2447 = vmatprep.subr.mxu0 0.0
    %2448 = vmatpush1.msra.mxu0 0.0
    %2449 = vmatprep.subr.mxu0 0.0
    %2450 = vmatpush1.msra.mxu0 0.0
    %2451 = vmatprep.subr.mxu0 0.0
    %2452 = vmatpush1.msra.mxu0 0.0
    %2453 = vmatprep.subr.mxu0 0.0
    %2454 = vmatpush1.msra.mxu0 0.0
    %2455 = vmatprep.subr.mxu0 0.0
    %2456 = vmatpush1.msra.mxu0 0.0
    %2457 = vmatprep.subr.mxu0 0.0
    %2458 = vmatpush1.msra.mxu0 0.0
    %2459 = vmatprep.subr.mxu0 0.0
    %2460 = vmatpush1.msra.mxu0 0.0
    %2461 = vmatprep.mubr.f32.mxu0 0.0
    %2462 = vmatmul.mubr.f32.gmra.mrb[0].mxu0 %v2297
    %v2463 = vpop.f32.mrb[0].mxu0
    %v2464 = vadd.f32 0.0, %v2463
    %v2465 = vpop.f32.mrb[0].mxu0
    %2466 = vmatprep.mubr.f32.mxu0 0.0
    %2467 = vmatmul.mubr.f32.gmra.mrb[0].mxu0 %v2300
    %v2468 = vpop.f32.mrb[0].mxu0
    %v2469 = vadd.f32 0.0, %v2468
    %v2470 = vpop.f32.mrb[0].mxu0
    %2471 = vmatprep.mubr.f32.mxu0 0.0
    %2472 = vmatmul.mubr.f32.gmra.mrb[0].mxu0 %v2303
    %v2473 = vpop.f32.mrb[0].mxu0
    %v2474 = vadd.f32 0.0, %v2473
    %v2475 = vpop.f32.mrb[0].mxu0
    %2476 = vmatprep.mubr.f32.mxu0 0.0
    %2477 = vmatmul.mubr.f32.gmra.mrb[0].mxu0 %v2306
    %v2478 = vpop.f32.mrb[0].mxu0
    %v2479 = vadd.f32 0.0, %v2478
    %v2480 = vpop.f32.mrb[0].mxu0
    %2481 = vdwg.mxu0
    %v2482 = vld [vmem:[#allocation16] sm:$0xff]
    %v2483 = vld [vmem:[#allocation16 + $0x8] sm:$0xff]
    %v2484 = vld [vmem:[#allocation16 + $0x10] sm:$0xff]
    %v2485 = vld [vmem:[#allocation16 + $0x18] sm:$0xff]
    %v2487 = vsel %vm517, %v2290, 0
    %v2490 = vsel %vm517, %v2375, 0
    %v2493 = vsel %vm517, %v2380, 0
    %2495 = vmatprep.subr.mxu0 0.0
    %2496 = vmatpush1.xpose.msra.mxu0 %v2490
    %2497 = vmatprep.subr.mxu0 0.0
    %2498 = vmatpush1.xpose.msra.mxu0 %v2493
    %2499 = vmatprep.subr.mxu0 0.0
    %2500 = vmatpush1.xpose.msra.mxu0 0.0
    %2501 = vmatprep.subr.mxu0 0.0
    %2502 = vmatpush1.xpose.msra.mxu0 0.0
    %2503 = vmatprep.subr.mxu0 0.0
    %2504 = vmatpush1.xpose.msra.mxu0 0.0
    %2505 = vmatprep.subr.mxu0 0.0
    %2506 = vmatpush1.xpose.msra.mxu0 0.0
    %2507 = vmatprep.subr.mxu0 0.0
    %2508 = vmatpush1.xpose.msra.mxu0 0.0
    %2509 = vmatprep.subr.mxu0 0.0
    %2510 = vmatpush1.xpose.msra.mxu0 0.0
    %2511 = vmatprep.subr.mxu0 0.0
    %2512 = vmatpush1.xpose.msra.mxu0 0.0
    %2513 = vmatprep.subr.mxu0 0.0
    %2514 = vmatpush1.xpose.msra.mxu0 0.0
    %2515 = vmatprep.subr.mxu0 0.0
    %2516 = vmatpush1.xpose.msra.mxu0 0.0
    %2517 = vmatprep.subr.mxu0 0.0
    %2518 = vmatpush1.xpose.msra.mxu0 0.0
    %2519 = vmatprep.subr.mxu0 0.0
    %2520 = vmatpush1.xpose.msra.mxu0 0.0
    %2521 = vmatprep.subr.mxu0 0.0
    %2522 = vmatpush1.xpose.msra.mxu0 0.0
    %2523 = vmatprep.subr.mxu0 0.0
    %2524 = vmatpush1.xpose.msra.mxu0 0.0
    %2525 = vmatprep.subr.mxu0 0.0
    %2526 = vmatpush1.xpose.msra.mxu0 0.0
    %2527 = vmatprep.subr.mxu0 0.0
    %2528 = vmatpush1.xpose.msra.mxu0 0.0
    %2529 = vmatprep.subr.mxu0 0.0
    %2530 = vmatpush1.xpose.msra.mxu0 0.0
    %2531 = vmatprep.subr.mxu0 0.0
    %2532 = vmatpush1.xpose.msra.mxu0 0.0
    %2533 = vmatprep.subr.mxu0 0.0
    %2534 = vmatpush1.xpose.msra.mxu0 0.0
    %2535 = vmatprep.subr.mxu0 0.0
    %2536 = vmatpush1.xpose.msra.mxu0 0.0
    %2537 = vmatprep.subr.mxu0 0.0
    %2538 = vmatpush1.xpose.msra.mxu0 0.0
    %2539 = vmatprep.subr.mxu0 0.0
    %2540 = vmatpush1.xpose.msra.mxu0 0.0
    %2541 = vmatprep.subr.mxu0 0.0
    %2542 = vmatpush1.xpose.msra.mxu0 0.0
    %2543 = vmatprep.subr.mxu0 0.0
    %2544 = vmatpush1.xpose.msra.mxu0 0.0
    %2545 = vmatprep.subr.mxu0 0.0
    %2546 = vmatpush1.xpose.msra.mxu0 0.0
    %2547 = vmatprep.subr.mxu0 0.0
    %2548 = vmatpush1.xpose.msra.mxu0 0.0
    %2549 = vmatprep.subr.mxu0 0.0
    %2550 = vmatpush1.xpose.msra.mxu0 0.0
    %2551 = vmatprep.subr.mxu0 0.0
    %2552 = vmatpush1.xpose.msra.mxu0 0.0
    %2553 = vmatprep.subr.mxu0 0.0
    %2554 = vmatpush1.xpose.msra.mxu0 0.0
    %2555 = vmatprep.subr.mxu0 0.0
    %2556 = vmatpush1.xpose.msra.mxu0 0.0
    %2557 = vmatprep.subr.mxu0 0.0
    %2558 = vmatpush1.xpose.msra.mxu0 0.0
    %2559 = vmatprep.mubr.f32.mxu0 0.0
    %2560 = vmatmul.mubr.f32.gmra.mrb[0].mxu0 %v2487
    %v2561 = vpop.f32.mrb[0].mxu0
    %v2562 = vadd.f32 %v259, %v2561
    %v2563 = vpop.f32.mrb[0].mxu0
    %2564 = vdwg.mxu0
    %v2566 = vsel %vm517, %v2291, 0
    %v2569 = vsel %vm517, %v2385, 0
    %v2572 = vsel %vm517, %v2390, 0
    %2574 = vmatprep.subr.mxu0 0.0
    %2575 = vmatpush1.xpose.msra.mxu0 %v2569
    %2576 = vmatprep.subr.mxu0 0.0
    %2577 = vmatpush1.xpose.msra.mxu0 %v2572
    %2578 = vmatprep.subr.mxu0 0.0
    %2579 = vmatpush1.xpose.msra.mxu0 0.0
    %2580 = vmatprep.subr.mxu0 0.0
    %2581 = vmatpush1.xpose.msra.mxu0 0.0
    %2582 = vmatprep.subr.mxu0 0.0
    %2583 = vmatpush1.xpose.msra.mxu0 0.0
    %2584 = vmatprep.subr.mxu0 0.0
    %2585 = vmatpush1.xpose.msra.mxu0 0.0
    %2586 = vmatprep.subr.mxu0 0.0
    %2587 = vmatpush1.xpose.msra.mxu0 0.0
    %2588 = vmatprep.subr.mxu0 0.0
    %2589 = vmatpush1.xpose.msra.mxu0 0.0
    %2590 = vmatprep.subr.mxu0 0.0
    %2591 = vmatpush1.xpose.msra.mxu0 0.0
    %2592 = vmatprep.subr.mxu0 0.0
    %2593 = vmatpush1.xpose.msra.mxu0 0.0
    %2594 = vmatprep.subr.mxu0 0.0
    %2595 = vmatpush1.xpose.msra.mxu0 0.0
    %2596 = vmatprep.subr.mxu0 0.0
    %2597 = vmatpush1.xpose.msra.mxu0 0.0
    %2598 = vmatprep.subr.mxu0 0.0
    %2599 = vmatpush1.xpose.msra.mxu0 0.0
    %2600 = vmatprep.subr.mxu0 0.0
    %2601 = vmatpush1.xpose.msra.mxu0 0.0
    %2602 = vmatprep.subr.mxu0 0.0
    %2603 = vmatpush1.xpose.msra.mxu0 0.0
    %2604 = vmatprep.subr.mxu0 0.0
    %2605 = vmatpush1.xpose.msra.mxu0 0.0
    %2606 = vmatprep.subr.mxu0 0.0
    %2607 = vmatpush1.xpose.msra.mxu0 0.0
    %2608 = vmatprep.subr.mxu0 0.0
    %2609 = vmatpush1.xpose.msra.mxu0 0.0
    %2610 = vmatprep.subr.mxu0 0.0
    %2611 = vmatpush1.xpose.msra.mxu0 0.0
    %2612 = vmatprep.subr.mxu0 0.0
    %2613 = vmatpush1.xpose.msra.mxu0 0.0
    %2614 = vmatprep.subr.mxu0 0.0
    %2615 = vmatpush1.xpose.msra.mxu0 0.0
    %2616 = vmatprep.subr.mxu0 0.0
    %2617 = vmatpush1.xpose.msra.mxu0 0.0
    %2618 = vmatprep.subr.mxu0 0.0
    %2619 = vmatpush1.xpose.msra.mxu0 0.0
    %2620 = vmatprep.subr.mxu0 0.0
    %2621 = vmatpush1.xpose.msra.mxu0 0.0
    %2622 = vmatprep.subr.mxu0 0.0
    %2623 = vmatpush1.xpose.msra.mxu0 0.0
    %2624 = vmatprep.subr.mxu0 0.0
    %2625 = vmatpush1.xpose.msra.mxu0 0.0
    %2626 = vmatprep.subr.mxu0 0.0
    %2627 = vmatpush1.xpose.msra.mxu0 0.0
    %2628 = vmatprep.subr.mxu0 0.0
    %2629 = vmatpush1.xpose.msra.mxu0 0.0
    %2630 = vmatprep.subr.mxu0 0.0
    %2631 = vmatpush1.xpose.msra.mxu0 0.0
    %2632 = vmatprep.subr.mxu0 0.0
    %2633 = vmatpush1.xpose.msra.mxu0 0.0
    %2634 = vmatprep.subr.mxu0 0.0
    %2635 = vmatpush1.xpose.msra.mxu0 0.0
    %2636 = vmatprep.subr.mxu0 0.0
    %2637 = vmatpush1.xpose.msra.mxu0 0.0
    %2638 = vmatprep.mubr.f32.mxu0 0.0
    %2639 = vmatmul.mubr.f32.gmra.mrb[0].mxu0 %v2566
    %v2640 = vpop.f32.mrb[0].mxu0
    %v2641 = vadd.f32 %v260, %v2640
    %v2642 = vpop.f32.mrb[0].mxu0
    %2643 = vdwg.mxu0
    %vm2644 = vcmask 130048
    %v2645 = vsel %vm2644, %v2562, -inf
    %2646 = vmax.xlane.f32.xlu0 %v2645
    %v2647 = vpop.xlane.xlu0 %2646
    %v2648 = vsel %vm2644, %v2641, -inf
    %2649 = vmax.xlane.f32.xlu0 %v2648
    %v2650 = vpop.xlane.xlu0 %2649
    %v2651 = vsub.f32 %v2562, %v2647
    %v2652 = vsub.f32 %v2641, %v2650
    %v2653 = vmul.f32 %v2651, 1.442695
    %v2654 = vpow.pop %v2653
    %v2655 = vmul.f32 %v2652, 1.442695
    %v2656 = vpow.pop %v2655
    %v2657 = vsel %vm2644, %v2654, 0.0
    %2658 = vadd.xlane.f32.xlu0 %v2657
    %v2659 = vpop.xlane.xlu0 %2658
    %v2660 = vsel %vm2644, %v2656, 0.0
    %2661 = vadd.xlane.f32.xlu0 %v2660
    %v2662 = vpop.xlane.xlu0 %2661
    %v2663 = vrcp.pop %v2659
    %v2664 = vrcp.pop %v2662
    %v2665 = vmul.f32 %v2654, %v2663
    %v2666 = vmul.f32 %v2656, %v2664
    %v2668 = vsel %vm2644, %v2665, 0
    %2670 = vmatprep.subr.mxu0 0.0
    %2671 = vmatpush1.msra.mxu0 %v2464
    %2672 = vmatprep.subr.mxu0 0.0
    %2673 = vmatpush1.msra.mxu0 %v2469
    %2674 = vmatprep.subr.mxu0 0.0
    %2675 = vmatpush1.msra.mxu0 0.0
    %2676 = vmatprep.subr.mxu0 0.0
    %2677 = vmatpush1.msra.mxu0 0.0
    %2678 = vmatprep.subr.mxu0 0.0
    %2679 = vmatpush1.msra.mxu0 0.0
    %2680 = vmatprep.subr.mxu0 0.0
    %2681 = vmatpush1.msra.mxu0 0.0
    %2682 = vmatprep.subr.mxu0 0.0
    %2683 = vmatpush1.msra.mxu0 0.0
    %2684 = vmatprep.subr.mxu0 0.0
    %2685 = vmatpush1.msra.mxu0 0.0
    %2686 = vmatprep.subr.mxu0 0.0
    %2687 = vmatpush1.msra.mxu0 0.0
    %2688 = vmatprep.subr.mxu0 0.0
    %2689 = vmatpush1.msra.mxu0 0.0
    %2690 = vmatprep.subr.mxu0 0.0
    %2691 = vmatpush1.msra.mxu0 0.0
    %2692 = vmatprep.subr.mxu0 0.0
    %2693 = vmatpush1.msra.mxu0 0.0
    %2694 = vmatprep.subr.mxu0 0.0
    %2695 = vmatpush1.msra.mxu0 0.0
    %2696 = vmatprep.subr.mxu0 0.0
    %2697 = vmatpush1.msra.mxu0 0.0
    %2698 = vmatprep.subr.mxu0 0.0
    %2699 = vmatpush1.msra.mxu0 0.0
    %2700 = vmatprep.subr.mxu0 0.0
    %2701 = vmatpush1.msra.mxu0 0.0
    %2702 = vmatprep.subr.mxu0 0.0
    %2703 = vmatpush1.msra.mxu0 0.0
    %2704 = vmatprep.subr.mxu0 0.0
    %2705 = vmatpush1.msra.mxu0 0.0
    %2706 = vmatprep.subr.mxu0 0.0
    %2707 = vmatpush1.msra.mxu0 0.0
    %2708 = vmatprep.subr.mxu0 0.0
    %2709 = vmatpush1.msra.mxu0 0.0
    %2710 = vmatprep.subr.mxu0 0.0
    %2711 = vmatpush1.msra.mxu0 0.0
    %2712 = vmatprep.subr.mxu0 0.0
    %2713 = vmatpush1.msra.mxu0 0.0
    %2714 = vmatprep.subr.mxu0 0.0
    %2715 = vmatpush1.msra.mxu0 0.0
    %2716 = vmatprep.subr.mxu0 0.0
    %2717 = vmatpush1.msra.mxu0 0.0
    %2718 = vmatprep.subr.mxu0 0.0
    %2719 = vmatpush1.msra.mxu0 0.0
    %2720 = vmatprep.subr.mxu0 0.0
    %2721 = vmatpush1.msra.mxu0 0.0
    %2722 = vmatprep.subr.mxu0 0.0
    %2723 = vmatpush1.msra.mxu0 0.0
    %2724 = vmatprep.subr.mxu0 0.0
    %2725 = vmatpush1.msra.mxu0 0.0
    %2726 = vmatprep.subr.mxu0 0.0
    %2727 = vmatpush1.msra.mxu0 0.0
    %2728 = vmatprep.subr.mxu0 0.0
    %2729 = vmatpush1.msra.mxu0 0.0
    %2730 = vmatprep.subr.mxu0 0.0
    %2731 = vmatpush1.msra.mxu0 0.0
    %2732 = vmatprep.subr.mxu0 0.0
    %2733 = vmatpush1.msra.mxu0 0.0
    %2734 = vmatprep.mubr.f32.mxu0 0.0
    %2735 = vmatmul.mubr.f32.gmra.mrb[0].mxu0 %v2668
    %v2736 = vpop.f32.mrb[0].mxu0
    %v2737 = vadd.f32 0.0, %v2736
    %v2738 = vpop.f32.mrb[0].mxu0
    %2739 = vdwg.mxu0
    %v2741 = vsel %vm2644, %v2666, 0
    %2743 = vmatprep.subr.mxu0 0.0
    %2744 = vmatpush1.msra.mxu0 %v2474
    %2745 = vmatprep.subr.mxu0 0.0
    %2746 = vmatpush1.msra.mxu0 %v2479
    %2747 = vmatprep.subr.mxu0 0.0
    %2748 = vmatpush1.msra.mxu0 0.0
    %2749 = vmatprep.subr.mxu0 0.0
    %2750 = vmatpush1.msra.mxu0 0.0
    %2751 = vmatprep.subr.mxu0 0.0
    %2752 = vmatpush1.msra.mxu0 0.0
    %2753 = vmatprep.subr.mxu0 0.0
    %2754 = vmatpush1.msra.mxu0 0.0
    %2755 = vmatprep.subr.mxu0 0.0
    %2756 = vmatpush1.msra.mxu0 0.0
    %2757 = vmatprep.subr.mxu0 0.0
    %2758 = vmatpush1.msra.mxu0 0.0
    %2759 = vmatprep.subr.mxu0 0.0
    %2760 = vmatpush1.msra.mxu0 0.0
    %2761 = vmatprep.subr.mxu0 0.0
    %2762 = vmatpush1.msra.mxu0 0.0
    %2763 = vmatprep.subr.mxu0 0.0
    %2764 = vmatpush1.msra.mxu0 0.0
    %2765 = vmatprep.subr.mxu0 0.0
    %2766 = vmatpush1.msra.mxu0 0.0
    %2767 = vmatprep.subr.mxu0 0.0
    %2768 = vmatpush1.msra.mxu0 0.0
    %2769 = vmatprep.subr.mxu0 0.0
    %2770 = vmatpush1.msra.mxu0 0.0
    %2771 = vmatprep.subr.mxu0 0.0
    %2772 = vmatpush1.msra.mxu0 0.0
    %2773 = vmatprep.subr.mxu0 0.0
    %2774 = vmatpush1.msra.mxu0 0.0
    %2775 = vmatprep.subr.mxu0 0.0
    %2776 = vmatpush1.msra.mxu0 0.0
    %2777 = vmatprep.subr.mxu0 0.0
    %2778 = vmatpush1.msra.mxu0 0.0
    %2779 = vmatprep.subr.mxu0 0.0
    %2780 = vmatpush1.msra.mxu0 0.0
    %2781 = vmatprep.subr.mxu0 0.0
    %2782 = vmatpush1.msra.mxu0 0.0
    %2783 = vmatprep.subr.mxu0 0.0
    %2784 = vmatpush1.msra.mxu0 0.0
    %2785 = vmatprep.subr.mxu0 0.0
    %2786 = vmatpush1.msra.mxu0 0.0
    %2787 = vmatprep.subr.mxu0 0.0
    %2788 = vmatpush1.msra.mxu0 0.0
    %2789 = vmatprep.subr.mxu0 0.0
    %2790 = vmatpush1.msra.mxu0 0.0
    %2791 = vmatprep.subr.mxu0 0.0
    %2792 = vmatpush1.msra.mxu0 0.0
    %2793 = vmatprep.subr.mxu0 0.0
    %2794 = vmatpush1.msra.mxu0 0.0
    %2795 = vmatprep.subr.mxu0 0.0
    %2796 = vmatpush1.msra.mxu0 0.0
    %2797 = vmatprep.subr.mxu0 0.0
    %2798 = vmatpush1.msra.mxu0 0.0
    %2799 = vmatprep.subr.mxu0 0.0
    %2800 = vmatpush1.msra.mxu0 0.0
    %2801 = vmatprep.subr.mxu0 0.0
    %2802 = vmatpush1.msra.mxu0 0.0
    %2803 = vmatprep.subr.mxu0 0.0
    %2804 = vmatpush1.msra.mxu0 0.0
    %2805 = vmatprep.subr.mxu0 0.0
    %2806 = vmatpush1.msra.mxu0 0.0
    %2807 = vmatprep.mubr.f32.mxu0 0.0
    %2808 = vmatmul.mubr.f32.gmra.mrb[0].mxu0 %v2741
    %v2809 = vpop.f32.mrb[0].mxu0
    %v2810 = vadd.f32 0.0, %v2809
    %v2811 = vpop.f32.mrb[0].mxu0
    %2812 = vdwg.mxu0
    %2813 = vrot.lane.b32.xlu0 %v2290, 120
    %v2814 = vpop.permute.xlu0 %2813
    %2815 = vrot.lane.b32.xlu0 %v2375, 120
    %v2816 = vpop.permute.xlu0 %2815
    %2817 = vrot.lane.b32.xlu0 %v2380, 120
    %v2818 = vpop.permute.xlu0 %2817
    %v2819 = vsel %vm517, %v2814, 0
    %v2821 = vsel %vm517, %v2816, 0
    %v2823 = vsel %vm517, %v2818, 0
    %2825 = vmatprep.subr.mxu0 0.0
    %2826 = vmatpush1.xpose.msra.mxu0 %v2821
    %2827 = vmatprep.subr.mxu0 0.0
    %2828 = vmatpush1.xpose.msra.mxu0 %v2823
    %2829 = vmatprep.subr.mxu0 0.0
    %2830 = vmatpush1.xpose.msra.mxu0 0.0
    %2831 = vmatprep.subr.mxu0 0.0
    %2832 = vmatpush1.xpose.msra.mxu0 0.0
    %2833 = vmatprep.subr.mxu0 0.0
    %2834 = vmatpush1.xpose.msra.mxu0 0.0
    %2835 = vmatprep.subr.mxu0 0.0
    %2836 = vmatpush1.xpose.msra.mxu0 0.0
    %2837 = vmatprep.subr.mxu0 0.0
    %2838 = vmatpush1.xpose.msra.mxu0 0.0
    %2839 = vmatprep.subr.mxu0 0.0
    %2840 = vmatpush1.xpose.msra.mxu0 0.0
    %2841 = vmatprep.subr.mxu0 0.0
    %2842 = vmatpush1.xpose.msra.mxu0 0.0
    %2843 = vmatprep.subr.mxu0 0.0
    %2844 = vmatpush1.xpose.msra.mxu0 0.0
    %2845 = vmatprep.subr.mxu0 0.0
    %2846 = vmatpush1.xpose.msra.mxu0 0.0
    %2847 = vmatprep.subr.mxu0 0.0
    %2848 = vmatpush1.xpose.msra.mxu0 0.0
    %2849 = vmatprep.subr.mxu0 0.0
    %2850 = vmatpush1.xpose.msra.mxu0 0.0
    %2851 = vmatprep.subr.mxu0 0.0
    %2852 = vmatpush1.xpose.msra.mxu0 0.0
    %2853 = vmatprep.subr.mxu0 0.0
    %2854 = vmatpush1.xpose.msra.mxu0 0.0
    %2855 = vmatprep.subr.mxu0 0.0
    %2856 = vmatpush1.xpose.msra.mxu0 0.0
    %2857 = vmatprep.subr.mxu0 0.0
    %2858 = vmatpush1.xpose.msra.mxu0 0.0
    %2859 = vmatprep.subr.mxu0 0.0
    %2860 = vmatpush1.xpose.msra.mxu0 0.0
    %2861 = vmatprep.subr.mxu0 0.0
    %2862 = vmatpush1.xpose.msra.mxu0 0.0
    %2863 = vmatprep.subr.mxu0 0.0
    %2864 = vmatpush1.xpose.msra.mxu0 0.0
    %2865 = vmatprep.subr.mxu0 0.0
    %2866 = vmatpush1.xpose.msra.mxu0 0.0
    %2867 = vmatprep.subr.mxu0 0.0
    %2868 = vmatpush1.xpose.msra.mxu0 0.0
    %2869 = vmatprep.subr.mxu0 0.0
    %2870 = vmatpush1.xpose.msra.mxu0 0.0
    %2871 = vmatprep.subr.mxu0 0.0
    %2872 = vmatpush1.xpose.msra.mxu0 0.0
    %2873 = vmatprep.subr.mxu0 0.0
    %2874 = vmatpush1.xpose.msra.mxu0 0.0
    %2875 = vmatprep.subr.mxu0 0.0
    %2876 = vmatpush1.xpose.msra.mxu0 0.0
    %2877 = vmatprep.subr.mxu0 0.0
    %2878 = vmatpush1.xpose.msra.mxu0 0.0
    %2879 = vmatprep.subr.mxu0 0.0
    %2880 = vmatpush1.xpose.msra.mxu0 0.0
    %2881 = vmatprep.subr.mxu0 0.0
    %2882 = vmatpush1.xpose.msra.mxu0 0.0
    %2883 = vmatprep.subr.mxu0 0.0
    %2884 = vmatpush1.xpose.msra.mxu0 0.0
    %2885 = vmatprep.subr.mxu0 0.0
    %2886 = vmatpush1.xpose.msra.mxu0 0.0
    %2887 = vmatprep.subr.mxu0 0.0
    %2888 = vmatpush1.xpose.msra.mxu0 0.0
    %2889 = vmatprep.mubr.f32.mxu0 0.0
    %2890 = vmatmul.mubr.f32.gmra.mrb[0].mxu0 %v2819
    %v2891 = vpop.f32.mrb[0].mxu0
    %v2892 = vadd.f32 %v259, %v2891
    %v2893 = vpop.f32.mrb[0].mxu0
    %2894 = vdwg.mxu0
    %2895 = vrot.lane.b32.xlu0 %v2291, 120
    %v2896 = vpop.permute.xlu0 %2895
    %2897 = vrot.lane.b32.xlu0 %v2385, 120
    %v2898 = vpop.permute.xlu0 %2897
    %2899 = vrot.lane.b32.xlu0 %v2390, 120
    %v2900 = vpop.permute.xlu0 %2899
    %v2901 = vsel %vm517, %v2896, 0
    %v2903 = vsel %vm517, %v2898, 0
    %v2905 = vsel %vm517, %v2900, 0
    %2907 = vmatprep.subr.mxu0 0.0
    %2908 = vmatpush1.xpose.msra.mxu0 %v2903
    %2909 = vmatprep.subr.mxu0 0.0
    %2910 = vmatpush1.xpose.msra.mxu0 %v2905
    %2911 = vmatprep.subr.mxu0 0.0
    %2912 = vmatpush1.xpose.msra.mxu0 0.0
    %2913 = vmatprep.subr.mxu0 0.0
    %2914 = vmatpush1.xpose.msra.mxu0 0.0
    %2915 = vmatprep.subr.mxu0 0.0
    %2916 = vmatpush1.xpose.msra.mxu0 0.0
    %2917 = vmatprep.subr.mxu0 0.0
    %2918 = vmatpush1.xpose.msra.mxu0 0.0
    %2919 = vmatprep.subr.mxu0 0.0
    %2920 = vmatpush1.xpose.msra.mxu0 0.0
    %2921 = vmatprep.subr.mxu0 0.0
    %2922 = vmatpush1.xpose.msra.mxu0 0.0
    %2923 = vmatprep.subr.mxu0 0.0
    %2924 = vmatpush1.xpose.msra.mxu0 0.0
    %2925 = vmatprep.subr.mxu0 0.0
    %2926 = vmatpush1.xpose.msra.mxu0 0.0
    %2927 = vmatprep.subr.mxu0 0.0
    %2928 = vmatpush1.xpose.msra.mxu0 0.0
    %2929 = vmatprep.subr.mxu0 0.0
    %2930 = vmatpush1.xpose.msra.mxu0 0.0
    %2931 = vmatprep.subr.mxu0 0.0
    %2932 = vmatpush1.xpose.msra.mxu0 0.0
    %2933 = vmatprep.subr.mxu0 0.0
    %2934 = vmatpush1.xpose.msra.mxu0 0.0
    %2935 = vmatprep.subr.mxu0 0.0
    %2936 = vmatpush1.xpose.msra.mxu0 0.0
    %2937 = vmatprep.subr.mxu0 0.0
    %2938 = vmatpush1.xpose.msra.mxu0 0.0
    %2939 = vmatprep.subr.mxu0 0.0
    %2940 = vmatpush1.xpose.msra.mxu0 0.0
    %2941 = vmatprep.subr.mxu0 0.0
    %2942 = vmatpush1.xpose.msra.mxu0 0.0
    %2943 = vmatprep.subr.mxu0 0.0
    %2944 = vmatpush1.xpose.msra.mxu0 0.0
    %2945 = vmatprep.subr.mxu0 0.0
    %2946 = vmatpush1.xpose.msra.mxu0 0.0
    %2947 = vmatprep.subr.mxu0 0.0
    %2948 = vmatpush1.xpose.msra.mxu0 0.0
    %2949 = vmatprep.subr.mxu0 0.0
    %2950 = vmatpush1.xpose.msra.mxu0 0.0
    %2951 = vmatprep.subr.mxu0 0.0
    %2952 = vmatpush1.xpose.msra.mxu0 0.0
    %2953 = vmatprep.subr.mxu0 0.0
    %2954 = vmatpush1.xpose.msra.mxu0 0.0
    %2955 = vmatprep.subr.mxu0 0.0
    %2956 = vmatpush1.xpose.msra.mxu0 0.0
    %2957 = vmatprep.subr.mxu0 0.0
    %2958 = vmatpush1.xpose.msra.mxu0 0.0
    %2959 = vmatprep.subr.mxu0 0.0
    %2960 = vmatpush1.xpose.msra.mxu0 0.0
    %2961 = vmatprep.subr.mxu0 0.0
    %2962 = vmatpush1.xpose.msra.mxu0 0.0
    %2963 = vmatprep.subr.mxu0 0.0
    %2964 = vmatpush1.xpose.msra.mxu0 0.0
    %2965 = vmatprep.subr.mxu0 0.0
    %2966 = vmatpush1.xpose.msra.mxu0 0.0
    %2967 = vmatprep.subr.mxu0 0.0
    %2968 = vmatpush1.xpose.msra.mxu0 0.0
    %2969 = vmatprep.subr.mxu0 0.0
    %2970 = vmatpush1.xpose.msra.mxu0 0.0
    %2971 = vmatprep.mubr.f32.mxu0 0.0
    %2972 = vmatmul.mubr.f32.gmra.mrb[0].mxu0 %v2901
    %v2973 = vpop.f32.mrb[0].mxu0
    %v2974 = vadd.f32 %v260, %v2973
    %v2975 = vpop.f32.mrb[0].mxu0
    %2976 = vdwg.mxu0
    %v2977 = vsel %vm2644, %v2892, -inf
    %2978 = vmax.xlane.f32.xlu0 %v2977
    %v2979 = vpop.xlane.xlu0 %2978
    %v2980 = vsel %vm2644, %v2974, -inf
    %2981 = vmax.xlane.f32.xlu0 %v2980
    %v2982 = vpop.xlane.xlu0 %2981
    %v2983 = vsub.f32 %v2892, %v2979
    %v2984 = vsub.f32 %v2974, %v2982
    %v2985 = vmul.f32 %v2983, 1.442695
    %v2986 = vpow.pop %v2985
    %v2987 = vmul.f32 %v2984, 1.442695
    %v2988 = vpow.pop %v2987
    %v2989 = vsel %vm2644, %v2986, 0.0
    %2990 = vadd.xlane.f32.xlu0 %v2989
    %v2991 = vpop.xlane.xlu0 %2990
    %v2992 = vsel %vm2644, %v2988, 0.0
    %2993 = vadd.xlane.f32.xlu0 %v2992
    %v2994 = vpop.xlane.xlu0 %2993
    %v2995 = vrcp.pop %v2991
    %v2996 = vrcp.pop %v2994
    %v2997 = vmul.f32 %v2986, %v2995
    %v2998 = vmul.f32 %v2988, %v2996
    %3001 = vrot.lane.b32.xlu0 %v2464, 120
    %v3002 = vpop.permute.xlu0 %3001
    %3003 = vrot.lane.b32.xlu0 %v2469, 120
    %v3004 = vpop.permute.xlu0 %3003
    %v3008 = vsel %vm2644, %v2997, 0
    %3010 = vmatprep.subr.mxu0 0.0
    %3011 = vmatpush1.msra.mxu0 %v3002
    %3012 = vmatprep.subr.mxu0 0.0
    %3013 = vmatpush1.msra.mxu0 %v3004
    %3014 = vmatprep.subr.mxu0 0.0
    %3015 = vmatpush1.msra.mxu0 0.0
    %3016 = vmatprep.subr.mxu0 0.0
    %3017 = vmatpush1.msra.mxu0 0.0
    %3018 = vmatprep.subr.mxu0 0.0
    %3019 = vmatpush1.msra.mxu0 0.0
    %3020 = vmatprep.subr.mxu0 0.0
    %3021 = vmatpush1.msra.mxu0 0.0
    %3022 = vmatprep.subr.mxu0 0.0
    %3023 = vmatpush1.msra.mxu0 0.0
    %3024 = vmatprep.subr.mxu0 0.0
    %3025 = vmatpush1.msra.mxu0 0.0
    %3026 = vmatprep.subr.mxu0 0.0
    %3027 = vmatpush1.msra.mxu0 0.0
    %3028 = vmatprep.subr.mxu0 0.0
    %3029 = vmatpush1.msra.mxu0 0.0
    %3030 = vmatprep.subr.mxu0 0.0
    %3031 = vmatpush1.msra.mxu0 0.0
    %3032 = vmatprep.subr.mxu0 0.0
    %3033 = vmatpush1.msra.mxu0 0.0
    %3034 = vmatprep.subr.mxu0 0.0
    %3035 = vmatpush1.msra.mxu0 0.0
    %3036 = vmatprep.subr.mxu0 0.0
    %3037 = vmatpush1.msra.mxu0 0.0
    %3038 = vmatprep.subr.mxu0 0.0
    %3039 = vmatpush1.msra.mxu0 0.0
    %3040 = vmatprep.subr.mxu0 0.0
    %3041 = vmatpush1.msra.mxu0 0.0
    %3042 = vmatprep.subr.mxu0 0.0
    %3043 = vmatpush1.msra.mxu0 0.0
    %3044 = vmatprep.subr.mxu0 0.0
    %3045 = vmatpush1.msra.mxu0 0.0
    %3046 = vmatprep.subr.mxu0 0.0
    %3047 = vmatpush1.msra.mxu0 0.0
    %3048 = vmatprep.subr.mxu0 0.0
    %3049 = vmatpush1.msra.mxu0 0.0
    %3050 = vmatprep.subr.mxu0 0.0
    %3051 = vmatpush1.msra.mxu0 0.0
    %3052 = vmatprep.subr.mxu0 0.0
    %3053 = vmatpush1.msra.mxu0 0.0
    %3054 = vmatprep.subr.mxu0 0.0
    %3055 = vmatpush1.msra.mxu0 0.0
    %3056 = vmatprep.subr.mxu0 0.0
    %3057 = vmatpush1.msra.mxu0 0.0
    %3058 = vmatprep.subr.mxu0 0.0
    %3059 = vmatpush1.msra.mxu0 0.0
    %3060 = vmatprep.subr.mxu0 0.0
    %3061 = vmatpush1.msra.mxu0 0.0
    %3062 = vmatprep.subr.mxu0 0.0
    %3063 = vmatpush1.msra.mxu0 0.0
    %3064 = vmatprep.subr.mxu0 0.0
    %3065 = vmatpush1.msra.mxu0 0.0
    %3066 = vmatprep.subr.mxu0 0.0
    %3067 = vmatpush1.msra.mxu0 0.0
    %3068 = vmatprep.subr.mxu0 0.0
    %3069 = vmatpush1.msra.mxu0 0.0
    %3070 = vmatprep.subr.mxu0 0.0
    %3071 = vmatpush1.msra.mxu0 0.0
    %3072 = vmatprep.subr.mxu0 0.0
    %3073 = vmatpush1.msra.mxu0 0.0
    %3074 = vmatprep.mubr.f32.mxu0 0.0
    %3075 = vmatmul.mubr.f32.gmra.mrb[0].mxu0 %v3008
    %v3076 = vpop.f32.mrb[0].mxu0
    %v3077 = vadd.f32 0.0, %v3076
    %v3078 = vpop.f32.mrb[0].mxu0
    %3079 = vdwg.mxu0
    %3082 = vrot.lane.b32.xlu0 %v2474, 120
    %v3083 = vpop.permute.xlu0 %3082
    %3084 = vrot.lane.b32.xlu0 %v2479, 120
    %v3085 = vpop.permute.xlu0 %3084
    %v3089 = vsel %vm2644, %v2998, 0
    %3091 = vmatprep.subr.mxu0 0.0
    %3092 = vmatpush1.msra.mxu0 %v3083
    %3093 = vmatprep.subr.mxu0 0.0
    %3094 = vmatpush1.msra.mxu0 %v3085
    %3095 = vmatprep.subr.mxu0 0.0
    %3096 = vmatpush1.msra.mxu0 0.0
    %3097 = vmatprep.subr.mxu0 0.0
    %3098 = vmatpush1.msra.mxu0 0.0
    %3099 = vmatprep.subr.mxu0 0.0
    %3100 = vmatpush1.msra.mxu0 0.0
    %3101 = vmatprep.subr.mxu0 0.0
    %3102 = vmatpush1.msra.mxu0 0.0
    %3103 = vmatprep.subr.mxu0 0.0
    %3104 = vmatpush1.msra.mxu0 0.0
    %3105 = vmatprep.subr.mxu0 0.0
    %3106 = vmatpush1.msra.mxu0 0.0
    %3107 = vmatprep.subr.mxu0 0.0
    %3108 = vmatpush1.msra.mxu0 0.0
    %3109 = vmatprep.subr.mxu0 0.0
    %3110 = vmatpush1.msra.mxu0 0.0
    %3111 = vmatprep.subr.mxu0 0.0
    %3112 = vmatpush1.msra.mxu0 0.0
    %3113 = vmatprep.subr.mxu0 0.0
    %3114 = vmatpush1.msra.mxu0 0.0
    %3115 = vmatprep.subr.mxu0 0.0
    %3116 = vmatpush1.msra.mxu0 0.0
    %3117 = vmatprep.subr.mxu0 0.0
    %3118 = vmatpush1.msra.mxu0 0.0
    %3119 = vmatprep.subr.mxu0 0.0
    %3120 = vmatpush1.msra.mxu0 0.0
    %3121 = vmatprep.subr.mxu0 0.0
    %3122 = vmatpush1.msra.mxu0 0.0
    %3123 = vmatprep.subr.mxu0 0.0
    %3124 = vmatpush1.msra.mxu0 0.0
    %3125 = vmatprep.subr.mxu0 0.0
    %3126 = vmatpush1.msra.mxu0 0.0
    %3127 = vmatprep.subr.mxu0 0.0
    %3128 = vmatpush1.msra.mxu0 0.0
    %3129 = vmatprep.subr.mxu0 0.0
    %3130 = vmatpush1.msra.mxu0 0.0
    %3131 = vmatprep.subr.mxu0 0.0
    %3132 = vmatpush1.msra.mxu0 0.0
    %3133 = vmatprep.subr.mxu0 0.0
    %3134 = vmatpush1.msra.mxu0 0.0
    %3135 = vmatprep.subr.mxu0 0.0
    %3136 = vmatpush1.msra.mxu0 0.0
    %3137 = vmatprep.subr.mxu0 0.0
    %3138 = vmatpush1.msra.mxu0 0.0
    %3139 = vmatprep.subr.mxu0 0.0
    %3140 = vmatpush1.msra.mxu0 0.0
    %3141 = vmatprep.subr.mxu0 0.0
    %3142 = vmatpush1.msra.mxu0 0.0
    %3143 = vmatprep.subr.mxu0 0.0
    %3144 = vmatpush1.msra.mxu0 0.0
    %3145 = vmatprep.subr.mxu0 0.0
    %3146 = vmatpush1.msra.mxu0 0.0
    %3147 = vmatprep.subr.mxu0 0.0
    %3148 = vmatpush1.msra.mxu0 0.0
    %3149 = vmatprep.subr.mxu0 0.0
    %3150 = vmatpush1.msra.mxu0 0.0
    %3151 = vmatprep.subr.mxu0 0.0
    %3152 = vmatpush1.msra.mxu0 0.0
    %3153 = vmatprep.subr.mxu0 0.0
    %3154 = vmatpush1.msra.mxu0 0.0
    %3155 = vmatprep.mubr.f32.mxu0 0.0
    %3156 = vmatmul.mubr.f32.gmra.mrb[0].mxu0 %v3089
    %v3157 = vpop.f32.mrb[0].mxu0
    %v3158 = vadd.f32 0.0, %v3157
    %v3159 = vpop.f32.mrb[0].mxu0
    %3160 = vdwg.mxu0
    %v3162 = vsel %vm517, %v3077, 0
    %v3165 = vsel %vm517, %v3158, 0
    %3167 = vmatprep.subr.mxu0 0.0
    %3168 = vmatpush1.msra.mxu0 %v2483
    %3169 = vmatprep.subr.mxu0 0.0
    %3170 = vmatpush1.msra.mxu0 0.0
    %3171 = vmatprep.subr.mxu0 0.0
    %3172 = vmatpush1.msra.mxu0 0.0
    %3173 = vmatprep.subr.mxu0 0.0
    %3174 = vmatpush1.msra.mxu0 0.0
    %3175 = vmatprep.subr.mxu0 0.0
    %3176 = vmatpush1.msra.mxu0 0.0
    %3177 = vmatprep.subr.mxu0 0.0
    %3178 = vmatpush1.msra.mxu0 0.0
    %3179 = vmatprep.subr.mxu0 0.0
    %3180 = vmatpush1.msra.mxu0 0.0
    %3181 = vmatprep.subr.mxu0 0.0
    %3182 = vmatpush1.msra.mxu0 0.0
    %3183 = vmatprep.subr.mxu0 0.0
    %3184 = vmatpush1.msra.mxu0 0.0
    %3185 = vmatprep.subr.mxu0 0.0
    %3186 = vmatpush1.msra.mxu0 0.0
    %3187 = vmatprep.subr.mxu0 0.0
    %3188 = vmatpush1.msra.mxu0 0.0
    %3189 = vmatprep.subr.mxu0 0.0
    %3190 = vmatpush1.msra.mxu0 0.0
    %3191 = vmatprep.subr.mxu0 0.0
    %3192 = vmatpush1.msra.mxu0 0.0
    %3193 = vmatprep.subr.mxu0 0.0
    %3194 = vmatpush1.msra.mxu0 0.0
    %3195 = vmatprep.subr.mxu0 0.0
    %3196 = vmatpush1.msra.mxu0 0.0
    %3197 = vmatprep.subr.mxu0 0.0
    %3198 = vmatpush1.msra.mxu0 0.0
    %3199 = vmatprep.subr.mxu0 0.0
    %3200 = vmatpush1.msra.mxu0 0.0
    %3201 = vmatprep.subr.mxu0 0.0
    %3202 = vmatpush1.msra.mxu0 0.0
    %3203 = vmatprep.subr.mxu0 0.0
    %3204 = vmatpush1.msra.mxu0 0.0
    %3205 = vmatprep.subr.mxu0 0.0
    %3206 = vmatpush1.msra.mxu0 0.0
    %3207 = vmatprep.subr.mxu0 0.0
    %3208 = vmatpush1.msra.mxu0 0.0
    %3209 = vmatprep.subr.mxu0 0.0
    %3210 = vmatpush1.msra.mxu0 0.0
    %3211 = vmatprep.subr.mxu0 0.0
    %3212 = vmatpush1.msra.mxu0 0.0
    %3213 = vmatprep.subr.mxu0 0.0
    %3214 = vmatpush1.msra.mxu0 0.0
    %3215 = vmatprep.subr.mxu0 0.0
    %3216 = vmatpush1.msra.mxu0 0.0
    %3217 = vmatprep.subr.mxu0 0.0
    %3218 = vmatpush1.msra.mxu0 0.0
    %3219 = vmatprep.subr.mxu0 0.0
    %3220 = vmatpush1.msra.mxu0 0.0
    %3221 = vmatprep.subr.mxu0 0.0
    %3222 = vmatpush1.msra.mxu0 0.0
    %3223 = vmatprep.subr.mxu0 0.0
    %3224 = vmatpush1.msra.mxu0 0.0
    %3225 = vmatprep.subr.mxu0 0.0
    %3226 = vmatpush1.msra.mxu0 0.0
    %3227 = vmatprep.subr.mxu0 0.0
    %3228 = vmatpush1.msra.mxu0 0.0
    %3229 = vmatprep.subr.mxu0 0.0
    %3230 = vmatpush1.msra.mxu0 0.0
    %3231 = vmatprep.mubr.f32.mxu0 0.0
    %3232 = vmatmul.mubr.f32.gmra.mrb[0].mxu0 %v3162
    %v3233 = vpop.f32.mrb[0].mxu0
    %v3234 = vadd.f32 0.0, %v3233
    %v3235 = vpop.f32.mrb[0].mxu0
    %3236 = vmatprep.mubr.f32.mxu0 0.0
    %3237 = vmatmul.mubr.f32.gmra.mrb[0].mxu0 %v3165
    %v3238 = vpop.f32.mrb[0].mxu0
    %v3239 = vadd.f32 0.0, %v3238
    %v3240 = vpop.f32.mrb[0].mxu0
    %3241 = vdwg.mxu0
    %v3243 = vsel %vm517, %v2737, 0
    %v3246 = vsel %vm517, %v2810, 0
    %3248 = vmatprep.subr.mxu0 0.0
    %3249 = vmatpush1.msra.mxu0 %v2482
    %3250 = vmatprep.subr.mxu0 0.0
    %3251 = vmatpush1.msra.mxu0 0.0
    %3252 = vmatprep.subr.mxu0 0.0
    %3253 = vmatpush1.msra.mxu0 0.0
    %3254 = vmatprep.subr.mxu0 0.0
    %3255 = vmatpush1.msra.mxu0 0.0
    %3256 = vmatprep.subr.mxu0 0.0
    %3257 = vmatpush1.msra.mxu0 0.0
    %3258 = vmatprep.subr.mxu0 0.0
    %3259 = vmatpush1.msra.mxu0 0.0
    %3260 = vmatprep.subr.mxu0 0.0
    %3261 = vmatpush1.msra.mxu0 0.0
    %3262 = vmatprep.subr.mxu0 0.0
    %3263 = vmatpush1.msra.mxu0 0.0
    %3264 = vmatprep.subr.mxu0 0.0
    %3265 = vmatpush1.msra.mxu0 0.0
    %3266 = vmatprep.subr.mxu0 0.0
    %3267 = vmatpush1.msra.mxu0 0.0
    %3268 = vmatprep.subr.mxu0 0.0
    %3269 = vmatpush1.msra.mxu0 0.0
    %3270 = vmatprep.subr.mxu0 0.0
    %3271 = vmatpush1.msra.mxu0 0.0
    %3272 = vmatprep.subr.mxu0 0.0
    %3273 = vmatpush1.msra.mxu0 0.0
    %3274 = vmatprep.subr.mxu0 0.0
    %3275 = vmatpush1.msra.mxu0 0.0
    %3276 = vmatprep.subr.mxu0 0.0
    %3277 = vmatpush1.msra.mxu0 0.0
    %3278 = vmatprep.subr.mxu0 0.0
    %3279 = vmatpush1.msra.mxu0 0.0
    %3280 = vmatprep.subr.mxu0 0.0
    %3281 = vmatpush1.msra.mxu0 0.0
    %3282 = vmatprep.subr.mxu0 0.0
    %3283 = vmatpush1.msra.mxu0 0.0
    %3284 = vmatprep.subr.mxu0 0.0
    %3285 = vmatpush1.msra.mxu0 0.0
    %3286 = vmatprep.subr.mxu0 0.0
    %3287 = vmatpush1.msra.mxu0 0.0
    %3288 = vmatprep.subr.mxu0 0.0
    %3289 = vmatpush1.msra.mxu0 0.0
    %3290 = vmatprep.subr.mxu0 0.0
    %3291 = vmatpush1.msra.mxu0 0.0
    %3292 = vmatprep.subr.mxu0 0.0
    %3293 = vmatpush1.msra.mxu0 0.0
    %3294 = vmatprep.subr.mxu0 0.0
    %3295 = vmatpush1.msra.mxu0 0.0
    %3296 = vmatprep.subr.mxu0 0.0
    %3297 = vmatpush1.msra.mxu0 0.0
    %3298 = vmatprep.subr.mxu0 0.0
    %3299 = vmatpush1.msra.mxu0 0.0
    %3300 = vmatprep.subr.mxu0 0.0
    %3301 = vmatpush1.msra.mxu0 0.0
    %3302 = vmatprep.subr.mxu0 0.0
    %3303 = vmatpush1.msra.mxu0 0.0
    %3304 = vmatprep.subr.mxu0 0.0
    %3305 = vmatpush1.msra.mxu0 0.0
    %3306 = vmatprep.subr.mxu0 0.0
    %3307 = vmatpush1.msra.mxu0 0.0
    %3308 = vmatprep.subr.mxu0 0.0
    %3309 = vmatpush1.msra.mxu0 0.0
    %3310 = vmatprep.subr.mxu0 0.0
    %3311 = vmatpush1.msra.mxu0 0.0
    %3312 = vmatprep.mubr.f32.mxu0 0.0
    %3313 = vmatmul.mubr.f32.gmra.mrb[0].mxu0 %v3243
    %v3314 = vpop.f32.mrb[0].mxu0
    %v3315 = vadd.f32 %v3234, %v3314
    %v3316 = vpop.f32.mrb[0].mxu0
    %3317 = vmatprep.mubr.f32.mxu0 0.0
    %3318 = vmatmul.mubr.f32.gmra.mrb[0].mxu0 %v3246
    %v3319 = vpop.f32.mrb[0].mxu0
    %v3320 = vadd.f32 %v3239, %v3319
    %v3321 = vpop.f32.mrb[0].mxu0
    %3322 = vdwg.mxu0
    %3323 = vrot.lane.b32.xlu0 %v2290, 112
    %v3324 = vpop.permute.xlu0 %3323
    %3325 = vrot.lane.b32.xlu0 %v2375, 112
    %v3326 = vpop.permute.xlu0 %3325
    %3327 = vrot.lane.b32.xlu0 %v2380, 112
    %v3328 = vpop.permute.xlu0 %3327
    %v3329 = vsel %vm517, %v3324, 0
    %v3331 = vsel %vm517, %v3326, 0
    %v3333 = vsel %vm517, %v3328, 0
    %3335 = vmatprep.subr.mxu0 0.0
    %3336 = vmatpush1.xpose.msra.mxu0 %v3331
    %3337 = vmatprep.subr.mxu0 0.0
    %3338 = vmatpush1.xpose.msra.mxu0 %v3333
    %3339 = vmatprep.subr.mxu0 0.0
    %3340 = vmatpush1.xpose.msra.mxu0 0.0
    %3341 = vmatprep.subr.mxu0 0.0
    %3342 = vmatpush1.xpose.msra.mxu0 0.0
    %3343 = vmatprep.subr.mxu0 0.0
    %3344 = vmatpush1.xpose.msra.mxu0 0.0
    %3345 = vmatprep.subr.mxu0 0.0
    %3346 = vmatpush1.xpose.msra.mxu0 0.0
    %3347 = vmatprep.subr.mxu0 0.0
    %3348 = vmatpush1.xpose.msra.mxu0 0.0
    %3349 = vmatprep.subr.mxu0 0.0
    %3350 = vmatpush1.xpose.msra.mxu0 0.0
    %3351 = vmatprep.subr.mxu0 0.0
    %3352 = vmatpush1.xpose.msra.mxu0 0.0
    %3353 = vmatprep.subr.mxu0 0.0
    %3354 = vmatpush1.xpose.msra.mxu0 0.0
    %3355 = vmatprep.subr.mxu0 0.0
    %3356 = vmatpush1.xpose.msra.mxu0 0.0
    %3357 = vmatprep.subr.mxu0 0.0
    %3358 = vmatpush1.xpose.msra.mxu0 0.0
    %3359 = vmatprep.subr.mxu0 0.0
    %3360 = vmatpush1.xpose.msra.mxu0 0.0
    %3361 = vmatprep.subr.mxu0 0.0
    %3362 = vmatpush1.xpose.msra.mxu0 0.0
    %3363 = vmatprep.subr.mxu0 0.0
    %3364 = vmatpush1.xpose.msra.mxu0 0.0
    %3365 = vmatprep.subr.mxu0 0.0
    %3366 = vmatpush1.xpose.msra.mxu0 0.0
    %3367 = vmatprep.subr.mxu0 0.0
    %3368 = vmatpush1.xpose.msra.mxu0 0.0
    %3369 = vmatprep.subr.mxu0 0.0
    %3370 = vmatpush1.xpose.msra.mxu0 0.0
    %3371 = vmatprep.subr.mxu0 0.0
    %3372 = vmatpush1.xpose.msra.mxu0 0.0
    %3373 = vmatprep.subr.mxu0 0.0
    %3374 = vmatpush1.xpose.msra.mxu0 0.0
    %3375 = vmatprep.subr.mxu0 0.0
    %3376 = vmatpush1.xpose.msra.mxu0 0.0
    %3377 = vmatprep.subr.mxu0 0.0
    %3378 = vmatpush1.xpose.msra.mxu0 0.0
    %3379 = vmatprep.subr.mxu0 0.0
    %3380 = vmatpush1.xpose.msra.mxu0 0.0
    %3381 = vmatprep.subr.mxu0 0.0
    %3382 = vmatpush1.xpose.msra.mxu0 0.0
    %3383 = vmatprep.subr.mxu0 0.0
    %3384 = vmatpush1.xpose.msra.mxu0 0.0
    %3385 = vmatprep.subr.mxu0 0.0
    %3386 = vmatpush1.xpose.msra.mxu0 0.0
    %3387 = vmatprep.subr.mxu0 0.0
    %3388 = vmatpush1.xpose.msra.mxu0 0.0
    %3389 = vmatprep.subr.mxu0 0.0
    %3390 = vmatpush1.xpose.msra.mxu0 0.0
    %3391 = vmatprep.subr.mxu0 0.0
    %3392 = vmatpush1.xpose.msra.mxu0 0.0
    %3393 = vmatprep.subr.mxu0 0.0
    %3394 = vmatpush1.xpose.msra.mxu0 0.0
    %3395 = vmatprep.subr.mxu0 0.0
    %3396 = vmatpush1.xpose.msra.mxu0 0.0
    %3397 = vmatprep.subr.mxu0 0.0
    %3398 = vmatpush1.xpose.msra.mxu0 0.0
    %3399 = vmatprep.mubr.f32.mxu0 0.0
    %3400 = vmatmul.mubr.f32.gmra.mrb[0].mxu0 %v3329
    %v3401 = vpop.f32.mrb[0].mxu0
    %v3402 = vadd.f32 %v259, %v3401
    %v3403 = vpop.f32.mrb[0].mxu0
    %3404 = vdwg.mxu0
    %3405 = vrot.lane.b32.xlu0 %v2291, 112
    %v3406 = vpop.permute.xlu0 %3405
    %3407 = vrot.lane.b32.xlu0 %v2385, 112
    %v3408 = vpop.permute.xlu0 %3407
    %3409 = vrot.lane.b32.xlu0 %v2390, 112
    %v3410 = vpop.permute.xlu0 %3409
    %v3411 = vsel %vm517, %v3406, 0
    %v3413 = vsel %vm517, %v3408, 0
    %v3415 = vsel %vm517, %v3410, 0
    %3417 = vmatprep.subr.mxu0 0.0
    %3418 = vmatpush1.xpose.msra.mxu0 %v3413
    %3419 = vmatprep.subr.mxu0 0.0
    %3420 = vmatpush1.xpose.msra.mxu0 %v3415
    %3421 = vmatprep.subr.mxu0 0.0
    %3422 = vmatpush1.xpose.msra.mxu0 0.0
    %3423 = vmatprep.subr.mxu0 0.0
    %3424 = vmatpush1.xpose.msra.mxu0 0.0
    %3425 = vmatprep.subr.mxu0 0.0
    %3426 = vmatpush1.xpose.msra.mxu0 0.0
    %3427 = vmatprep.subr.mxu0 0.0
    %3428 = vmatpush1.xpose.msra.mxu0 0.0
    %3429 = vmatprep.subr.mxu0 0.0
    %3430 = vmatpush1.xpose.msra.mxu0 0.0
    %3431 = vmatprep.subr.mxu0 0.0
    %3432 = vmatpush1.xpose.msra.mxu0 0.0
    %3433 = vmatprep.subr.mxu0 0.0
    %3434 = vmatpush1.xpose.msra.mxu0 0.0
    %3435 = vmatprep.subr.mxu0 0.0
    %3436 = vmatpush1.xpose.msra.mxu0 0.0
    %3437 = vmatprep.subr.mxu0 0.0
    %3438 = vmatpush1.xpose.msra.mxu0 0.0
    %3439 = vmatprep.subr.mxu0 0.0
    %3440 = vmatpush1.xpose.msra.mxu0 0.0
    %3441 = vmatprep.subr.mxu0 0.0
    %3442 = vmatpush1.xpose.msra.mxu0 0.0
    %3443 = vmatprep.subr.mxu0 0.0
    %3444 = vmatpush1.xpose.msra.mxu0 0.0
    %3445 = vmatprep.subr.mxu0 0.0
    %3446 = vmatpush1.xpose.msra.mxu0 0.0
    %3447 = vmatprep.subr.mxu0 0.0
    %3448 = vmatpush1.xpose.msra.mxu0 0.0
    %3449 = vmatprep.subr.mxu0 0.0
    %3450 = vmatpush1.xpose.msra.mxu0 0.0
    %3451 = vmatprep.subr.mxu0 0.0
    %3452 = vmatpush1.xpose.msra.mxu0 0.0
    %3453 = vmatprep.subr.mxu0 0.0
    %3454 = vmatpush1.xpose.msra.mxu0 0.0
    %3455 = vmatprep.subr.mxu0 0.0
    %3456 = vmatpush1.xpose.msra.mxu0 0.0
    %3457 = vmatprep.subr.mxu0 0.0
    %3458 = vmatpush1.xpose.msra.mxu0 0.0
    %3459 = vmatprep.subr.mxu0 0.0
    %3460 = vmatpush1.xpose.msra.mxu0 0.0
    %3461 = vmatprep.subr.mxu0 0.0
    %3462 = vmatpush1.xpose.msra.mxu0 0.0
    %3463 = vmatprep.subr.mxu0 0.0
    %3464 = vmatpush1.xpose.msra.mxu0 0.0
    %3465 = vmatprep.subr.mxu0 0.0
    %3466 = vmatpush1.xpose.msra.mxu0 0.0
    %3467 = vmatprep.subr.mxu0 0.0
    %3468 = vmatpush1.xpose.msra.mxu0 0.0
    %3469 = vmatprep.subr.mxu0 0.0
    %3470 = vmatpush1.xpose.msra.mxu0 0.0
    %3471 = vmatprep.subr.mxu0 0.0
    %3472 = vmatpush1.xpose.msra.mxu0 0.0
    %3473 = vmatprep.subr.mxu0 0.0
    %3474 = vmatpush1.xpose.msra.mxu0 0.0
    %3475 = vmatprep.subr.mxu0 0.0
    %3476 = vmatpush1.xpose.msra.mxu0 0.0
    %3477 = vmatprep.subr.mxu0 0.0
    %3478 = vmatpush1.xpose.msra.mxu0 0.0
    %3479 = vmatprep.subr.mxu0 0.0
    %3480 = vmatpush1.xpose.msra.mxu0 0.0
    %3481 = vmatprep.mubr.f32.mxu0 0.0
    %3482 = vmatmul.mubr.f32.gmra.mrb[0].mxu0 %v3411
    %v3483 = vpop.f32.mrb[0].mxu0
    %v3484 = vadd.f32 %v260, %v3483
    %v3485 = vpop.f32.mrb[0].mxu0
    %3486 = vdwg.mxu0
    %v3487 = vsel %vm2644, %v3402, -inf
    %3488 = vmax.xlane.f32.xlu0 %v3487
    %v3489 = vpop.xlane.xlu0 %3488
    %v3490 = vsel %vm2644, %v3484, -inf
    %3491 = vmax.xlane.f32.xlu0 %v3490
    %v3492 = vpop.xlane.xlu0 %3491
    %v3493 = vsub.f32 %v3402, %v3489
    %v3494 = vsub.f32 %v3484, %v3492
    %v3495 = vmul.f32 %v3493, 1.442695
    %v3496 = vpow.pop %v3495
    %v3497 = vmul.f32 %v3494, 1.442695
    %v3498 = vpow.pop %v3497
    %v3499 = vsel %vm2644, %v3496, 0.0
    %3500 = vadd.xlane.f32.xlu0 %v3499
    %v3501 = vpop.xlane.xlu0 %3500
    %v3502 = vsel %vm2644, %v3498, 0.0
    %3503 = vadd.xlane.f32.xlu0 %v3502
    %v3504 = vpop.xlane.xlu0 %3503
    %v3505 = vrcp.pop %v3501
    %v3506 = vrcp.pop %v3504
    %v3507 = vmul.f32 %v3496, %v3505
    %v3508 = vmul.f32 %v3498, %v3506
    %3509 = vrot.lane.b32.xlu0 %v2464, 112
    %v3510 = vpop.permute.xlu0 %3509
    %3511 = vrot.lane.b32.xlu0 %v2469, 112
    %v3512 = vpop.permute.xlu0 %3511
    %v3516 = vsel %vm2644, %v3507, 0
    %3518 = vmatprep.subr.mxu0 0.0
    %3519 = vmatpush1.msra.mxu0 %v3510
    %3520 = vmatprep.subr.mxu0 0.0
    %3521 = vmatpush1.msra.mxu0 %v3512
    %3522 = vmatprep.subr.mxu0 0.0
    %3523 = vmatpush1.msra.mxu0 0.0
    %3524 = vmatprep.subr.mxu0 0.0
    %3525 = vmatpush1.msra.mxu0 0.0
    %3526 = vmatprep.subr.mxu0 0.0
    %3527 = vmatpush1.msra.mxu0 0.0
    %3528 = vmatprep.subr.mxu0 0.0
    %3529 = vmatpush1.msra.mxu0 0.0
    %3530 = vmatprep.subr.mxu0 0.0
    %3531 = vmatpush1.msra.mxu0 0.0
    %3532 = vmatprep.subr.mxu0 0.0
    %3533 = vmatpush1.msra.mxu0 0.0
    %3534 = vmatprep.subr.mxu0 0.0
    %3535 = vmatpush1.msra.mxu0 0.0
    %3536 = vmatprep.subr.mxu0 0.0
    %3537 = vmatpush1.msra.mxu0 0.0
    %3538 = vmatprep.subr.mxu0 0.0
    %3539 = vmatpush1.msra.mxu0 0.0
    %3540 = vmatprep.subr.mxu0 0.0
    %3541 = vmatpush1.msra.mxu0 0.0
    %3542 = vmatprep.subr.mxu0 0.0
    %3543 = vmatpush1.msra.mxu0 0.0
    %3544 = vmatprep.subr.mxu0 0.0
    %3545 = vmatpush1.msra.mxu0 0.0
    %3546 = vmatprep.subr.mxu0 0.0
    %3547 = vmatpush1.msra.mxu0 0.0
    %3548 = vmatprep.subr.mxu0 0.0
    %3549 = vmatpush1.msra.mxu0 0.0
    %3550 = vmatprep.subr.mxu0 0.0
    %3551 = vmatpush1.msra.mxu0 0.0
    %3552 = vmatprep.subr.mxu0 0.0
    %3553 = vmatpush1.msra.mxu0 0.0
    %3554 = vmatprep.subr.mxu0 0.0
    %3555 = vmatpush1.msra.mxu0 0.0
    %3556 = vmatprep.subr.mxu0 0.0
    %3557 = vmatpush1.msra.mxu0 0.0
    %3558 = vmatprep.subr.mxu0 0.0
    %3559 = vmatpush1.msra.mxu0 0.0
    %3560 = vmatprep.subr.mxu0 0.0
    %3561 = vmatpush1.msra.mxu0 0.0
    %3562 = vmatprep.subr.mxu0 0.0
    %3563 = vmatpush1.msra.mxu0 0.0
    %3564 = vmatprep.subr.mxu0 0.0
    %3565 = vmatpush1.msra.mxu0 0.0
    %3566 = vmatprep.subr.mxu0 0.0
    %3567 = vmatpush1.msra.mxu0 0.0
    %3568 = vmatprep.subr.mxu0 0.0
    %3569 = vmatpush1.msra.mxu0 0.0
    %3570 = vmatprep.subr.mxu0 0.0
    %3571 = vmatpush1.msra.mxu0 0.0
    %3572 = vmatprep.subr.mxu0 0.0
    %3573 = vmatpush1.msra.mxu0 0.0
    %3574 = vmatprep.subr.mxu0 0.0
    %3575 = vmatpush1.msra.mxu0 0.0
    %3576 = vmatprep.subr.mxu0 0.0
    %3577 = vmatpush1.msra.mxu0 0.0
    %3578 = vmatprep.subr.mxu0 0.0
    %3579 = vmatpush1.msra.mxu0 0.0
    %3580 = vmatprep.subr.mxu0 0.0
    %3581 = vmatpush1.msra.mxu0 0.0
    %3582 = vmatprep.mubr.f32.mxu0 0.0
    %3583 = vmatmul.mubr.f32.gmra.mrb[0].mxu0 %v3516
    %v3584 = vpop.f32.mrb[0].mxu0
    %v3585 = vadd.f32 0.0, %v3584
    %v3586 = vpop.f32.mrb[0].mxu0
    %3587 = vdwg.mxu0
    %3588 = vrot.lane.b32.xlu0 %v2474, 112
    %v3589 = vpop.permute.xlu0 %3588
    %3590 = vrot.lane.b32.xlu0 %v2479, 112
    %v3591 = vpop.permute.xlu0 %3590
    %v3595 = vsel %vm2644, %v3508, 0
    %3597 = vmatprep.subr.mxu0 0.0
    %3598 = vmatpush1.msra.mxu0 %v3589
    %3599 = vmatprep.subr.mxu0 0.0
    %3600 = vmatpush1.msra.mxu0 %v3591
    %3601 = vmatprep.subr.mxu0 0.0
    %3602 = vmatpush1.msra.mxu0 0.0
    %3603 = vmatprep.subr.mxu0 0.0
    %3604 = vmatpush1.msra.mxu0 0.0
    %3605 = vmatprep.subr.mxu0 0.0
    %3606 = vmatpush1.msra.mxu0 0.0
    %3607 = vmatprep.subr.mxu0 0.0
    %3608 = vmatpush1.msra.mxu0 0.0
    %3609 = vmatprep.subr.mxu0 0.0
    %3610 = vmatpush1.msra.mxu0 0.0
    %3611 = vmatprep.subr.mxu0 0.0
    %3612 = vmatpush1.msra.mxu0 0.0
    %3613 = vmatprep.subr.mxu0 0.0
    %3614 = vmatpush1.msra.mxu0 0.0
    %3615 = vmatprep.subr.mxu0 0.0
    %3616 = vmatpush1.msra.mxu0 0.0
    %3617 = vmatprep.subr.mxu0 0.0
    %3618 = vmatpush1.msra.mxu0 0.0
    %3619 = vmatprep.subr.mxu0 0.0
    %3620 = vmatpush1.msra.mxu0 0.0
    %3621 = vmatprep.subr.mxu0 0.0
    %3622 = vmatpush1.msra.mxu0 0.0
    %3623 = vmatprep.subr.mxu0 0.0
    %3624 = vmatpush1.msra.mxu0 0.0
    %3625 = vmatprep.subr.mxu0 0.0
    %3626 = vmatpush1.msra.mxu0 0.0
    %3627 = vmatprep.subr.mxu0 0.0
    %3628 = vmatpush1.msra.mxu0 0.0
    %3629 = vmatprep.subr.mxu0 0.0
    %3630 = vmatpush1.msra.mxu0 0.0
    %3631 = vmatprep.subr.mxu0 0.0
    %3632 = vmatpush1.msra.mxu0 0.0
    %3633 = vmatprep.subr.mxu0 0.0
    %3634 = vmatpush1.msra.mxu0 0.0
    %3635 = vmatprep.subr.mxu0 0.0
    %3636 = vmatpush1.msra.mxu0 0.0
    %3637 = vmatprep.subr.mxu0 0.0
    %3638 = vmatpush1.msra.mxu0 0.0
    %3639 = vmatprep.subr.mxu0 0.0
    %3640 = vmatpush1.msra.mxu0 0.0
    %3641 = vmatprep.subr.mxu0 0.0
    %3642 = vmatpush1.msra.mxu0 0.0
    %3643 = vmatprep.subr.mxu0 0.0
    %3644 = vmatpush1.msra.mxu0 0.0
    %3645 = vmatprep.subr.mxu0 0.0
    %3646 = vmatpush1.msra.mxu0 0.0
    %3647 = vmatprep.subr.mxu0 0.0
    %3648 = vmatpush1.msra.mxu0 0.0
    %3649 = vmatprep.subr.mxu0 0.0
    %3650 = vmatpush1.msra.mxu0 0.0
    %3651 = vmatprep.subr.mxu0 0.0
    %3652 = vmatpush1.msra.mxu0 0.0
    %3653 = vmatprep.subr.mxu0 0.0
    %3654 = vmatpush1.msra.mxu0 0.0
    %3655 = vmatprep.subr.mxu0 0.0
    %3656 = vmatpush1.msra.mxu0 0.0
    %3657 = vmatprep.subr.mxu0 0.0
    %3658 = vmatpush1.msra.mxu0 0.0
    %3659 = vmatprep.subr.mxu0 0.0
    %3660 = vmatpush1.msra.mxu0 0.0
    %3661 = vmatprep.mubr.f32.mxu0 0.0
    %3662 = vmatmul.mubr.f32.gmra.mrb[0].mxu0 %v3595
    %v3663 = vpop.f32.mrb[0].mxu0
    %v3664 = vadd.f32 0.0, %v3663
    %v3665 = vpop.f32.mrb[0].mxu0
    %3666 = vdwg.mxu0
    %v3668 = vsel %vm517, %v3585, 0
    %v3671 = vsel %vm517, %v3664, 0
    %3673 = vmatprep.subr.mxu0 0.0
    %3674 = vmatpush1.msra.mxu0 %v2484
    %3675 = vmatprep.subr.mxu0 0.0
    %3676 = vmatpush1.msra.mxu0 0.0
    %3677 = vmatprep.subr.mxu0 0.0
    %3678 = vmatpush1.msra.mxu0 0.0
    %3679 = vmatprep.subr.mxu0 0.0
    %3680 = vmatpush1.msra.mxu0 0.0
    %3681 = vmatprep.subr.mxu0 0.0
    %3682 = vmatpush1.msra.mxu0 0.0
    %3683 = vmatprep.subr.mxu0 0.0
    %3684 = vmatpush1.msra.mxu0 0.0
    %3685 = vmatprep.subr.mxu0 0.0
    %3686 = vmatpush1.msra.mxu0 0.0
    %3687 = vmatprep.subr.mxu0 0.0
    %3688 = vmatpush1.msra.mxu0 0.0
    %3689 = vmatprep.subr.mxu0 0.0
    %3690 = vmatpush1.msra.mxu0 0.0
    %3691 = vmatprep.subr.mxu0 0.0
    %3692 = vmatpush1.msra.mxu0 0.0
    %3693 = vmatprep.subr.mxu0 0.0
    %3694 = vmatpush1.msra.mxu0 0.0
    %3695 = vmatprep.subr.mxu0 0.0
    %3696 = vmatpush1.msra.mxu0 0.0
    %3697 = vmatprep.subr.mxu0 0.0
    %3698 = vmatpush1.msra.mxu0 0.0
    %3699 = vmatprep.subr.mxu0 0.0
    %3700 = vmatpush1.msra.mxu0 0.0
    %3701 = vmatprep.subr.mxu0 0.0
    %3702 = vmatpush1.msra.mxu0 0.0
    %3703 = vmatprep.subr.mxu0 0.0
    %3704 = vmatpush1.msra.mxu0 0.0
    %3705 = vmatprep.subr.mxu0 0.0
    %3706 = vmatpush1.msra.mxu0 0.0
    %3707 = vmatprep.subr.mxu0 0.0
    %3708 = vmatpush1.msra.mxu0 0.0
    %3709 = vmatprep.subr.mxu0 0.0
    %3710 = vmatpush1.msra.mxu0 0.0
    %3711 = vmatprep.subr.mxu0 0.0
    %3712 = vmatpush1.msra.mxu0 0.0
    %3713 = vmatprep.subr.mxu0 0.0
    %3714 = vmatpush1.msra.mxu0 0.0
    %3715 = vmatprep.subr.mxu0 0.0
    %3716 = vmatpush1.msra.mxu0 0.0
    %3717 = vmatprep.subr.mxu0 0.0
    %3718 = vmatpush1.msra.mxu0 0.0
    %3719 = vmatprep.subr.mxu0 0.0
    %3720 = vmatpush1.msra.mxu0 0.0
    %3721 = vmatprep.subr.mxu0 0.0
    %3722 = vmatpush1.msra.mxu0 0.0
    %3723 = vmatprep.subr.mxu0 0.0
    %3724 = vmatpush1.msra.mxu0 0.0
    %3725 = vmatprep.subr.mxu0 0.0
    %3726 = vmatpush1.msra.mxu0 0.0
    %3727 = vmatprep.subr.mxu0 0.0
    %3728 = vmatpush1.msra.mxu0 0.0
    %3729 = vmatprep.subr.mxu0 0.0
    %3730 = vmatpush1.msra.mxu0 0.0
    %3731 = vmatprep.subr.mxu0 0.0
    %3732 = vmatpush1.msra.mxu0 0.0
    %3733 = vmatprep.subr.mxu0 0.0
    %3734 = vmatpush1.msra.mxu0 0.0
    %3735 = vmatprep.subr.mxu0 0.0
    %3736 = vmatpush1.msra.mxu0 0.0
    %3737 = vmatprep.mubr.f32.mxu0 0.0
    %3738 = vmatmul.mubr.f32.gmra.mrb[0].mxu0 %v3668
    %v3739 = vpop.f32.mrb[0].mxu0
    %v3740 = vadd.f32 0.0, %v3739
    %v3741 = vpop.f32.mrb[0].mxu0
    %3742 = vmatprep.mubr.f32.mxu0 0.0
    %3743 = vmatmul.mubr.f32.gmra.mrb[0].mxu0 %v3671
    %v3744 = vpop.f32.mrb[0].mxu0
    %v3745 = vadd.f32 0.0, %v3744
    %v3746 = vpop.f32.mrb[0].mxu0
    %3747 = vdwg.mxu0
    %v3748 = vadd.f32 %v3315, %v3740
    %v3749 = vadd.f32 %v3320, %v3745
    %3750 = vrot.lane.b32.xlu0 %v2290, 104
    %v3751 = vpop.permute.xlu0 %3750
    %3752 = vrot.lane.b32.xlu0 %v2375, 104
    %v3753 = vpop.permute.xlu0 %3752
    %3754 = vrot.lane.b32.xlu0 %v2380, 104
    %v3755 = vpop.permute.xlu0 %3754
    %v3756 = vsel %vm517, %v3751, 0
    %v3758 = vsel %vm517, %v3753, 0
    %v3760 = vsel %vm517, %v3755, 0
    %3762 = vmatprep.subr.mxu0 0.0
    %3763 = vmatpush1.xpose.msra.mxu0 %v3758
    %3764 = vmatprep.subr.mxu0 0.0
    %3765 = vmatpush1.xpose.msra.mxu0 %v3760
    %3766 = vmatprep.subr.mxu0 0.0
    %3767 = vmatpush1.xpose.msra.mxu0 0.0
    %3768 = vmatprep.subr.mxu0 0.0
    %3769 = vmatpush1.xpose.msra.mxu0 0.0
    %3770 = vmatprep.subr.mxu0 0.0
    %3771 = vmatpush1.xpose.msra.mxu0 0.0
    %3772 = vmatprep.subr.mxu0 0.0
    %3773 = vmatpush1.xpose.msra.mxu0 0.0
    %3774 = vmatprep.subr.mxu0 0.0
    %3775 = vmatpush1.xpose.msra.mxu0 0.0
    %3776 = vmatprep.subr.mxu0 0.0
    %3777 = vmatpush1.xpose.msra.mxu0 0.0
    %3778 = vmatprep.subr.mxu0 0.0
    %3779 = vmatpush1.xpose.msra.mxu0 0.0
    %3780 = vmatprep.subr.mxu0 0.0
    %3781 = vmatpush1.xpose.msra.mxu0 0.0
    %3782 = vmatprep.subr.mxu0 0.0
    %3783 = vmatpush1.xpose.msra.mxu0 0.0
    %3784 = vmatprep.subr.mxu0 0.0
    %3785 = vmatpush1.xpose.msra.mxu0 0.0
    %3786 = vmatprep.subr.mxu0 0.0
    %3787 = vmatpush1.xpose.msra.mxu0 0.0
    %3788 = vmatprep.subr.mxu0 0.0
    %3789 = vmatpush1.xpose.msra.mxu0 0.0
    %3790 = vmatprep.subr.mxu0 0.0
    %3791 = vmatpush1.xpose.msra.mxu0 0.0
    %3792 = vmatprep.subr.mxu0 0.0
    %3793 = vmatpush1.xpose.msra.mxu0 0.0
    %3794 = vmatprep.subr.mxu0 0.0
    %3795 = vmatpush1.xpose.msra.mxu0 0.0
    %3796 = vmatprep.subr.mxu0 0.0
    %3797 = vmatpush1.xpose.msra.mxu0 0.0
    %3798 = vmatprep.subr.mxu0 0.0
    %3799 = vmatpush1.xpose.msra.mxu0 0.0
    %3800 = vmatprep.subr.mxu0 0.0
    %3801 = vmatpush1.xpose.msra.mxu0 0.0
    %3802 = vmatprep.subr.mxu0 0.0
    %3803 = vmatpush1.xpose.msra.mxu0 0.0
    %3804 = vmatprep.subr.mxu0 0.0
    %3805 = vmatpush1.xpose.msra.mxu0 0.0
    %3806 = vmatprep.subr.mxu0 0.0
    %3807 = vmatpush1.xpose.msra.mxu0 0.0
    %3808 = vmatprep.subr.mxu0 0.0
    %3809 = vmatpush1.xpose.msra.mxu0 0.0
    %3810 = vmatprep.subr.mxu0 0.0
    %3811 = vmatpush1.xpose.msra.mxu0 0.0
    %3812 = vmatprep.subr.mxu0 0.0
    %3813 = vmatpush1.xpose.msra.mxu0 0.0
    %3814 = vmatprep.subr.mxu0 0.0
    %3815 = vmatpush1.xpose.msra.mxu0 0.0
    %3816 = vmatprep.subr.mxu0 0.0
    %3817 = vmatpush1.xpose.msra.mxu0 0.0
    %3818 = vmatprep.subr.mxu0 0.0
    %3819 = vmatpush1.xpose.msra.mxu0 0.0
    %3820 = vmatprep.subr.mxu0 0.0
    %3821 = vmatpush1.xpose.msra.mxu0 0.0
    %3822 = vmatprep.subr.mxu0 0.0
    %3823 = vmatpush1.xpose.msra.mxu0 0.0
    %3824 = vmatprep.subr.mxu0 0.0
    %3825 = vmatpush1.xpose.msra.mxu0 0.0
    %3826 = vmatprep.mubr.f32.mxu0 0.0
    %3827 = vmatmul.mubr.f32.gmra.mrb[0].mxu0 %v3756
    %v3828 = vpop.f32.mrb[0].mxu0
    %v3829 = vadd.f32 %v259, %v3828
    %v3830 = vpop.f32.mrb[0].mxu0
    %3831 = vdwg.mxu0
    %3832 = vrot.lane.b32.xlu0 %v2291, 104
    %v3833 = vpop.permute.xlu0 %3832
    %3834 = vrot.lane.b32.xlu0 %v2385, 104
    %v3835 = vpop.permute.xlu0 %3834
    %3836 = vrot.lane.b32.xlu0 %v2390, 104
    %v3837 = vpop.permute.xlu0 %3836
    %v3838 = vsel %vm517, %v3833, 0
    %v3840 = vsel %vm517, %v3835, 0
    %v3842 = vsel %vm517, %v3837, 0
    %3844 = vmatprep.subr.mxu0 0.0
    %3845 = vmatpush1.xpose.msra.mxu0 %v3840
    %3846 = vmatprep.subr.mxu0 0.0
    %3847 = vmatpush1.xpose.msra.mxu0 %v3842
    %3848 = vmatprep.subr.mxu0 0.0
    %3849 = vmatpush1.xpose.msra.mxu0 0.0
    %3850 = vmatprep.subr.mxu0 0.0
    %3851 = vmatpush1.xpose.msra.mxu0 0.0
    %3852 = vmatprep.subr.mxu0 0.0
    %3853 = vmatpush1.xpose.msra.mxu0 0.0
    %3854 = vmatprep.subr.mxu0 0.0
    %3855 = vmatpush1.xpose.msra.mxu0 0.0
    %3856 = vmatprep.subr.mxu0 0.0
    %3857 = vmatpush1.xpose.msra.mxu0 0.0
    %3858 = vmatprep.subr.mxu0 0.0
    %3859 = vmatpush1.xpose.msra.mxu0 0.0
    %3860 = vmatprep.subr.mxu0 0.0
    %3861 = vmatpush1.xpose.msra.mxu0 0.0
    %3862 = vmatprep.subr.mxu0 0.0
    %3863 = vmatpush1.xpose.msra.mxu0 0.0
    %3864 = vmatprep.subr.mxu0 0.0
    %3865 = vmatpush1.xpose.msra.mxu0 0.0
    %3866 = vmatprep.subr.mxu0 0.0
    %3867 = vmatpush1.xpose.msra.mxu0 0.0
    %3868 = vmatprep.subr.mxu0 0.0
    %3869 = vmatpush1.xpose.msra.mxu0 0.0
    %3870 = vmatprep.subr.mxu0 0.0
    %3871 = vmatpush1.xpose.msra.mxu0 0.0
    %3872 = vmatprep.subr.mxu0 0.0
    %3873 = vmatpush1.xpose.msra.mxu0 0.0
    %3874 = vmatprep.subr.mxu0 0.0
    %3875 = vmatpush1.xpose.msra.mxu0 0.0
    %3876 = vmatprep.subr.mxu0 0.0
    %3877 = vmatpush1.xpose.msra.mxu0 0.0
    %3878 = vmatprep.subr.mxu0 0.0
    %3879 = vmatpush1.xpose.msra.mxu0 0.0
    %3880 = vmatprep.subr.mxu0 0.0
    %3881 = vmatpush1.xpose.msra.mxu0 0.0
    %3882 = vmatprep.subr.mxu0 0.0
    %3883 = vmatpush1.xpose.msra.mxu0 0.0
    %3884 = vmatprep.subr.mxu0 0.0
    %3885 = vmatpush1.xpose.msra.mxu0 0.0
    %3886 = vmatprep.subr.mxu0 0.0
    %3887 = vmatpush1.xpose.msra.mxu0 0.0
    %3888 = vmatprep.subr.mxu0 0.0
    %3889 = vmatpush1.xpose.msra.mxu0 0.0
    %3890 = vmatprep.subr.mxu0 0.0
    %3891 = vmatpush1.xpose.msra.mxu0 0.0
    %3892 = vmatprep.subr.mxu0 0.0
    %3893 = vmatpush1.xpose.msra.mxu0 0.0
    %3894 = vmatprep.subr.mxu0 0.0
    %3895 = vmatpush1.xpose.msra.mxu0 0.0
    %3896 = vmatprep.subr.mxu0 0.0
    %3897 = vmatpush1.xpose.msra.mxu0 0.0
    %3898 = vmatprep.subr.mxu0 0.0
    %3899 = vmatpush1.xpose.msra.mxu0 0.0
    %3900 = vmatprep.subr.mxu0 0.0
    %3901 = vmatpush1.xpose.msra.mxu0 0.0
    %3902 = vmatprep.subr.mxu0 0.0
    %3903 = vmatpush1.xpose.msra.mxu0 0.0
    %3904 = vmatprep.subr.mxu0 0.0
    %3905 = vmatpush1.xpose.msra.mxu0 0.0
    %3906 = vmatprep.subr.mxu0 0.0
    %3907 = vmatpush1.xpose.msra.mxu0 0.0
    %3908 = vmatprep.mubr.f32.mxu0 0.0
    %3909 = vmatmul.mubr.f32.gmra.mrb[0].mxu0 %v3838
    %v3910 = vpop.f32.mrb[0].mxu0
    %v3911 = vadd.f32 %v260, %v3910
    %v3912 = vpop.f32.mrb[0].mxu0
    %3913 = vdwg.mxu0
    %v3914 = vsel %vm2644, %v3829, -inf
    %3915 = vmax.xlane.f32.xlu0 %v3914
    %v3916 = vpop.xlane.xlu0 %3915
    %v3917 = vsel %vm2644, %v3911, -inf
    %3918 = vmax.xlane.f32.xlu0 %v3917
    %v3919 = vpop.xlane.xlu0 %3918
    %v3920 = vsub.f32 %v3829, %v3916
    %v3921 = vsub.f32 %v3911, %v3919
    %v3922 = vmul.f32 %v3920, 1.442695
    %v3923 = vpow.pop %v3922
    %v3924 = vmul.f32 %v3921, 1.442695
    %v3925 = vpow.pop %v3924
    %v3926 = vsel %vm2644, %v3923, 0.0
    %3927 = vadd.xlane.f32.xlu0 %v3926
    %v3928 = vpop.xlane.xlu0 %3927
    %v3929 = vsel %vm2644, %v3925, 0.0
    %3930 = vadd.xlane.f32.xlu0 %v3929
    %v3931 = vpop.xlane.xlu0 %3930
    %v3932 = vrcp.pop %v3928
    %v3933 = vrcp.pop %v3931
    %v3934 = vmul.f32 %v3923, %v3932
    %v3935 = vmul.f32 %v3925, %v3933
    %3936 = vrot.lane.b32.xlu0 %v2464, 104
    %v3937 = vpop.permute.xlu0 %3936
    %3938 = vrot.lane.b32.xlu0 %v2469, 104
    %v3939 = vpop.permute.xlu0 %3938
    %v3943 = vsel %vm2644, %v3934, 0
    %3945 = vmatprep.subr.mxu0 0.0
    %3946 = vmatpush1.msra.mxu0 %v3937
    %3947 = vmatprep.subr.mxu0 0.0
    %3948 = vmatpush1.msra.mxu0 %v3939
    %3949 = vmatprep.subr.mxu0 0.0
    %3950 = vmatpush1.msra.mxu0 0.0
    %3951 = vmatprep.subr.mxu0 0.0
    %3952 = vmatpush1.msra.mxu0 0.0
    %3953 = vmatprep.subr.mxu0 0.0
    %3954 = vmatpush1.msra.mxu0 0.0
    %3955 = vmatprep.subr.mxu0 0.0
    %3956 = vmatpush1.msra.mxu0 0.0
    %3957 = vmatprep.subr.mxu0 0.0
    %3958 = vmatpush1.msra.mxu0 0.0
    %3959 = vmatprep.subr.mxu0 0.0
    %3960 = vmatpush1.msra.mxu0 0.0
    %3961 = vmatprep.subr.mxu0 0.0
    %3962 = vmatpush1.msra.mxu0 0.0
    %3963 = vmatprep.subr.mxu0 0.0
    %3964 = vmatpush1.msra.mxu0 0.0
    %3965 = vmatprep.subr.mxu0 0.0
    %3966 = vmatpush1.msra.mxu0 0.0
    %3967 = vmatprep.subr.mxu0 0.0
    %3968 = vmatpush1.msra.mxu0 0.0
    %3969 = vmatprep.subr.mxu0 0.0
    %3970 = vmatpush1.msra.mxu0 0.0
    %3971 = vmatprep.subr.mxu0 0.0
    %3972 = vmatpush1.msra.mxu0 0.0
    %3973 = vmatprep.subr.mxu0 0.0
    %3974 = vmatpush1.msra.mxu0 0.0
    %3975 = vmatprep.subr.mxu0 0.0
    %3976 = vmatpush1.msra.mxu0 0.0
    %3977 = vmatprep.subr.mxu0 0.0
    %3978 = vmatpush1.msra.mxu0 0.0
    %3979 = vmatprep.subr.mxu0 0.0
    %3980 = vmatpush1.msra.mxu0 0.0
    %3981 = vmatprep.subr.mxu0 0.0
    %3982 = vmatpush1.msra.mxu0 0.0
    %3983 = vmatprep.subr.mxu0 0.0
    %3984 = vmatpush1.msra.mxu0 0.0
    %3985 = vmatprep.subr.mxu0 0.0
    %3986 = vmatpush1.msra.mxu0 0.0
    %3987 = vmatprep.subr.mxu0 0.0
    %3988 = vmatpush1.msra.mxu0 0.0
    %3989 = vmatprep.subr.mxu0 0.0
    %3990 = vmatpush1.msra.mxu0 0.0
    %3991 = vmatprep.subr.mxu0 0.0
    %3992 = vmatpush1.msra.mxu0 0.0
    %3993 = vmatprep.subr.mxu0 0.0
    %3994 = vmatpush1.msra.mxu0 0.0
    %3995 = vmatprep.subr.mxu0 0.0
    %3996 = vmatpush1.msra.mxu0 0.0
    %3997 = vmatprep.subr.mxu0 0.0
    %3998 = vmatpush1.msra.mxu0 0.0
    %3999 = vmatprep.subr.mxu0 0.0
    %4000 = vmatpush1.msra.mxu0 0.0
    %4001 = vmatprep.subr.mxu0 0.0
    %4002 = vmatpush1.msra.mxu0 0.0
    %4003 = vmatprep.subr.mxu0 0.0
    %4004 = vmatpush1.msra.mxu0 0.0
    %4005 = vmatprep.subr.mxu0 0.0
    %4006 = vmatpush1.msra.mxu0 0.0
    %4007 = vmatprep.subr.mxu0 0.0
    %4008 = vmatpush1.msra.mxu0 0.0
    %4009 = vmatprep.mubr.f32.mxu0 0.0
    %4010 = vmatmul.mubr.f32.gmra.mrb[0].mxu0 %v3943
    %v4011 = vpop.f32.mrb[0].mxu0
    %v4012 = vadd.f32 0.0, %v4011
    %v4013 = vpop.f32.mrb[0].mxu0
    %4014 = vdwg.mxu0
    %4015 = vrot.lane.b32.xlu0 %v2474, 104
    %v4016 = vpop.permute.xlu0 %4015
    %4017 = vrot.lane.b32.xlu0 %v2479, 104
    %v4018 = vpop.permute.xlu0 %4017
    %v4022 = vsel %vm2644, %v3935, 0
    %4024 = vmatprep.subr.mxu0 0.0
    %4025 = vmatpush1.msra.mxu0 %v4016
    %4026 = vmatprep.subr.mxu0 0.0
    %4027 = vmatpush1.msra.mxu0 %v4018
    %4028 = vmatprep.subr.mxu0 0.0
    %4029 = vmatpush1.msra.mxu0 0.0
    %4030 = vmatprep.subr.mxu0 0.0
    %4031 = vmatpush1.msra.mxu0 0.0
    %4032 = vmatprep.subr.mxu0 0.0
    %4033 = vmatpush1.msra.mxu0 0.0
    %4034 = vmatprep.subr.mxu0 0.0
    %4035 = vmatpush1.msra.mxu0 0.0
    %4036 = vmatprep.subr.mxu0 0.0
    %4037 = vmatpush1.msra.mxu0 0.0
    %4038 = vmatprep.subr.mxu0 0.0
    %4039 = vmatpush1.msra.mxu0 0.0
    %4040 = vmatprep.subr.mxu0 0.0
    %4041 = vmatpush1.msra.mxu0 0.0
    %4042 = vmatprep.subr.mxu0 0.0
    %4043 = vmatpush1.msra.mxu0 0.0
    %4044 = vmatprep.subr.mxu0 0.0
    %4045 = vmatpush1.msra.mxu0 0.0
    %4046 = vmatprep.subr.mxu0 0.0
    %4047 = vmatpush1.msra.mxu0 0.0
    %4048 = vmatprep.subr.mxu0 0.0
    %4049 = vmatpush1.msra.mxu0 0.0
    %4050 = vmatprep.subr.mxu0 0.0
    %4051 = vmatpush1.msra.mxu0 0.0
    %4052 = vmatprep.subr.mxu0 0.0
    %4053 = vmatpush1.msra.mxu0 0.0
    %4054 = vmatprep.subr.mxu0 0.0
    %4055 = vmatpush1.msra.mxu0 0.0
    %4056 = vmatprep.subr.mxu0 0.0
    %4057 = vmatpush1.msra.mxu0 0.0
    %4058 = vmatprep.subr.mxu0 0.0
    %4059 = vmatpush1.msra.mxu0 0.0
    %4060 = vmatprep.subr.mxu0 0.0
    %4061 = vmatpush1.msra.mxu0 0.0
    %4062 = vmatprep.subr.mxu0 0.0
    %4063 = vmatpush1.msra.mxu0 0.0
    %4064 = vmatprep.subr.mxu0 0.0
    %4065 = vmatpush1.msra.mxu0 0.0
    %4066 = vmatprep.subr.mxu0 0.0
    %4067 = vmatpush1.msra.mxu0 0.0
    %4068 = vmatprep.subr.mxu0 0.0
    %4069 = vmatpush1.msra.mxu0 0.0
    %4070 = vmatprep.subr.mxu0 0.0
    %4071 = vmatpush1.msra.mxu0 0.0
    %4072 = vmatprep.subr.mxu0 0.0
    %4073 = vmatpush1.msra.mxu0 0.0
    %4074 = vmatprep.subr.mxu0 0.0
    %4075 = vmatpush1.msra.mxu0 0.0
    %4076 = vmatprep.subr.mxu0 0.0
    %4077 = vmatpush1.msra.mxu0 0.0
    %4078 = vmatprep.subr.mxu0 0.0
    %4079 = vmatpush1.msra.mxu0 0.0
    %4080 = vmatprep.subr.mxu0 0.0
    %4081 = vmatpush1.msra.mxu0 0.0
    %4082 = vmatprep.subr.mxu0 0.0
    %4083 = vmatpush1.msra.mxu0 0.0
    %4084 = vmatprep.subr.mxu0 0.0
    %4085 = vmatpush1.msra.mxu0 0.0
    %4086 = vmatprep.subr.mxu0 0.0
    %4087 = vmatpush1.msra.mxu0 0.0
    %4088 = vmatprep.mubr.f32.mxu0 0.0
    %4089 = vmatmul.mubr.f32.gmra.mrb[0].mxu0 %v4022
    %v4090 = vpop.f32.mrb[0].mxu0
    %v4091 = vadd.f32 0.0, %v4090
    %v4092 = vpop.f32.mrb[0].mxu0
    %4093 = vdwg.mxu0
    %v4095 = vsel %vm517, %v4012, 0
    %v4098 = vsel %vm517, %v4091, 0
    %4100 = vmatprep.subr.mxu0 0.0
    %4101 = vmatpush1.msra.mxu0 %v2485
    %4102 = vmatprep.subr.mxu0 0.0
    %4103 = vmatpush1.msra.mxu0 0.0
    %4104 = vmatprep.subr.mxu0 0.0
    %4105 = vmatpush1.msra.mxu0 0.0
    %4106 = vmatprep.subr.mxu0 0.0
    %4107 = vmatpush1.msra.mxu0 0.0
    %4108 = vmatprep.subr.mxu0 0.0
    %4109 = vmatpush1.msra.mxu0 0.0
    %4110 = vmatprep.subr.mxu0 0.0
    %4111 = vmatpush1.msra.mxu0 0.0
    %4112 = vmatprep.subr.mxu0 0.0
    %4113 = vmatpush1.msra.mxu0 0.0
    %4114 = vmatprep.subr.mxu0 0.0
    %4115 = vmatpush1.msra.mxu0 0.0
    %4116 = vmatprep.subr.mxu0 0.0
    %4117 = vmatpush1.msra.mxu0 0.0
    %4118 = vmatprep.subr.mxu0 0.0
    %4119 = vmatpush1.msra.mxu0 0.0
    %4120 = vmatprep.subr.mxu0 0.0
    %4121 = vmatpush1.msra.mxu0 0.0
    %4122 = vmatprep.subr.mxu0 0.0
    %4123 = vmatpush1.msra.mxu0 0.0
    %4124 = vmatprep.subr.mxu0 0.0
    %4125 = vmatpush1.msra.mxu0 0.0
    %4126 = vmatprep.subr.mxu0 0.0
    %4127 = vmatpush1.msra.mxu0 0.0
    %4128 = vmatprep.subr.mxu0 0.0
    %4129 = vmatpush1.msra.mxu0 0.0
    %4130 = vmatprep.subr.mxu0 0.0
    %4131 = vmatpush1.msra.mxu0 0.0
    %4132 = vmatprep.subr.mxu0 0.0
    %4133 = vmatpush1.msra.mxu0 0.0
    %4134 = vmatprep.subr.mxu0 0.0
    %4135 = vmatpush1.msra.mxu0 0.0
    %4136 = vmatprep.subr.mxu0 0.0
    %4137 = vmatpush1.msra.mxu0 0.0
    %4138 = vmatprep.subr.mxu0 0.0
    %4139 = vmatpush1.msra.mxu0 0.0
    %4140 = vmatprep.subr.mxu0 0.0
    %4141 = vmatpush1.msra.mxu0 0.0
    %4142 = vmatprep.subr.mxu0 0.0
    %4143 = vmatpush1.msra.mxu0 0.0
    %4144 = vmatprep.subr.mxu0 0.0
    %4145 = vmatpush1.msra.mxu0 0.0
    %4146 = vmatprep.subr.mxu0 0.0
    %4147 = vmatpush1.msra.mxu0 0.0
    %4148 = vmatprep.subr.mxu0 0.0
    %4149 = vmatpush1.msra.mxu0 0.0
    %4150 = vmatprep.subr.mxu0 0.0
    %4151 = vmatpush1.msra.mxu0 0.0
    %4152 = vmatprep.subr.mxu0 0.0
    %4153 = vmatpush1.msra.mxu0 0.0
    %4154 = vmatprep.subr.mxu0 0.0
    %4155 = vmatpush1.msra.mxu0 0.0
    %4156 = vmatprep.subr.mxu0 0.0
    %4157 = vmatpush1.msra.mxu0 0.0
    %4158 = vmatprep.subr.mxu0 0.0
    %4159 = vmatpush1.msra.mxu0 0.0
    %4160 = vmatprep.subr.mxu0 0.0
    %4161 = vmatpush1.msra.mxu0 0.0
    %4162 = vmatprep.subr.mxu0 0.0
    %4163 = vmatpush1.msra.mxu0 0.0
    %4164 = vmatprep.mubr.f32.mxu0 0.0
    %4165 = vmatmul.mubr.f32.gmra.mrb[0].mxu0 %v4095
    %v4166 = vpop.f32.mrb[0].mxu0
    %v4167 = vadd.f32 0.0, %v4166
    %v4168 = vpop.f32.mrb[0].mxu0
    %4169 = vmatprep.mubr.f32.mxu0 0.0
    %4170 = vmatmul.mubr.f32.gmra.mrb[0].mxu0 %v4098
    %v4171 = vpop.f32.mrb[0].mxu0
    %v4172 = vadd.f32 0.0, %v4171
    %v4173 = vpop.f32.mrb[0].mxu0
    %4174 = vdwg.mxu0
    %v4175 = vadd.f32 %v3748, %v4167
    %v4176 = vadd.f32 %v3749, %v4172
    %v4177 = vadd.f32 %v4175, %v2203
    %v4178 = vadd.f32 %v4176, %v2204
    %v4179 = vsel %vm265, %v4177, 0.0
    %4180 = vadd.xlane.f32.xlu0 %v4179
    %v4181 = vpop.xlane.xlu0 %4180
    %v4182 = vsel %vm265, %v4178, 0.0
    %4183 = vadd.xlane.f32.xlu0 %v4182
    %v4184 = vpop.xlane.xlu0 %4183
    %v4185 = vmul.f32 %v4181, %v2166
    %v4186 = vmul.f32 %v4184, %v2166
    %v4187 = vsub.f32 %v4177, %v4185
    %v4188 = vsub.f32 %v4178, %v4186
    %v4189 = vmul.f32 %v4187, %v4187
    %v4190 = vmul.f32 %v4188, %v4188
    %v4191 = vsel %vm265, %v4189, 0.0
    %4192 = vadd.xlane.f32.xlu0 %v4191
    %v4193 = vpop.xlane.xlu0 %4192
    %v4194 = vsel %vm265, %v4190, 0.0
    %4195 = vadd.xlane.f32.xlu0 %v4194
    %v4196 = vpop.xlane.xlu0 %4195
    %v4197 = vmul.f32 %v4193, %v2166
    %v4198 = vmul.f32 %v4196, %v2166
    %v4199 = vadd.f32 %v4197, 1e-05
    %v4200 = vadd.f32 %v4198, 1e-05
    %v4201 = vrsqrt.pop %v4199
    %v4202 = vrsqrt.pop %v4200
    %v4203 = vmul.f32 %v4187, %v4201
    %v4204 = vmul.f32 %v4188, %v4202
    %v4205 = vld [vmem:[#allocation17] sm:$0x1]
    %v4207 = vlaneseq
    %v4208 = vshrl.u32 %v4207, 7
    %v4209 = vsub.s32 0, %v4208
    %v4210 = vrot.slane %v4205, %v4209
    %v4212 = vmul.f32 %v4203, %v4210
    %v4213 = vmul.f32 %v4204, %v4210
    %v4214 = vld [vmem:[#allocation19] sm:$0x1]
    %v4216 = vlaneseq
    %v4217 = vshrl.u32 %v4216, 7
    %v4218 = vsub.s32 0, %v4217
    %v4219 = vrot.slane %v4214, %v4218
    %v4221 = vadd.f32 %v4212, %v4219
    %v4222 = vadd.f32 %v4213, %v4219
    %v4223 = vld [vmem:[#allocation20] sm:$0xff]
    %v4224 = vld [vmem:[#allocation20 + $0x8] sm:$0xff]
    %v4225 = vld [vmem:[#allocation20 + $0x10] sm:$0xff]
    %v4226 = vld [vmem:[#allocation20 + $0x18] sm:$0xff]
    %v4227 = vld [vmem:[%s17] sm:$0x1]
    %v4229 = vlaneseq
    %v4230 = vshrl.u32 %v4229, 7
    %v4231 = vsub.s32 0, %v4230
    %v4232 = vrot.slane %v4227, %v4231
    %v4235 = vsel %vm265, %v4221, 0
    %v4238 = vsel %vm265, %v4222, 0
    %4240 = vmatprep.subr.mxu0 0.0
    %4241 = vmatpush1.msra.mxu0 %v4223
    %4242 = vmatprep.subr.mxu0 0.0
    %4243 = vmatpush1.msra.mxu0 %v4224
    %4244 = vmatprep.subr.mxu0 0.0
    %4245 = vmatpush1.msra.mxu0 %v4225
    %4246 = vmatprep.subr.mxu0 0.0
    %4247 = vmatpush1.msra.mxu0 %v4226
    %4248 = vmatprep.subr.mxu0 0.0
    %4249 = vmatpush1.msra.mxu0 0.0
    %4250 = vmatprep.subr.mxu0 0.0
    %4251 = vmatpush1.msra.mxu0 0.0
    %4252 = vmatprep.subr.mxu0 0.0
    %4253 = vmatpush1.msra.mxu0 0.0
    %4254 = vmatprep.subr.mxu0 0.0
    %4255 = vmatpush1.msra.mxu0 0.0
    %4256 = vmatprep.subr.mxu0 0.0
    %4257 = vmatpush1.msra.mxu0 0.0
    %4258 = vmatprep.subr.mxu0 0.0
    %4259 = vmatpush1.msra.mxu0 0.0
    %4260 = vmatprep.subr.mxu0 0.0
    %4261 = vmatpush1.msra.mxu0 0.0
    %4262 = vmatprep.subr.mxu0 0.0
    %4263 = vmatpush1.msra.mxu0 0.0
    %4264 = vmatprep.subr.mxu0 0.0
    %4265 = vmatpush1.msra.mxu0 0.0
    %4266 = vmatprep.subr.mxu0 0.0
    %4267 = vmatpush1.msra.mxu0 0.0
    %4268 = vmatprep.subr.mxu0 0.0
    %4269 = vmatpush1.msra.mxu0 0.0
    %4270 = vmatprep.subr.mxu0 0.0
    %4271 = vmatpush1.msra.mxu0 0.0
    %4272 = vmatprep.subr.mxu0 0.0
    %4273 = vmatpush1.msra.mxu0 0.0
    %4274 = vmatprep.subr.mxu0 0.0
    %4275 = vmatpush1.msra.mxu0 0.0
    %4276 = vmatprep.subr.mxu0 0.0
    %4277 = vmatpush1.msra.mxu0 0.0
    %4278 = vmatprep.subr.mxu0 0.0
    %4279 = vmatpush1.msra.mxu0 0.0
    %4280 = vmatprep.subr.mxu0 0.0
    %4281 = vmatpush1.msra.mxu0 0.0
    %4282 = vmatprep.subr.mxu0 0.0
    %4283 = vmatpush1.msra.mxu0 0.0
    %4284 = vmatprep.subr.mxu0 0.0
    %4285 = vmatpush1.msra.mxu0 0.0
    %4286 = vmatprep.subr.mxu0 0.0
    %4287 = vmatpush1.msra.mxu0 0.0
    %4288 = vmatprep.subr.mxu0 0.0
    %4289 = vmatpush1.msra.mxu0 0.0
    %4290 = vmatprep.subr.mxu0 0.0
    %4291 = vmatpush1.msra.mxu0 0.0
    %4292 = vmatprep.subr.mxu0 0.0
    %4293 = vmatpush1.msra.mxu0 0.0
    %4294 = vmatprep.subr.mxu0 0.0
    %4295 = vmatpush1.msra.mxu0 0.0
    %4296 = vmatprep.subr.mxu0 0.0
    %4297 = vmatpush1.msra.mxu0 0.0
    %4298 = vmatprep.subr.mxu0 0.0
    %4299 = vmatpush1.msra.mxu0 0.0
    %4300 = vmatprep.subr.mxu0 0.0
    %4301 = vmatpush1.msra.mxu0 0.0
    %4302 = vmatprep.subr.mxu0 0.0
    %4303 = vmatpush1.msra.mxu0 0.0
    %4304 = vmatprep.mubr.f32.mxu0 0.0
    %4305 = vmatmul.mubr.f32.gmra.mrb[0].mxu0 %v4235
    %v4306 = vpop.f32.mrb[0].mxu0
    %v4307 = vadd.f32 %v4232, %v4306
    %v4308 = vpop.f32.mrb[0].mxu0
    %4309 = vmatprep.mubr.f32.mxu0 0.0
    %4310 = vmatmul.mubr.f32.gmra.mrb[0].mxu0 %v4238
    %v4311 = vpop.f32.mrb[0].mxu0
    %v4312 = vadd.f32 %v4232, %v4311
    %v4313 = vpop.f32.mrb[0].mxu0
    %4314 = vdwg.mxu0
    %v4315 = vmax.f32 %v4307, 0.0
    %v4316 = vmax.f32 %v4312, 0.0
    %v4317 = vld [vmem:[%s18] sm:$0xff]
    %v4318 = vld [vmem:[%s18 + $0x8] sm:$0xff]
    %v4319 = vld [vmem:[%s18 + $0x10] sm:$0xff]
    %v4320 = vld [vmem:[%s18 + $0x18] sm:$0xff]
    %v4321 = vld [vmem:[%s18 + $0x20] sm:$0xff]
    %v4322 = vld [vmem:[%s18 + $0x28] sm:$0xff]
    %v4323 = vld [vmem:[%s18 + $0x30] sm:$0xff]
    %v4324 = vld [vmem:[%s18 + $0x38] sm:$0xff]
    %v4325 = vld [vmem:[%s19] sm:$0x1]
    %v4327 = vlaneseq
    %v4328 = vshrl.u32 %v4327, 7
    %v4329 = vsub.s32 0, %v4328
    %v4330 = vrot.slane %v4325, %v4329
    %vm4332 = vcmask 523264
    %v4334 = vsel %vm4332, %v4315, 0
    %v4337 = vsel %vm4332, %v4316, 0
    %4339 = vmatprep.subr.mxu0 0.0
    %4340 = vmatpush1.msra.mxu0 %v4317
    %4341 = vmatprep.subr.mxu0 0.0
    %4342 = vmatpush1.msra.mxu0 %v4318
    %4343 = vmatprep.subr.mxu0 0.0
    %4344 = vmatpush1.msra.mxu0 %v4319
    %4345 = vmatprep.subr.mxu0 0.0
    %4346 = vmatpush1.msra.mxu0 %v4320
    %4347 = vmatprep.subr.mxu0 0.0
    %4348 = vmatpush1.msra.mxu0 %v4321
    %4349 = vmatprep.subr.mxu0 0.0
    %4350 = vmatpush1.msra.mxu0 %v4322
    %4351 = vmatprep.subr.mxu0 0.0
    %4352 = vmatpush1.msra.mxu0 %v4323
    %4353 = vmatprep.subr.mxu0 0.0
    %4354 = vmatpush1.msra.mxu0 %v4324
    %4355 = vmatprep.subr.mxu0 0.0
    %4356 = vmatpush1.msra.mxu0 0.0
    %4357 = vmatprep.subr.mxu0 0.0
    %4358 = vmatpush1.msra.mxu0 0.0
    %4359 = vmatprep.subr.mxu0 0.0
    %4360 = vmatpush1.msra.mxu0 0.0
    %4361 = vmatprep.subr.mxu0 0.0
    %4362 = vmatpush1.msra.mxu0 0.0
    %4363 = vmatprep.subr.mxu0 0.0
    %4364 = vmatpush1.msra.mxu0 0.0
    %4365 = vmatprep.subr.mxu0 0.0
    %4366 = vmatpush1.msra.mxu0 0.0
    %4367 = vmatprep.subr.mxu0 0.0
    %4368 = vmatpush1.msra.mxu0 0.0
    %4369 = vmatprep.subr.mxu0 0.0
    %4370 = vmatpush1.msra.mxu0 0.0
    %4371 = vmatprep.subr.mxu0 0.0
    %4372 = vmatpush1.msra.mxu0 0.0
    %4373 = vmatprep.subr.mxu0 0.0
    %4374 = vmatpush1.msra.mxu0 0.0
    %4375 = vmatprep.subr.mxu0 0.0
    %4376 = vmatpush1.msra.mxu0 0.0
    %4377 = vmatprep.subr.mxu0 0.0
    %4378 = vmatpush1.msra.mxu0 0.0
    %4379 = vmatprep.subr.mxu0 0.0
    %4380 = vmatpush1.msra.mxu0 0.0
    %4381 = vmatprep.subr.mxu0 0.0
    %4382 = vmatpush1.msra.mxu0 0.0
    %4383 = vmatprep.subr.mxu0 0.0
    %4384 = vmatpush1.msra.mxu0 0.0
    %4385 = vmatprep.subr.mxu0 0.0
    %4386 = vmatpush1.msra.mxu0 0.0
    %4387 = vmatprep.subr.mxu0 0.0
    %4388 = vmatpush1.msra.mxu0 0.0
    %4389 = vmatprep.subr.mxu0 0.0
    %4390 = vmatpush1.msra.mxu0 0.0
    %4391 = vmatprep.subr.mxu0 0.0
    %4392 = vmatpush1.msra.mxu0 0.0
    %4393 = vmatprep.subr.mxu0 0.0
    %4394 = vmatpush1.msra.mxu0 0.0
    %4395 = vmatprep.subr.mxu0 0.0
    %4396 = vmatpush1.msra.mxu0 0.0
    %4397 = vmatprep.subr.mxu0 0.0
    %4398 = vmatpush1.msra.mxu0 0.0
    %4399 = vmatprep.subr.mxu0 0.0
    %4400 = vmatpush1.msra.mxu0 0.0
    %4401 = vmatprep.subr.mxu0 0.0
    %4402 = vmatpush1.msra.mxu0 0.0
    %4403 = vmatprep.mubr.f32.mxu0 0.0
    %4404 = vmatmul.mubr.f32.gmra.mrb[0].mxu0 %v4334
    %v4405 = vpop.f32.mrb[0].mxu0
    %v4406 = vadd.f32 %v4330, %v4405
    %v4407 = vpop.f32.mrb[0].mxu0
    %4408 = vmatprep.mubr.f32.mxu0 0.0
    %4409 = vmatmul.mubr.f32.gmra.mrb[0].mxu0 %v4337
    %v4410 = vpop.f32.mrb[0].mxu0
    %v4411 = vadd.f32 %v4330, %v4410
    %v4412 = vpop.f32.mrb[0].mxu0
    %4413 = vdwg.mxu0
    %v4414 = vadd.f32 %v4406, %v4221
    %v4415 = vadd.f32 %v4411, %v4222
    %v4416 = vsel %vm265, %v4414, 0.0
    %4417 = vadd.xlane.f32.xlu0 %v4416
    %v4418 = vpop.xlane.xlu0 %4417
    %v4419 = vsel %vm265, %v4415, 0.0
    %4420 = vadd.xlane.f32.xlu0 %v4419
    %v4421 = vpop.xlane.xlu0 %4420
    %v4422 = vmul.f32 %v4418, %v2166
    %v4423 = vmul.f32 %v4421, %v2166
    %v4424 = vsub.f32 %v4414, %v4422
    %v4425 = vsub.f32 %v4415, %v4423
    %v4426 = vmul.f32 %v4424, %v4424
    %v4427 = vmul.f32 %v4425, %v4425
    %v4428 = vsel %vm265, %v4426, 0.0
    %4429 = vadd.xlane.f32.xlu0 %v4428
    %v4430 = vpop.xlane.xlu0 %4429
    %v4431 = vsel %vm265, %v4427, 0.0
    %4432 = vadd.xlane.f32.xlu0 %v4431
    %v4433 = vpop.xlane.xlu0 %4432
    %v4434 = vmul.f32 %v4430, %v2166
    %v4435 = vmul.f32 %v4433, %v2166
    %v4436 = vadd.f32 %v4434, 1e-05
    %v4437 = vadd.f32 %v4435, 1e-05
    %v4438 = vrsqrt.pop %v4436
    %v4439 = vrsqrt.pop %v4437
    %v4440 = vmul.f32 %v4424, %v4438
    %v4441 = vmul.f32 %v4425, %v4439
    %v4442 = vld [vmem:[%s20] sm:$0x1]
    %v4444 = vlaneseq
    %v4445 = vshrl.u32 %v4444, 7
    %v4446 = vsub.s32 0, %v4445
    %v4447 = vrot.slane %v4442, %v4446
    %v4449 = vmul.f32 %v4440, %v4447
    %v4450 = vmul.f32 %v4441, %v4447
    %v4451 = vld [vmem:[%s21] sm:$0x1]
    %v4453 = vlaneseq
    %v4454 = vshrl.u32 %v4453, 7
    %v4455 = vsub.s32 0, %v4454
    %v4456 = vrot.slane %v4451, %v4455
    %v4458 = vadd.f32 %v4449, %v4456
    %v4459 = vadd.f32 %v4450, %v4456
    %4460 = vst.msk [vmem:[#allocation22] sm:$0xff] %vm265, %v4458
    %4461 = vst.msk [vmem:[#allocation22 + $0x8] sm:$0xff] %vm265, %v4459
    // Predicated region
    $region138: #{tpu_custom_call.1} parent=1 // pred_check
      _
    $region139: #{tpu_custom_call.1} parent=1 // pred_check_branch
      %4463 = sbr.rel (0) target = $region141
    $region140: #{tpu_custom_call.1} parent=1 // pred_region
      %s4465 = ssub.s32 256, 256
      %4466 = vsyncadd [#allocation4], %s4465
      %s4467 = sshll.u32 [#allocation22], 4
      %s4468 = int_to_ptr.vmem [resolvable:$true] %s4467
      %4473 = dma.vmem_to_hbm [thread:$0]  %s4468, 256, %s22, [#allocation4], 128, 128, 8
    $region141: #{tpu_custom_call.1} parent=1 // pred_fallthru
      _
    // Predicated region
    $region142: #{tpu_custom_call.1} parent=1 // pred_check
      _
    $region143: #{tpu_custom_call.1} parent=1 // pred_check_branch
      %4475 = sbr.rel (0) target = $region145
    $region144: #{tpu_custom_call.1} parent=1 // pred_region
      %4476 = dma.done [#allocation4], 256
    $region145: #{tpu_custom_call.1} parent=1 // pred_fallthru
      _
    %4477 = vsyncpa [#allocation3], 1
    %4478 = vsyncpa [#allocation6], 1
    %4479 = vsyncpa [#allocation9], 1
    %4480 = vsyncpa [#allocation12], 1
    %4481 = vsyncpa [#allocation15], 1
    %4482 = vsyncpa [#allocation18], 1
    %4483 = vsyncpa [#allocation21], 1
    %4484 = vsyncpa [#allocation4], 1

</llo_original>
